<compile_context>
chip_gen: v6e
topology: v6e:2x2x1
jax: 0.10.0
libtpu: 0.0.40
codegen_flags: <defaults>
</compile_context>

<pallas_src>
import jax
import jax.numpy as jnp
from jax import lax
from jax.experimental import pallas as pl
from jax.experimental.pallas import tpu as pltpu

# ---- model dims (small synthetic configuration) ----------------------------
B = 2            # batch
S = 8            # sequence length
H = 32           # hidden size
NUM_HEADS = 2
HEAD_DIM = H // NUM_HEADS
FFN = 64         # intermediate size
NUM_LAYERS = 2
NUM_ASPECTS = 7
VOCAB = 100

LN_EPS = 1e-7
ATTN_SCALE = 1.0 / (HEAD_DIM ** 0.5)


def _erf(x):
    """Abramowitz-Stegun 7.1.26 rational approximation of erf (|err|<1.5e-7).

    Uses only exp / mul / add / where so it lowers cleanly on every TPU
    generation; exp goes to the otherwise-idle EUP slot.
    """
    a1, a2, a3, a4, a5 = (0.254829592, -0.284496736, 1.421413741,
                          -1.453152027, 1.061405429)
    p = 0.3275911
    sign = jnp.where(x >= 0.0, 1.0, -1.0)
    ax = jnp.abs(x)
    t = 1.0 / (1.0 + p * ax)
    poly = ((((a5 * t + a4) * t + a3) * t + a2) * t + a1) * t
    return sign * (1.0 - poly * jnp.exp(-ax * ax))


def _gelu_exact(x):
    """Exact (erf-based) GELU, matching PyTorch nn.GELU default."""
    return 0.5 * x * (1.0 + _erf(x * 0.7071067811865476))


# ---------------------------------------------------------------------------
# Fused forward kernel: runs once (no grid). All weights and the whole batch
# of activations live in VMEM for the entire forward.
# ---------------------------------------------------------------------------
def deberta_fused_kernel(ids_ref, mask_ref, emb_ref,
                         wq_ref, bq_ref, wk_ref, bk_ref, wv_ref, bv_ref,
                         wo_ref, bo_ref, ln1g_ref, ln1b_ref,
                         w1_ref, b1_ref, w2_ref, b2_ref,
                         ln2g_ref, ln2b_ref,
                         wh_ref, bh_ref,
                         out_ref,
                         attn_sc):
    # ---- embedding lookup fused as an exact one-hot MXU matmul -------------
    ids = ids_ref[...]                                        # (B*S, 1) int32
    vocab_iota = lax.broadcasted_iota(jnp.int32, (B * S, VOCAB), 1)
    onehot = (vocab_iota == ids).astype(jnp.float32)          # (B*S, VOCAB)
    x = jnp.dot(onehot, emb_ref[...],
                preferred_element_type=jnp.float32)           # (B*S, H)

    mask = mask_ref[...].astype(jnp.float32)                  # (B, S)
    neg_bias = (1.0 - mask) * (-1e9)                          # additive key mask

    # ---- encoder layers (static loop, weights indexed by layer) ------------
    for l in range(NUM_LAYERS):
        q = jnp.dot(x, wq_ref[l], preferred_element_type=jnp.float32) + bq_ref[l]
        k = jnp.dot(x, wk_ref[l], preferred_element_type=jnp.float32) + bk_ref[l]
        v = jnp.dot(x, wv_ref[l], preferred_element_type=jnp.float32) + bv_ref[l]

        # Multi-head attention: per (batch, head) tiles, no transposes, no
        # concatenate — results are assembled directly into VMEM scratch.
        for b in range(B):
            row = b * S
            bias_b = neg_bias[b:b + 1, :]                     # (1, S)
            for h in range(NUM_HEADS):
                col = h * HEAD_DIM
                qh = q[row:row + S, col:col + HEAD_DIM]       # (S, HEAD_DIM)
                kh = k[row:row + S, col:col + HEAD_DIM]
                vh = v[row:row + S, col:col + HEAD_DIM]
                s = lax.dot_general(
                    qh, kh, (((1,), (1,)), ((), ())),         # q @ k^T (NT matmul)
                    preferred_element_type=jnp.float32) * ATTN_SCALE
                s = s + bias_b                                # broadcast over queries
                s = s - jnp.max(s, axis=-1, keepdims=True)
                p = jnp.exp(s)
                denom = jnp.sum(p, axis=-1, keepdims=True)
                p = p * pl.reciprocal(denom, approx=True)     # EUP divide
                attn_sc[row:row + S, col:col + HEAD_DIM] = jnp.dot(
                    p, vh, preferred_element_type=jnp.float32)

        attn = jnp.dot(attn_sc[...], wo_ref[l],
                       preferred_element_type=jnp.float32) + bo_ref[l]

        # residual + LayerNorm 1
        h1 = x + attn
        mu = jnp.mean(h1, axis=-1, keepdims=True)
        var = jnp.mean((h1 - mu) ** 2, axis=-1, keepdims=True)
        h1 = (h1 - mu) * lax.rsqrt(var + LN_EPS) * ln1g_ref[l] + ln1b_ref[l]

        # feed-forward (exact GELU)
        f = jnp.dot(h1, w1_ref[l], preferred_element_type=jnp.float32) + b1_ref[l]
        f = _gelu_exact(f)
        f = jnp.dot(f, w2_ref[l], preferred_element_type=jnp.float32) + b2_ref[l]

        # residual + LayerNorm 2
        h2 = h1 + f
        mu2 = jnp.mean(h2, axis=-1, keepdims=True)
        var2 = jnp.mean((h2 - mu2) ** 2, axis=-1, keepdims=True)
        x = (h2 - mu2) * lax.rsqrt(var2 + LN_EPS) * ln2g_ref[l] + ln2b_ref[l]

    # ---- CLS pooling + fused regression heads + sigmoid ---------------------
    # dropout(p=0.2) -> identity in eval mode.
    # Extract the B CLS rows (sublane-aligned: rows 0, S, 2S, ...), run one
    # small matmul over all heads at once, and store the result in a single
    # full-ref write (no per-row masked stores).
    cls = jnp.concatenate([x[b * S:b * S + 1, :] for b in range(B)], axis=0)
    logits = jnp.dot(cls, wh_ref[...],
                     preferred_element_type=jnp.float32) + bh_ref[...]
    out_ref[...] = jax.nn.sigmoid(logits).astype(out_ref.dtype)


def fused_forward_call(ids_col, mask, embedding, stacked, head_w, head_b):
    """ids_col: [B*S, 1] i32, mask: [B, S] f32 -> [B, NUM_ASPECTS] f32."""
    vmem = pl.BlockSpec(memory_space=pltpu.MemorySpace.VMEM)
    n_inputs = 3 + len(stacked) + 2
    return pl.pallas_call(
        deberta_fused_kernel,
        out_shape=jax.ShapeDtypeStruct((B, NUM_ASPECTS), jnp.float32),
        in_specs=[vmem] * n_inputs,
        out_specs=vmem,
        scratch_shapes=[pltpu.VMEM((B * S, H), jnp.float32)],  # attn assembly
    )(ids_col, mask, embedding, *stacked, head_w, head_b)


# ---------------------------------------------------------------------------
# Parameter init (deterministic, mirrors the shapes implied by the module).
# ---------------------------------------------------------------------------
def init_params(key):
    keys = iter(jax.random.split(key, 64))
    params = {}
    params["embedding"] = 0.02 * jax.random.normal(next(keys), (VOCAB, H), jnp.float32)

    def dense(k, fan_in, fan_out):
        bound = (6.0 / (fan_in + fan_out)) ** 0.5   # xavier uniform
        return jax.random.uniform(k, (fan_in, fan_out), jnp.float32, -bound, bound)

    per_layer = []
    for _ in range(NUM_LAYERS):
        per_layer.append((
            dense(next(keys), H, H), jnp.zeros((1, H), jnp.float32),      # wq, bq
            dense(next(keys), H, H), jnp.zeros((1, H), jnp.float32),      # wk, bk
            dense(next(keys), H, H), jnp.zeros((1, H), jnp.float32),      # wv, bv
            dense(next(keys), H, H), jnp.zeros((1, H), jnp.float32),      # wo, bo
            jnp.ones((1, H), jnp.float32), jnp.zeros((1, H), jnp.float32),    # ln1
            dense(next(keys), H, FFN), jnp.zeros((1, FFN), jnp.float32),  # w1, b1
            dense(next(keys), FFN, H), jnp.zeros((1, H), jnp.float32),    # w2, b2
            jnp.ones((1, H), jnp.float32), jnp.zeros((1, H), jnp.float32),    # ln2
        ))
    # Stack per-layer params along a leading NUM_LAYERS axis so the fused
    # kernel can take them as a fixed set of VMEM inputs.
    params["stacked"] = [jnp.stack([layer[i] for layer in per_layer], axis=0)
                         for i in range(len(per_layer[0]))]

    # regression heads: nn.Linear(H, 1) x NUM_ASPECTS, xavier_uniform weights,
    # zero biases, stacked into one [H, NUM_ASPECTS] matrix.
    bound = (6.0 / (H + 1)) ** 0.5
    head_w = jax.random.uniform(next(keys), (NUM_ASPECTS, H), jnp.float32, -bound, bound)
    params["head_w"] = head_w.T                                     # [H, NUM_ASPECTS]
    params["head_b"] = jnp.zeros((1, NUM_ASPECTS), jnp.float32)
    return params


# ---------------------------------------------------------------------------
# Full forward: everything (embedding -> encoder -> heads) in one Pallas call.
# ---------------------------------------------------------------------------
@jax.jit
def deberta_n_heads_forward(params, input_ids, attention_mask):
    ids_col = input_ids.reshape(B * S, 1).astype(jnp.int32)         # fold batch
    mask = attention_mask.astype(jnp.float32)                       # [B, S]
    return fused_forward_call(ids_col, mask, params["embedding"],
                              params["stacked"],
                              params["head_w"], params["head_b"])


if __name__ == "__main__":
    key = jax.random.PRNGKey(0)
    pkey, ikey = jax.random.split(key)
    params = init_params(pkey)

    input_ids = jax.random.randint(ikey, (B, S), 0, VOCAB, dtype=jnp.int32)
    attention_mask = jnp.ones((B, S), jnp.int32).at[1, S - 2:].set(0)  # pad tail of item 1

    out = deberta_n_heads_forward(params, input_ids, attention_mask)
    out = jax.block_until_ready(out)

    assert out.shape == (B, NUM_ASPECTS), out.shape
    assert bool(jnp.all(jnp.isfinite(out)))
    assert bool(jnp.all((out >= 0.0) & (out <= 1.0)))
    print("KERNEL_OK")
</pallas_src>

<mosaic_0001>
module attributes {stable_mosaic.version = 11 : i64} {
  func.func @deberta_fused_kernel(%arg0: memref<16x1xi32, #tpu.memory_space<vmem>>, %arg1: memref<2x8xf32, #tpu.memory_space<vmem>>, %arg2: memref<100x32xf32, #tpu.memory_space<vmem>>, %arg3: memref<2x32x32xf32, #tpu.memory_space<vmem>>, %arg4: memref<2x1x32xf32, #tpu.memory_space<vmem>>, %arg5: memref<2x32x32xf32, #tpu.memory_space<vmem>>, %arg6: memref<2x1x32xf32, #tpu.memory_space<vmem>>, %arg7: memref<2x32x32xf32, #tpu.memory_space<vmem>>, %arg8: memref<2x1x32xf32, #tpu.memory_space<vmem>>, %arg9: memref<2x32x32xf32, #tpu.memory_space<vmem>>, %arg10: memref<2x1x32xf32, #tpu.memory_space<vmem>>, %arg11: memref<2x1x32xf32, #tpu.memory_space<vmem>>, %arg12: memref<2x1x32xf32, #tpu.memory_space<vmem>>, %arg13: memref<2x32x64xf32, #tpu.memory_space<vmem>>, %arg14: memref<2x1x64xf32, #tpu.memory_space<vmem>>, %arg15: memref<2x64x32xf32, #tpu.memory_space<vmem>>, %arg16: memref<2x1x32xf32, #tpu.memory_space<vmem>>, %arg17: memref<2x1x32xf32, #tpu.memory_space<vmem>>, %arg18: memref<2x1x32xf32, #tpu.memory_space<vmem>>, %arg19: memref<32x7xf32, #tpu.memory_space<vmem>>, %arg20: memref<1x7xf32, #tpu.memory_space<vmem>>, %arg21: memref<2x7xf32, #tpu.memory_space<vmem>>, %arg22: memref<16x32xf32, #tpu.memory_space<vmem>>) attributes {dimension_semantics = [], scalar_prefetch = 0 : i64, scratch_operands = 1 : i64, tpu.core_type = #tpu.core_type<tc>} {
    %c0 = arith.constant 0 : index
    %c0_0 = arith.constant 0 : index
    %0 = vector.load %arg0[%c0, %c0_0] : memref<16x1xi32, #tpu.memory_space<vmem>>, vector<16x1xi32>
    %1 = tpu.iota {dimensions = array<i32: 1>} : vector<16x100xi32>
    %2 = vector.broadcast %0 : vector<16x1xi32> to vector<16x100xi32>
    %3 = arith.cmpi eq, %1, %2 : vector<16x100xi32>
    %4 = arith.extui %3 : vector<16x100xi1> to vector<16x100xi32>
    %5 = arith.sitofp %4 : vector<16x100xi32> to vector<16x100xf32>
    %c0_1 = arith.constant 0 : index
    %c0_2 = arith.constant 0 : index
    %6 = vector.load %arg2[%c0_1, %c0_2] : memref<100x32xf32, #tpu.memory_space<vmem>>, vector<100x32xf32>
    %cst = arith.constant dense<0.000000e+00> : vector<16x32xf32>
    %7 = tpu.matmul %5, %6, %cst {dimension_numbers = #tpu.dot_dimension_numbers<[1], [0], [0], [1], [0, 0, 1, 1], [], []>} : vector<16x100xf32>, vector<100x32xf32>, vector<16x32xf32> -> vector<16x32xf32>
    %c0_3 = arith.constant 0 : index
    %c0_4 = arith.constant 0 : index
    %8 = vector.load %arg1[%c0_3, %c0_4] : memref<2x8xf32, #tpu.memory_space<vmem>>, vector<2x8xf32>
    %cst_5 = arith.constant 1.000000e+00 : f32
    %9 = vector.broadcast %cst_5 : f32 to vector<2x8xf32>
    %10 = arith.subf %9, %8 : vector<2x8xf32>
    %cst_6 = arith.constant -1.000000e+09 : f32
    %11 = vector.broadcast %cst_6 : f32 to vector<2x8xf32>
    %12 = arith.mulf %10, %11 : vector<2x8xf32>
    %c0_7 = arith.constant 0 : index
    %c0_8 = arith.constant 0 : index
    %c0_9 = arith.constant 0 : index
    %13 = vector.load %arg3[%c0_7, %c0_8, %c0_9] : memref<2x32x32xf32, #tpu.memory_space<vmem>>, vector<1x32x32xf32>
    %14 = vector.shape_cast %13 : vector<1x32x32xf32> to vector<32x32xf32>
    %cst_10 = arith.constant dense<0.000000e+00> : vector<16x32xf32>
    %15 = tpu.matmul %7, %14, %cst_10 {dimension_numbers = #tpu.dot_dimension_numbers<[1], [0], [0], [1], [0, 0, 1, 1], [], []>} : vector<16x32xf32>, vector<32x32xf32>, vector<16x32xf32> -> vector<16x32xf32>
    %c0_11 = arith.constant 0 : index
    %c0_12 = arith.constant 0 : index
    %c0_13 = arith.constant 0 : index
    %16 = vector.load %arg4[%c0_11, %c0_12, %c0_13] : memref<2x1x32xf32, #tpu.memory_space<vmem>>, vector<1x1x32xf32>
    %17 = vector.shape_cast %16 : vector<1x1x32xf32> to vector<1x32xf32>
    %18 = vector.broadcast %17 : vector<1x32xf32> to vector<16x32xf32>
    %19 = arith.addf %15, %18 : vector<16x32xf32>
    %c0_14 = arith.constant 0 : index
    %c0_15 = arith.constant 0 : index
    %c0_16 = arith.constant 0 : index
    %20 = vector.load %arg5[%c0_14, %c0_15, %c0_16] : memref<2x32x32xf32, #tpu.memory_space<vmem>>, vector<1x32x32xf32>
    %21 = vector.shape_cast %20 : vector<1x32x32xf32> to vector<32x32xf32>
    %cst_17 = arith.constant dense<0.000000e+00> : vector<16x32xf32>
    %22 = tpu.matmul %7, %21, %cst_17 {dimension_numbers = #tpu.dot_dimension_numbers<[1], [0], [0], [1], [0, 0, 1, 1], [], []>} : vector<16x32xf32>, vector<32x32xf32>, vector<16x32xf32> -> vector<16x32xf32>
    %c0_18 = arith.constant 0 : index
    %c0_19 = arith.constant 0 : index
    %c0_20 = arith.constant 0 : index
    %23 = vector.load %arg6[%c0_18, %c0_19, %c0_20] : memref<2x1x32xf32, #tpu.memory_space<vmem>>, vector<1x1x32xf32>
    %24 = vector.shape_cast %23 : vector<1x1x32xf32> to vector<1x32xf32>
    %25 = vector.broadcast %24 : vector<1x32xf32> to vector<16x32xf32>
    %26 = arith.addf %22, %25 : vector<16x32xf32>
    %c0_21 = arith.constant 0 : index
    %c0_22 = arith.constant 0 : index
    %c0_23 = arith.constant 0 : index
    %27 = vector.load %arg7[%c0_21, %c0_22, %c0_23] : memref<2x32x32xf32, #tpu.memory_space<vmem>>, vector<1x32x32xf32>
    %28 = vector.shape_cast %27 : vector<1x32x32xf32> to vector<32x32xf32>
    %cst_24 = arith.constant dense<0.000000e+00> : vector<16x32xf32>
    %29 = tpu.matmul %7, %28, %cst_24 {dimension_numbers = #tpu.dot_dimension_numbers<[1], [0], [0], [1], [0, 0, 1, 1], [], []>} : vector<16x32xf32>, vector<32x32xf32>, vector<16x32xf32> -> vector<16x32xf32>
    %c0_25 = arith.constant 0 : index
    %c0_26 = arith.constant 0 : index
    %c0_27 = arith.constant 0 : index
    %30 = vector.load %arg8[%c0_25, %c0_26, %c0_27] : memref<2x1x32xf32, #tpu.memory_space<vmem>>, vector<1x1x32xf32>
    %31 = vector.shape_cast %30 : vector<1x1x32xf32> to vector<1x32xf32>
    %32 = vector.broadcast %31 : vector<1x32xf32> to vector<16x32xf32>
    %33 = arith.addf %29, %32 : vector<16x32xf32>
    %34 = vector.extract_strided_slice %12 {offsets = [0, 0], sizes = [1, 8], strides = [1, 1]} : vector<2x8xf32> to vector<1x8xf32>
    %35 = vector.extract_strided_slice %19 {offsets = [0, 0], sizes = [8, 16], strides = [1, 1]} : vector<16x32xf32> to vector<8x16xf32>
    %36 = vector.extract_strided_slice %26 {offsets = [0, 0], sizes = [8, 16], strides = [1, 1]} : vector<16x32xf32> to vector<8x16xf32>
    %37 = vector.extract_strided_slice %33 {offsets = [0, 0], sizes = [8, 16], strides = [1, 1]} : vector<16x32xf32> to vector<8x16xf32>
    %cst_28 = arith.constant dense<0.000000e+00> : vector<8x8xf32>
    %38 = tpu.matmul %35, %36, %cst_28 {dimension_numbers = #tpu.dot_dimension_numbers<[1], [1], [0], [0], [0, 0, 1, 0], [], []>} : vector<8x16xf32>, vector<8x16xf32>, vector<8x8xf32> -> vector<8x8xf32>
    %cst_29 = arith.constant 2.500000e-01 : f32
    %39 = vector.broadcast %cst_29 : f32 to vector<8x8xf32>
    %40 = arith.mulf %38, %39 : vector<8x8xf32>
    %41 = vector.broadcast %34 : vector<1x8xf32> to vector<8x8xf32>
    %42 = arith.addf %40, %41 : vector<8x8xf32>
    %cst_30 = arith.constant dense<0xFF800000> : vector<8xf32>
    %43 = vector.multi_reduction <maximumf>, %42, %cst_30 [1] : vector<8x8xf32> to vector<8xf32>
    %44 = vector.shape_cast %43 : vector<8xf32> to vector<8x1xf32>
    %45 = vector.broadcast %44 : vector<8x1xf32> to vector<8x8xf32>
    %46 = arith.subf %42, %45 : vector<8x8xf32>
    %47 = math.exp %46 : vector<8x8xf32>
    %cst_31 = arith.constant dense<0.000000e+00> : vector<8xf32>
    %48 = vector.multi_reduction <add>, %47, %cst_31 [1] : vector<8x8xf32> to vector<8xf32>
    %49 = vector.shape_cast %48 : vector<8xf32> to vector<8x1xf32>
    %50 = tpu.reciprocal %49 {approx = true} : vector<8x1xf32> -> vector<8x1xf32>
    %51 = vector.broadcast %50 : vector<8x1xf32> to vector<8x8xf32>
    %52 = arith.mulf %47, %51 : vector<8x8xf32>
    %cst_32 = arith.constant dense<0.000000e+00> : vector<8x16xf32>
    %53 = tpu.matmul %52, %37, %cst_32 {dimension_numbers = #tpu.dot_dimension_numbers<[1], [0], [0], [1], [0, 0, 1, 1], [], []>} : vector<8x8xf32>, vector<8x16xf32>, vector<8x16xf32> -> vector<8x16xf32>
    %c0_33 = arith.constant 0 : index
    %c0_34 = arith.constant 0 : index
    %54 = vector.load %arg22[%c0_33, %c0_34] : memref<16x32xf32, #tpu.memory_space<vmem>>, vector<8x16xf32>
    tpu.vector_store %arg22[%c0_33, %c0_34], %53 {strides = array<i32>} : memref<16x32xf32, #tpu.memory_space<vmem>>, vector<8x16xf32>,
    %55 = vector.extract_strided_slice %19 {offsets = [0, 16], sizes = [8, 16], strides = [1, 1]} : vector<16x32xf32> to vector<8x16xf32>
    %56 = vector.extract_strided_slice %26 {offsets = [0, 16], sizes = [8, 16], strides = [1, 1]} : vector<16x32xf32> to vector<8x16xf32>
    %57 = vector.extract_strided_slice %33 {offsets = [0, 16], sizes = [8, 16], strides = [1, 1]} : vector<16x32xf32> to vector<8x16xf32>
    %cst_35 = arith.constant dense<0.000000e+00> : vector<8x8xf32>
    %58 = tpu.matmul %55, %56, %cst_35 {dimension_numbers = #tpu.dot_dimension_numbers<[1], [1], [0], [0], [0, 0, 1, 0], [], []>} : vector<8x16xf32>, vector<8x16xf32>, vector<8x8xf32> -> vector<8x8xf32>
    %cst_36 = arith.constant 2.500000e-01 : f32
    %59 = vector.broadcast %cst_36 : f32 to vector<8x8xf32>
    %60 = arith.mulf %58, %59 : vector<8x8xf32>
    %61 = vector.broadcast %34 : vector<1x8xf32> to vector<8x8xf32>
    %62 = arith.addf %60, %61 : vector<8x8xf32>
    %cst_37 = arith.constant dense<0xFF800000> : vector<8xf32>
    %63 = vector.multi_reduction <maximumf>, %62, %cst_37 [1] : vector<8x8xf32> to vector<8xf32>
    %64 = vector.shape_cast %63 : vector<8xf32> to vector<8x1xf32>
    %65 = vector.broadcast %64 : vector<8x1xf32> to vector<8x8xf32>
    %66 = arith.subf %62, %65 : vector<8x8xf32>
    %67 = math.exp %66 : vector<8x8xf32>
    %cst_38 = arith.constant dense<0.000000e+00> : vector<8xf32>
    %68 = vector.multi_reduction <add>, %67, %cst_38 [1] : vector<8x8xf32> to vector<8xf32>
    %69 = vector.shape_cast %68 : vector<8xf32> to vector<8x1xf32>
    %70 = tpu.reciprocal %69 {approx = true} : vector<8x1xf32> -> vector<8x1xf32>
    %71 = vector.broadcast %70 : vector<8x1xf32> to vector<8x8xf32>
    %72 = arith.mulf %67, %71 : vector<8x8xf32>
    %cst_39 = arith.constant dense<0.000000e+00> : vector<8x16xf32>
    %73 = tpu.matmul %72, %57, %cst_39 {dimension_numbers = #tpu.dot_dimension_numbers<[1], [0], [0], [1], [0, 0, 1, 1], [], []>} : vector<8x8xf32>, vector<8x16xf32>, vector<8x16xf32> -> vector<8x16xf32>
    %c0_40 = arith.constant 0 : index
    %c16 = arith.constant 16 : index
    %74 = vector.load %arg22[%c0_40, %c16] : memref<16x32xf32, #tpu.memory_space<vmem>>, vector<8x16xf32>
    tpu.vector_store %arg22[%c0_40, %c16], %73 {strides = array<i32>} : memref<16x32xf32, #tpu.memory_space<vmem>>, vector<8x16xf32>,
    %75 = vector.extract_strided_slice %12 {offsets = [1, 0], sizes = [1, 8], strides = [1, 1]} : vector<2x8xf32> to vector<1x8xf32>
    %76 = vector.extract_strided_slice %19 {offsets = [8, 0], sizes = [8, 16], strides = [1, 1]} : vector<16x32xf32> to vector<8x16xf32>
    %77 = vector.extract_strided_slice %26 {offsets = [8, 0], sizes = [8, 16], strides = [1, 1]} : vector<16x32xf32> to vector<8x16xf32>
    %78 = vector.extract_strided_slice %33 {offsets = [8, 0], sizes = [8, 16], strides = [1, 1]} : vector<16x32xf32> to vector<8x16xf32>
    %cst_41 = arith.constant dense<0.000000e+00> : vector<8x8xf32>
    %79 = tpu.matmul %76, %77, %cst_41 {dimension_numbers = #tpu.dot_dimension_numbers<[1], [1], [0], [0], [0, 0, 1, 0], [], []>} : vector<8x16xf32>, vector<8x16xf32>, vector<8x8xf32> -> vector<8x8xf32>
    %cst_42 = arith.constant 2.500000e-01 : f32
    %80 = vector.broadcast %cst_42 : f32 to vector<8x8xf32>
    %81 = arith.mulf %79, %80 : vector<8x8xf32>
    %82 = vector.broadcast %75 : vector<1x8xf32> to vector<8x8xf32>
    %83 = arith.addf %81, %82 : vector<8x8xf32>
    %cst_43 = arith.constant dense<0xFF800000> : vector<8xf32>
    %84 = vector.multi_reduction <maximumf>, %83, %cst_43 [1] : vector<8x8xf32> to vector<8xf32>
    %85 = vector.shape_cast %84 : vector<8xf32> to vector<8x1xf32>
    %86 = vector.broadcast %85 : vector<8x1xf32> to vector<8x8xf32>
    %87 = arith.subf %83, %86 : vector<8x8xf32>
    %88 = math.exp %87 : vector<8x8xf32>
    %cst_44 = arith.constant dense<0.000000e+00> : vector<8xf32>
    %89 = vector.multi_reduction <add>, %88, %cst_44 [1] : vector<8x8xf32> to vector<8xf32>
    %90 = vector.shape_cast %89 : vector<8xf32> to vector<8x1xf32>
    %91 = tpu.reciprocal %90 {approx = true} : vector<8x1xf32> -> vector<8x1xf32>
    %92 = vector.broadcast %91 : vector<8x1xf32> to vector<8x8xf32>
    %93 = arith.mulf %88, %92 : vector<8x8xf32>
    %cst_45 = arith.constant dense<0.000000e+00> : vector<8x16xf32>
    %94 = tpu.matmul %93, %78, %cst_45 {dimension_numbers = #tpu.dot_dimension_numbers<[1], [0], [0], [1], [0, 0, 1, 1], [], []>} : vector<8x8xf32>, vector<8x16xf32>, vector<8x16xf32> -> vector<8x16xf32>
    %c8 = arith.constant 8 : index
    %c0_46 = arith.constant 0 : index
    %95 = vector.load %arg22[%c8, %c0_46] : memref<16x32xf32, #tpu.memory_space<vmem>>, vector<8x16xf32>
    tpu.vector_store %arg22[%c8, %c0_46], %94 {strides = array<i32>} : memref<16x32xf32, #tpu.memory_space<vmem>>, vector<8x16xf32>,
    %96 = vector.extract_strided_slice %19 {offsets = [8, 16], sizes = [8, 16], strides = [1, 1]} : vector<16x32xf32> to vector<8x16xf32>
    %97 = vector.extract_strided_slice %26 {offsets = [8, 16], sizes = [8, 16], strides = [1, 1]} : vector<16x32xf32> to vector<8x16xf32>
    %98 = vector.extract_strided_slice %33 {offsets = [8, 16], sizes = [8, 16], strides = [1, 1]} : vector<16x32xf32> to vector<8x16xf32>
    %cst_47 = arith.constant dense<0.000000e+00> : vector<8x8xf32>
    %99 = tpu.matmul %96, %97, %cst_47 {dimension_numbers = #tpu.dot_dimension_numbers<[1], [1], [0], [0], [0, 0, 1, 0], [], []>} : vector<8x16xf32>, vector<8x16xf32>, vector<8x8xf32> -> vector<8x8xf32>
    %cst_48 = arith.constant 2.500000e-01 : f32
    %100 = vector.broadcast %cst_48 : f32 to vector<8x8xf32>
    %101 = arith.mulf %99, %100 : vector<8x8xf32>
    %102 = vector.broadcast %75 : vector<1x8xf32> to vector<8x8xf32>
    %103 = arith.addf %101, %102 : vector<8x8xf32>
    %cst_49 = arith.constant dense<0xFF800000> : vector<8xf32>
    %104 = vector.multi_reduction <maximumf>, %103, %cst_49 [1] : vector<8x8xf32> to vector<8xf32>
    %105 = vector.shape_cast %104 : vector<8xf32> to vector<8x1xf32>
    %106 = vector.broadcast %105 : vector<8x1xf32> to vector<8x8xf32>
    %107 = arith.subf %103, %106 : vector<8x8xf32>
    %108 = math.exp %107 : vector<8x8xf32>
    %cst_50 = arith.constant dense<0.000000e+00> : vector<8xf32>
    %109 = vector.multi_reduction <add>, %108, %cst_50 [1] : vector<8x8xf32> to vector<8xf32>
    %110 = vector.shape_cast %109 : vector<8xf32> to vector<8x1xf32>
    %111 = tpu.reciprocal %110 {approx = true} : vector<8x1xf32> -> vector<8x1xf32>
    %112 = vector.broadcast %111 : vector<8x1xf32> to vector<8x8xf32>
    %113 = arith.mulf %108, %112 : vector<8x8xf32>
    %cst_51 = arith.constant dense<0.000000e+00> : vector<8x16xf32>
    %114 = tpu.matmul %113, %98, %cst_51 {dimension_numbers = #tpu.dot_dimension_numbers<[1], [0], [0], [1], [0, 0, 1, 1], [], []>} : vector<8x8xf32>, vector<8x16xf32>, vector<8x16xf32> -> vector<8x16xf32>
    %c8_52 = arith.constant 8 : index
    %c16_53 = arith.constant 16 : index
    %115 = vector.load %arg22[%c8_52, %c16_53] : memref<16x32xf32, #tpu.memory_space<vmem>>, vector<8x16xf32>
    tpu.vector_store %arg22[%c8_52, %c16_53], %114 {strides = array<i32>} : memref<16x32xf32, #tpu.memory_space<vmem>>, vector<8x16xf32>,
    %c0_54 = arith.constant 0 : index
    %c0_55 = arith.constant 0 : index
    %116 = vector.load %arg22[%c0_54, %c0_55] : memref<16x32xf32, #tpu.memory_space<vmem>>, vector<16x32xf32>
    %c0_56 = arith.constant 0 : index
    %c0_57 = arith.constant 0 : index
    %c0_58 = arith.constant 0 : index
    %117 = vector.load %arg9[%c0_56, %c0_57, %c0_58] : memref<2x32x32xf32, #tpu.memory_space<vmem>>, vector<1x32x32xf32>
    %118 = vector.shape_cast %117 : vector<1x32x32xf32> to vector<32x32xf32>
    %cst_59 = arith.constant dense<0.000000e+00> : vector<16x32xf32>
    %119 = tpu.matmul %116, %118, %cst_59 {dimension_numbers = #tpu.dot_dimension_numbers<[1], [0], [0], [1], [0, 0, 1, 1], [], []>} : vector<16x32xf32>, vector<32x32xf32>, vector<16x32xf32> -> vector<16x32xf32>
    %c0_60 = arith.constant 0 : index
    %c0_61 = arith.constant 0 : index
    %c0_62 = arith.constant 0 : index
    %120 = vector.load %arg10[%c0_60, %c0_61, %c0_62] : memref<2x1x32xf32, #tpu.memory_space<vmem>>, vector<1x1x32xf32>
    %121 = vector.shape_cast %120 : vector<1x1x32xf32> to vector<1x32xf32>
    %122 = vector.broadcast %121 : vector<1x32xf32> to vector<16x32xf32>
    %123 = arith.addf %119, %122 : vector<16x32xf32>
    %124 = arith.addf %7, %123 : vector<16x32xf32>
    %cst_63 = arith.constant dense<0.000000e+00> : vector<16xf32>
    %125 = vector.multi_reduction <add>, %124, %cst_63 [1] : vector<16x32xf32> to vector<16xf32>
    %126 = vector.shape_cast %125 : vector<16xf32> to vector<16x1xf32>
    %cst_64 = arith.constant 3.200000e+01 : f32
    %127 = vector.broadcast %cst_64 : f32 to vector<16x1xf32>
    %128 = arith.divf %126, %127 : vector<16x1xf32>
    %129 = vector.broadcast %128 : vector<16x1xf32> to vector<16x32xf32>
    %130 = arith.subf %124, %129 : vector<16x32xf32>
    %131 = arith.mulf %130, %130 : vector<16x32xf32>
    %cst_65 = arith.constant dense<0.000000e+00> : vector<16xf32>
    %132 = vector.multi_reduction <add>, %131, %cst_65 [1] : vector<16x32xf32> to vector<16xf32>
    %133 = vector.shape_cast %132 : vector<16xf32> to vector<16x1xf32>
    %cst_66 = arith.constant 3.200000e+01 : f32
    %134 = vector.broadcast %cst_66 : f32 to vector<16x1xf32>
    %135 = arith.divf %133, %134 : vector<16x1xf32>
    %136 = vector.broadcast %128 : vector<16x1xf32> to vector<16x32xf32>
    %137 = arith.subf %124, %136 : vector<16x32xf32>
    %cst_67 = arith.constant 1.000000e-07 : f32
    %138 = vector.broadcast %cst_67 : f32 to vector<16x1xf32>
    %139 = arith.addf %135, %138 : vector<16x1xf32>
    %140 = math.rsqrt %139 : vector<16x1xf32>
    %141 = vector.broadcast %140 : vector<16x1xf32> to vector<16x32xf32>
    %142 = arith.mulf %137, %141 : vector<16x32xf32>
    %c0_68 = arith.constant 0 : index
    %c0_69 = arith.constant 0 : index
    %c0_70 = arith.constant 0 : index
    %143 = vector.load %arg11[%c0_68, %c0_69, %c0_70] : memref<2x1x32xf32, #tpu.memory_space<vmem>>, vector<1x1x32xf32>
    %144 = vector.shape_cast %143 : vector<1x1x32xf32> to vector<1x32xf32>
    %145 = vector.broadcast %144 : vector<1x32xf32> to vector<16x32xf32>
    %146 = arith.mulf %142, %145 : vector<16x32xf32>
    %c0_71 = arith.constant 0 : index
    %c0_72 = arith.constant 0 : index
    %c0_73 = arith.constant 0 : index
    %147 = vector.load %arg12[%c0_71, %c0_72, %c0_73] : memref<2x1x32xf32, #tpu.memory_space<vmem>>, vector<1x1x32xf32>
    %148 = vector.shape_cast %147 : vector<1x1x32xf32> to vector<1x32xf32>
    %149 = vector.broadcast %148 : vector<1x32xf32> to vector<16x32xf32>
    %150 = arith.addf %146, %149 : vector<16x32xf32>
    %c0_74 = arith.constant 0 : index
    %c0_75 = arith.constant 0 : index
    %c0_76 = arith.constant 0 : index
    %151 = vector.load %arg13[%c0_74, %c0_75, %c0_76] : memref<2x32x64xf32, #tpu.memory_space<vmem>>, vector<1x32x64xf32>
    %152 = vector.shape_cast %151 : vector<1x32x64xf32> to vector<32x64xf32>
    %cst_77 = arith.constant dense<0.000000e+00> : vector<16x64xf32>
    %153 = tpu.matmul %150, %152, %cst_77 {dimension_numbers = #tpu.dot_dimension_numbers<[1], [0], [0], [1], [0, 0, 1, 1], [], []>} : vector<16x32xf32>, vector<32x64xf32>, vector<16x64xf32> -> vector<16x64xf32>
    %c0_78 = arith.constant 0 : index
    %c0_79 = arith.constant 0 : index
    %c0_80 = arith.constant 0 : index
    %154 = vector.load %arg14[%c0_78, %c0_79, %c0_80] : memref<2x1x64xf32, #tpu.memory_space<vmem>>, vector<1x1x64xf32>
    %155 = vector.shape_cast %154 : vector<1x1x64xf32> to vector<1x64xf32>
    %156 = vector.broadcast %155 : vector<1x64xf32> to vector<16x64xf32>
    %157 = arith.addf %153, %156 : vector<16x64xf32>
    %cst_81 = arith.constant 5.000000e-01 : f32
    %158 = vector.broadcast %cst_81 : f32 to vector<16x64xf32>
    %159 = arith.mulf %158, %157 : vector<16x64xf32>
    %cst_82 = arith.constant 0.707106769 : f32
    %160 = vector.broadcast %cst_82 : f32 to vector<16x64xf32>
    %161 = arith.mulf %157, %160 : vector<16x64xf32>
    %cst_83 = arith.constant 0.000000e+00 : f32
    %162 = vector.broadcast %cst_83 : f32 to vector<16x64xf32>
    %163 = arith.cmpf oge, %161, %162 : vector<16x64xf32>
    %cst_84 = arith.constant 1.000000e+00 : f32
    %cst_85 = arith.constant -1.000000e+00 : f32
    %164 = vector.broadcast %cst_84 : f32 to vector<16x64xf32>
    %165 = vector.broadcast %cst_85 : f32 to vector<16x64xf32>
    %166 = arith.select %163, %164, %165 : vector<16x64xi1>, vector<16x64xf32>
    %167 = math.absf %161 : vector<16x64xf32>
    %cst_86 = arith.constant 0.327591091 : f32
    %168 = vector.broadcast %cst_86 : f32 to vector<16x64xf32>
    %169 = arith.mulf %168, %167 : vector<16x64xf32>
    %cst_87 = arith.constant 1.000000e+00 : f32
    %170 = vector.broadcast %cst_87 : f32 to vector<16x64xf32>
    %171 = arith.addf %170, %169 : vector<16x64xf32>
    %cst_88 = arith.constant 1.000000e+00 : f32
    %172 = vector.broadcast %cst_88 : f32 to vector<16x64xf32>
    %173 = arith.divf %172, %171 : vector<16x64xf32>
    %cst_89 = arith.constant 1.06140542 : f32
    %174 = vector.broadcast %cst_89 : f32 to vector<16x64xf32>
    %175 = arith.mulf %174, %173 : vector<16x64xf32>
    %cst_90 = arith.constant -1.45315206 : f32
    %176 = vector.broadcast %cst_90 : f32 to vector<16x64xf32>
    %177 = arith.addf %175, %176 : vector<16x64xf32>
    %178 = arith.mulf %177, %173 : vector<16x64xf32>
    %cst_91 = arith.constant 1.42141378 : f32
    %179 = vector.broadcast %cst_91 : f32 to vector<16x64xf32>
    %180 = arith.addf %178, %179 : vector<16x64xf32>
    %181 = arith.mulf %180, %173 : vector<16x64xf32>
    %cst_92 = arith.constant -0.284496725 : f32
    %182 = vector.broadcast %cst_92 : f32 to vector<16x64xf32>
    %183 = arith.addf %181, %182 : vector<16x64xf32>
    %184 = arith.mulf %183, %173 : vector<16x64xf32>
    %cst_93 = arith.constant 0.254829586 : f32
    %185 = vector.broadcast %cst_93 : f32 to vector<16x64xf32>
    %186 = arith.addf %184, %185 : vector<16x64xf32>
    %187 = arith.mulf %186, %173 : vector<16x64xf32>
    %cst_94 = arith.constant 0.000000e+00 : f32
    %188 = vector.broadcast %cst_94 : f32 to vector<16x64xf32>
    %189 = arith.subf %188, %167 : vector<16x64xf32>
    %190 = arith.mulf %189, %167 : vector<16x64xf32>
    %191 = math.exp %190 : vector<16x64xf32>
    %192 = arith.mulf %187, %191 : vector<16x64xf32>
    %cst_95 = arith.constant 1.000000e+00 : f32
    %193 = vector.broadcast %cst_95 : f32 to vector<16x64xf32>
    %194 = arith.subf %193, %192 : vector<16x64xf32>
    %195 = arith.mulf %166, %194 : vector<16x64xf32>
    %cst_96 = arith.constant 1.000000e+00 : f32
    %196 = vector.broadcast %cst_96 : f32 to vector<16x64xf32>
    %197 = arith.addf %196, %195 : vector<16x64xf32>
    %198 = arith.mulf %159, %197 : vector<16x64xf32>
    %c0_97 = arith.constant 0 : index
    %c0_98 = arith.constant 0 : index
    %c0_99 = arith.constant 0 : index
    %199 = vector.load %arg15[%c0_97, %c0_98, %c0_99] : memref<2x64x32xf32, #tpu.memory_space<vmem>>, vector<1x64x32xf32>
    %200 = vector.shape_cast %199 : vector<1x64x32xf32> to vector<64x32xf32>
    %cst_100 = arith.constant dense<0.000000e+00> : vector<16x32xf32>
    %201 = tpu.matmul %198, %200, %cst_100 {dimension_numbers = #tpu.dot_dimension_numbers<[1], [0], [0], [1], [0, 0, 1, 1], [], []>} : vector<16x64xf32>, vector<64x32xf32>, vector<16x32xf32> -> vector<16x32xf32>
    %c0_101 = arith.constant 0 : index
    %c0_102 = arith.constant 0 : index
    %c0_103 = arith.constant 0 : index
    %202 = vector.load %arg16[%c0_101, %c0_102, %c0_103] : memref<2x1x32xf32, #tpu.memory_space<vmem>>, vector<1x1x32xf32>
    %203 = vector.shape_cast %202 : vector<1x1x32xf32> to vector<1x32xf32>
    %204 = vector.broadcast %203 : vector<1x32xf32> to vector<16x32xf32>
    %205 = arith.addf %201, %204 : vector<16x32xf32>
    %206 = arith.addf %150, %205 : vector<16x32xf32>
    %cst_104 = arith.constant dense<0.000000e+00> : vector<16xf32>
    %207 = vector.multi_reduction <add>, %206, %cst_104 [1] : vector<16x32xf32> to vector<16xf32>
    %208 = vector.shape_cast %207 : vector<16xf32> to vector<16x1xf32>
    %cst_105 = arith.constant 3.200000e+01 : f32
    %209 = vector.broadcast %cst_105 : f32 to vector<16x1xf32>
    %210 = arith.divf %208, %209 : vector<16x1xf32>
    %211 = vector.broadcast %210 : vector<16x1xf32> to vector<16x32xf32>
    %212 = arith.subf %206, %211 : vector<16x32xf32>
    %213 = arith.mulf %212, %212 : vector<16x32xf32>
    %cst_106 = arith.constant dense<0.000000e+00> : vector<16xf32>
    %214 = vector.multi_reduction <add>, %213, %cst_106 [1] : vector<16x32xf32> to vector<16xf32>
    %215 = vector.shape_cast %214 : vector<16xf32> to vector<16x1xf32>
    %cst_107 = arith.constant 3.200000e+01 : f32
    %216 = vector.broadcast %cst_107 : f32 to vector<16x1xf32>
    %217 = arith.divf %215, %216 : vector<16x1xf32>
    %218 = vector.broadcast %210 : vector<16x1xf32> to vector<16x32xf32>
    %219 = arith.subf %206, %218 : vector<16x32xf32>
    %cst_108 = arith.constant 1.000000e-07 : f32
    %220 = vector.broadcast %cst_108 : f32 to vector<16x1xf32>
    %221 = arith.addf %217, %220 : vector<16x1xf32>
    %222 = math.rsqrt %221 : vector<16x1xf32>
    %223 = vector.broadcast %222 : vector<16x1xf32> to vector<16x32xf32>
    %224 = arith.mulf %219, %223 : vector<16x32xf32>
    %c0_109 = arith.constant 0 : index
    %c0_110 = arith.constant 0 : index
    %c0_111 = arith.constant 0 : index
    %225 = vector.load %arg17[%c0_109, %c0_110, %c0_111] : memref<2x1x32xf32, #tpu.memory_space<vmem>>, vector<1x1x32xf32>
    %226 = vector.shape_cast %225 : vector<1x1x32xf32> to vector<1x32xf32>
    %227 = vector.broadcast %226 : vector<1x32xf32> to vector<16x32xf32>
    %228 = arith.mulf %224, %227 : vector<16x32xf32>
    %c0_112 = arith.constant 0 : index
    %c0_113 = arith.constant 0 : index
    %c0_114 = arith.constant 0 : index
    %229 = vector.load %arg18[%c0_112, %c0_113, %c0_114] : memref<2x1x32xf32, #tpu.memory_space<vmem>>, vector<1x1x32xf32>
    %230 = vector.shape_cast %229 : vector<1x1x32xf32> to vector<1x32xf32>
    %231 = vector.broadcast %230 : vector<1x32xf32> to vector<16x32xf32>
    %232 = arith.addf %228, %231 : vector<16x32xf32>
    %c1 = arith.constant 1 : index
    %c0_115 = arith.constant 0 : index
    %c0_116 = arith.constant 0 : index
    %233 = vector.load %arg3[%c1, %c0_115, %c0_116] : memref<2x32x32xf32, #tpu.memory_space<vmem>>, vector<1x32x32xf32>
    %234 = vector.shape_cast %233 : vector<1x32x32xf32> to vector<32x32xf32>
    %cst_117 = arith.constant dense<0.000000e+00> : vector<16x32xf32>
    %235 = tpu.matmul %232, %234, %cst_117 {dimension_numbers = #tpu.dot_dimension_numbers<[1], [0], [0], [1], [0, 0, 1, 1], [], []>} : vector<16x32xf32>, vector<32x32xf32>, vector<16x32xf32> -> vector<16x32xf32>
    %c1_118 = arith.constant 1 : index
    %c0_119 = arith.constant 0 : index
    %c0_120 = arith.constant 0 : index
    %236 = vector.load %arg4[%c1_118, %c0_119, %c0_120] : memref<2x1x32xf32, #tpu.memory_space<vmem>>, vector<1x1x32xf32>
    %237 = vector.shape_cast %236 : vector<1x1x32xf32> to vector<1x32xf32>
    %238 = vector.broadcast %237 : vector<1x32xf32> to vector<16x32xf32>
    %239 = arith.addf %235, %238 : vector<16x32xf32>
    %c1_121 = arith.constant 1 : index
    %c0_122 = arith.constant 0 : index
    %c0_123 = arith.constant 0 : index
    %240 = vector.load %arg5[%c1_121, %c0_122, %c0_123] : memref<2x32x32xf32, #tpu.memory_space<vmem>>, vector<1x32x32xf32>
    %241 = vector.shape_cast %240 : vector<1x32x32xf32> to vector<32x32xf32>
    %cst_124 = arith.constant dense<0.000000e+00> : vector<16x32xf32>
    %242 = tpu.matmul %232, %241, %cst_124 {dimension_numbers = #tpu.dot_dimension_numbers<[1], [0], [0], [1], [0, 0, 1, 1], [], []>} : vector<16x32xf32>, vector<32x32xf32>, vector<16x32xf32> -> vector<16x32xf32>
    %c1_125 = arith.constant 1 : index
    %c0_126 = arith.constant 0 : index
    %c0_127 = arith.constant 0 : index
    %243 = vector.load %arg6[%c1_125, %c0_126, %c0_127] : memref<2x1x32xf32, #tpu.memory_space<vmem>>, vector<1x1x32xf32>
    %244 = vector.shape_cast %243 : vector<1x1x32xf32> to vector<1x32xf32>
    %245 = vector.broadcast %244 : vector<1x32xf32> to vector<16x32xf32>
    %246 = arith.addf %242, %245 : vector<16x32xf32>
    %c1_128 = arith.constant 1 : index
    %c0_129 = arith.constant 0 : index
    %c0_130 = arith.constant 0 : index
    %247 = vector.load %arg7[%c1_128, %c0_129, %c0_130] : memref<2x32x32xf32, #tpu.memory_space<vmem>>, vector<1x32x32xf32>
    %248 = vector.shape_cast %247 : vector<1x32x32xf32> to vector<32x32xf32>
    %cst_131 = arith.constant dense<0.000000e+00> : vector<16x32xf32>
    %249 = tpu.matmul %232, %248, %cst_131 {dimension_numbers = #tpu.dot_dimension_numbers<[1], [0], [0], [1], [0, 0, 1, 1], [], []>} : vector<16x32xf32>, vector<32x32xf32>, vector<16x32xf32> -> vector<16x32xf32>
    %c1_132 = arith.constant 1 : index
    %c0_133 = arith.constant 0 : index
    %c0_134 = arith.constant 0 : index
    %250 = vector.load %arg8[%c1_132, %c0_133, %c0_134] : memref<2x1x32xf32, #tpu.memory_space<vmem>>, vector<1x1x32xf32>
    %251 = vector.shape_cast %250 : vector<1x1x32xf32> to vector<1x32xf32>
    %252 = vector.broadcast %251 : vector<1x32xf32> to vector<16x32xf32>
    %253 = arith.addf %249, %252 : vector<16x32xf32>
    %254 = vector.extract_strided_slice %12 {offsets = [0, 0], sizes = [1, 8], strides = [1, 1]} : vector<2x8xf32> to vector<1x8xf32>
    %255 = vector.extract_strided_slice %239 {offsets = [0, 0], sizes = [8, 16], strides = [1, 1]} : vector<16x32xf32> to vector<8x16xf32>
    %256 = vector.extract_strided_slice %246 {offsets = [0, 0], sizes = [8, 16], strides = [1, 1]} : vector<16x32xf32> to vector<8x16xf32>
    %257 = vector.extract_strided_slice %253 {offsets = [0, 0], sizes = [8, 16], strides = [1, 1]} : vector<16x32xf32> to vector<8x16xf32>
    %cst_135 = arith.constant dense<0.000000e+00> : vector<8x8xf32>
    %258 = tpu.matmul %255, %256, %cst_135 {dimension_numbers = #tpu.dot_dimension_numbers<[1], [1], [0], [0], [0, 0, 1, 0], [], []>} : vector<8x16xf32>, vector<8x16xf32>, vector<8x8xf32> -> vector<8x8xf32>
    %cst_136 = arith.constant 2.500000e-01 : f32
    %259 = vector.broadcast %cst_136 : f32 to vector<8x8xf32>
    %260 = arith.mulf %258, %259 : vector<8x8xf32>
    %261 = vector.broadcast %254 : vector<1x8xf32> to vector<8x8xf32>
    %262 = arith.addf %260, %261 : vector<8x8xf32>
    %cst_137 = arith.constant dense<0xFF800000> : vector<8xf32>
    %263 = vector.multi_reduction <maximumf>, %262, %cst_137 [1] : vector<8x8xf32> to vector<8xf32>
    %264 = vector.shape_cast %263 : vector<8xf32> to vector<8x1xf32>
    %265 = vector.broadcast %264 : vector<8x1xf32> to vector<8x8xf32>
    %266 = arith.subf %262, %265 : vector<8x8xf32>
    %267 = math.exp %266 : vector<8x8xf32>
    %cst_138 = arith.constant dense<0.000000e+00> : vector<8xf32>
    %268 = vector.multi_reduction <add>, %267, %cst_138 [1] : vector<8x8xf32> to vector<8xf32>
    %269 = vector.shape_cast %268 : vector<8xf32> to vector<8x1xf32>
    %270 = tpu.reciprocal %269 {approx = true} : vector<8x1xf32> -> vector<8x1xf32>
    %271 = vector.broadcast %270 : vector<8x1xf32> to vector<8x8xf32>
    %272 = arith.mulf %267, %271 : vector<8x8xf32>
    %cst_139 = arith.constant dense<0.000000e+00> : vector<8x16xf32>
    %273 = tpu.matmul %272, %257, %cst_139 {dimension_numbers = #tpu.dot_dimension_numbers<[1], [0], [0], [1], [0, 0, 1, 1], [], []>} : vector<8x8xf32>, vector<8x16xf32>, vector<8x16xf32> -> vector<8x16xf32>
    %c0_140 = arith.constant 0 : index
    %c0_141 = arith.constant 0 : index
    %274 = vector.load %arg22[%c0_140, %c0_141] : memref<16x32xf32, #tpu.memory_space<vmem>>, vector<8x16xf32>
    tpu.vector_store %arg22[%c0_140, %c0_141], %273 {strides = array<i32>} : memref<16x32xf32, #tpu.memory_space<vmem>>, vector<8x16xf32>,
    %275 = vector.extract_strided_slice %239 {offsets = [0, 16], sizes = [8, 16], strides = [1, 1]} : vector<16x32xf32> to vector<8x16xf32>
    %276 = vector.extract_strided_slice %246 {offsets = [0, 16], sizes = [8, 16], strides = [1, 1]} : vector<16x32xf32> to vector<8x16xf32>
    %277 = vector.extract_strided_slice %253 {offsets = [0, 16], sizes = [8, 16], strides = [1, 1]} : vector<16x32xf32> to vector<8x16xf32>
    %cst_142 = arith.constant dense<0.000000e+00> : vector<8x8xf32>
    %278 = tpu.matmul %275, %276, %cst_142 {dimension_numbers = #tpu.dot_dimension_numbers<[1], [1], [0], [0], [0, 0, 1, 0], [], []>} : vector<8x16xf32>, vector<8x16xf32>, vector<8x8xf32> -> vector<8x8xf32>
    %cst_143 = arith.constant 2.500000e-01 : f32
    %279 = vector.broadcast %cst_143 : f32 to vector<8x8xf32>
    %280 = arith.mulf %278, %279 : vector<8x8xf32>
    %281 = vector.broadcast %254 : vector<1x8xf32> to vector<8x8xf32>
    %282 = arith.addf %280, %281 : vector<8x8xf32>
    %cst_144 = arith.constant dense<0xFF800000> : vector<8xf32>
    %283 = vector.multi_reduction <maximumf>, %282, %cst_144 [1] : vector<8x8xf32> to vector<8xf32>
    %284 = vector.shape_cast %283 : vector<8xf32> to vector<8x1xf32>
    %285 = vector.broadcast %284 : vector<8x1xf32> to vector<8x8xf32>
    %286 = arith.subf %282, %285 : vector<8x8xf32>
    %287 = math.exp %286 : vector<8x8xf32>
    %cst_145 = arith.constant dense<0.000000e+00> : vector<8xf32>
    %288 = vector.multi_reduction <add>, %287, %cst_145 [1] : vector<8x8xf32> to vector<8xf32>
    %289 = vector.shape_cast %288 : vector<8xf32> to vector<8x1xf32>
    %290 = tpu.reciprocal %289 {approx = true} : vector<8x1xf32> -> vector<8x1xf32>
    %291 = vector.broadcast %290 : vector<8x1xf32> to vector<8x8xf32>
    %292 = arith.mulf %287, %291 : vector<8x8xf32>
    %cst_146 = arith.constant dense<0.000000e+00> : vector<8x16xf32>
    %293 = tpu.matmul %292, %277, %cst_146 {dimension_numbers = #tpu.dot_dimension_numbers<[1], [0], [0], [1], [0, 0, 1, 1], [], []>} : vector<8x8xf32>, vector<8x16xf32>, vector<8x16xf32> -> vector<8x16xf32>
    %c0_147 = arith.constant 0 : index
    %c16_148 = arith.constant 16 : index
    %294 = vector.load %arg22[%c0_147, %c16_148] : memref<16x32xf32, #tpu.memory_space<vmem>>, vector<8x16xf32>
    tpu.vector_store %arg22[%c0_147, %c16_148], %293 {strides = array<i32>} : memref<16x32xf32, #tpu.memory_space<vmem>>, vector<8x16xf32>,
    %295 = vector.extract_strided_slice %12 {offsets = [1, 0], sizes = [1, 8], strides = [1, 1]} : vector<2x8xf32> to vector<1x8xf32>
    %296 = vector.extract_strided_slice %239 {offsets = [8, 0], sizes = [8, 16], strides = [1, 1]} : vector<16x32xf32> to vector<8x16xf32>
    %297 = vector.extract_strided_slice %246 {offsets = [8, 0], sizes = [8, 16], strides = [1, 1]} : vector<16x32xf32> to vector<8x16xf32>
    %298 = vector.extract_strided_slice %253 {offsets = [8, 0], sizes = [8, 16], strides = [1, 1]} : vector<16x32xf32> to vector<8x16xf32>
    %cst_149 = arith.constant dense<0.000000e+00> : vector<8x8xf32>
    %299 = tpu.matmul %296, %297, %cst_149 {dimension_numbers = #tpu.dot_dimension_numbers<[1], [1], [0], [0], [0, 0, 1, 0], [], []>} : vector<8x16xf32>, vector<8x16xf32>, vector<8x8xf32> -> vector<8x8xf32>
    %cst_150 = arith.constant 2.500000e-01 : f32
    %300 = vector.broadcast %cst_150 : f32 to vector<8x8xf32>
    %301 = arith.mulf %299, %300 : vector<8x8xf32>
    %302 = vector.broadcast %295 : vector<1x8xf32> to vector<8x8xf32>
    %303 = arith.addf %301, %302 : vector<8x8xf32>
    %cst_151 = arith.constant dense<0xFF800000> : vector<8xf32>
    %304 = vector.multi_reduction <maximumf>, %303, %cst_151 [1] : vector<8x8xf32> to vector<8xf32>
    %305 = vector.shape_cast %304 : vector<8xf32> to vector<8x1xf32>
    %306 = vector.broadcast %305 : vector<8x1xf32> to vector<8x8xf32>
    %307 = arith.subf %303, %306 : vector<8x8xf32>
    %308 = math.exp %307 : vector<8x8xf32>
    %cst_152 = arith.constant dense<0.000000e+00> : vector<8xf32>
    %309 = vector.multi_reduction <add>, %308, %cst_152 [1] : vector<8x8xf32> to vector<8xf32>
    %310 = vector.shape_cast %309 : vector<8xf32> to vector<8x1xf32>
    %311 = tpu.reciprocal %310 {approx = true} : vector<8x1xf32> -> vector<8x1xf32>
    %312 = vector.broadcast %311 : vector<8x1xf32> to vector<8x8xf32>
    %313 = arith.mulf %308, %312 : vector<8x8xf32>
    %cst_153 = arith.constant dense<0.000000e+00> : vector<8x16xf32>
    %314 = tpu.matmul %313, %298, %cst_153 {dimension_numbers = #tpu.dot_dimension_numbers<[1], [0], [0], [1], [0, 0, 1, 1], [], []>} : vector<8x8xf32>, vector<8x16xf32>, vector<8x16xf32> -> vector<8x16xf32>
    %c8_154 = arith.constant 8 : index
    %c0_155 = arith.constant 0 : index
    %315 = vector.load %arg22[%c8_154, %c0_155] : memref<16x32xf32, #tpu.memory_space<vmem>>, vector<8x16xf32>
    tpu.vector_store %arg22[%c8_154, %c0_155], %314 {strides = array<i32>} : memref<16x32xf32, #tpu.memory_space<vmem>>, vector<8x16xf32>,
    %316 = vector.extract_strided_slice %239 {offsets = [8, 16], sizes = [8, 16], strides = [1, 1]} : vector<16x32xf32> to vector<8x16xf32>
    %317 = vector.extract_strided_slice %246 {offsets = [8, 16], sizes = [8, 16], strides = [1, 1]} : vector<16x32xf32> to vector<8x16xf32>
    %318 = vector.extract_strided_slice %253 {offsets = [8, 16], sizes = [8, 16], strides = [1, 1]} : vector<16x32xf32> to vector<8x16xf32>
    %cst_156 = arith.constant dense<0.000000e+00> : vector<8x8xf32>
    %319 = tpu.matmul %316, %317, %cst_156 {dimension_numbers = #tpu.dot_dimension_numbers<[1], [1], [0], [0], [0, 0, 1, 0], [], []>} : vector<8x16xf32>, vector<8x16xf32>, vector<8x8xf32> -> vector<8x8xf32>
    %cst_157 = arith.constant 2.500000e-01 : f32
    %320 = vector.broadcast %cst_157 : f32 to vector<8x8xf32>
    %321 = arith.mulf %319, %320 : vector<8x8xf32>
    %322 = vector.broadcast %295 : vector<1x8xf32> to vector<8x8xf32>
    %323 = arith.addf %321, %322 : vector<8x8xf32>
    %cst_158 = arith.constant dense<0xFF800000> : vector<8xf32>
    %324 = vector.multi_reduction <maximumf>, %323, %cst_158 [1] : vector<8x8xf32> to vector<8xf32>
    %325 = vector.shape_cast %324 : vector<8xf32> to vector<8x1xf32>
    %326 = vector.broadcast %325 : vector<8x1xf32> to vector<8x8xf32>
    %327 = arith.subf %323, %326 : vector<8x8xf32>
    %328 = math.exp %327 : vector<8x8xf32>
    %cst_159 = arith.constant dense<0.000000e+00> : vector<8xf32>
    %329 = vector.multi_reduction <add>, %328, %cst_159 [1] : vector<8x8xf32> to vector<8xf32>
    %330 = vector.shape_cast %329 : vector<8xf32> to vector<8x1xf32>
    %331 = tpu.reciprocal %330 {approx = true} : vector<8x1xf32> -> vector<8x1xf32>
    %332 = vector.broadcast %331 : vector<8x1xf32> to vector<8x8xf32>
    %333 = arith.mulf %328, %332 : vector<8x8xf32>
    %cst_160 = arith.constant dense<0.000000e+00> : vector<8x16xf32>
    %334 = tpu.matmul %333, %318, %cst_160 {dimension_numbers = #tpu.dot_dimension_numbers<[1], [0], [0], [1], [0, 0, 1, 1], [], []>} : vector<8x8xf32>, vector<8x16xf32>, vector<8x16xf32> -> vector<8x16xf32>
    %c8_161 = arith.constant 8 : index
    %c16_162 = arith.constant 16 : index
    %335 = vector.load %arg22[%c8_161, %c16_162] : memref<16x32xf32, #tpu.memory_space<vmem>>, vector<8x16xf32>
    tpu.vector_store %arg22[%c8_161, %c16_162], %334 {strides = array<i32>} : memref<16x32xf32, #tpu.memory_space<vmem>>, vector<8x16xf32>,
    %c0_163 = arith.constant 0 : index
    %c0_164 = arith.constant 0 : index
    %336 = vector.load %arg22[%c0_163, %c0_164] : memref<16x32xf32, #tpu.memory_space<vmem>>, vector<16x32xf32>
    %c1_165 = arith.constant 1 : index
    %c0_166 = arith.constant 0 : index
    %c0_167 = arith.constant 0 : index
    %337 = vector.load %arg9[%c1_165, %c0_166, %c0_167] : memref<2x32x32xf32, #tpu.memory_space<vmem>>, vector<1x32x32xf32>
    %338 = vector.shape_cast %337 : vector<1x32x32xf32> to vector<32x32xf32>
    %cst_168 = arith.constant dense<0.000000e+00> : vector<16x32xf32>
    %339 = tpu.matmul %336, %338, %cst_168 {dimension_numbers = #tpu.dot_dimension_numbers<[1], [0], [0], [1], [0, 0, 1, 1], [], []>} : vector<16x32xf32>, vector<32x32xf32>, vector<16x32xf32> -> vector<16x32xf32>
    %c1_169 = arith.constant 1 : index
    %c0_170 = arith.constant 0 : index
    %c0_171 = arith.constant 0 : index
    %340 = vector.load %arg10[%c1_169, %c0_170, %c0_171] : memref<2x1x32xf32, #tpu.memory_space<vmem>>, vector<1x1x32xf32>
    %341 = vector.shape_cast %340 : vector<1x1x32xf32> to vector<1x32xf32>
    %342 = vector.broadcast %341 : vector<1x32xf32> to vector<16x32xf32>
    %343 = arith.addf %339, %342 : vector<16x32xf32>
    %344 = arith.addf %232, %343 : vector<16x32xf32>
    %cst_172 = arith.constant dense<0.000000e+00> : vector<16xf32>
    %345 = vector.multi_reduction <add>, %344, %cst_172 [1] : vector<16x32xf32> to vector<16xf32>
    %346 = vector.shape_cast %345 : vector<16xf32> to vector<16x1xf32>
    %cst_173 = arith.constant 3.200000e+01 : f32
    %347 = vector.broadcast %cst_173 : f32 to vector<16x1xf32>
    %348 = arith.divf %346, %347 : vector<16x1xf32>
    %349 = vector.broadcast %348 : vector<16x1xf32> to vector<16x32xf32>
    %350 = arith.subf %344, %349 : vector<16x32xf32>
    %351 = arith.mulf %350, %350 : vector<16x32xf32>
    %cst_174 = arith.constant dense<0.000000e+00> : vector<16xf32>
    %352 = vector.multi_reduction <add>, %351, %cst_174 [1] : vector<16x32xf32> to vector<16xf32>
    %353 = vector.shape_cast %352 : vector<16xf32> to vector<16x1xf32>
    %cst_175 = arith.constant 3.200000e+01 : f32
    %354 = vector.broadcast %cst_175 : f32 to vector<16x1xf32>
    %355 = arith.divf %353, %354 : vector<16x1xf32>
    %356 = vector.broadcast %348 : vector<16x1xf32> to vector<16x32xf32>
    %357 = arith.subf %344, %356 : vector<16x32xf32>
    %cst_176 = arith.constant 1.000000e-07 : f32
    %358 = vector.broadcast %cst_176 : f32 to vector<16x1xf32>
    %359 = arith.addf %355, %358 : vector<16x1xf32>
    %360 = math.rsqrt %359 : vector<16x1xf32>
    %361 = vector.broadcast %360 : vector<16x1xf32> to vector<16x32xf32>
    %362 = arith.mulf %357, %361 : vector<16x32xf32>
    %c1_177 = arith.constant 1 : index
    %c0_178 = arith.constant 0 : index
    %c0_179 = arith.constant 0 : index
    %363 = vector.load %arg11[%c1_177, %c0_178, %c0_179] : memref<2x1x32xf32, #tpu.memory_space<vmem>>, vector<1x1x32xf32>
    %364 = vector.shape_cast %363 : vector<1x1x32xf32> to vector<1x32xf32>
    %365 = vector.broadcast %364 : vector<1x32xf32> to vector<16x32xf32>
    %366 = arith.mulf %362, %365 : vector<16x32xf32>
    %c1_180 = arith.constant 1 : index
    %c0_181 = arith.constant 0 : index
    %c0_182 = arith.constant 0 : index
    %367 = vector.load %arg12[%c1_180, %c0_181, %c0_182] : memref<2x1x32xf32, #tpu.memory_space<vmem>>, vector<1x1x32xf32>
    %368 = vector.shape_cast %367 : vector<1x1x32xf32> to vector<1x32xf32>
    %369 = vector.broadcast %368 : vector<1x32xf32> to vector<16x32xf32>
    %370 = arith.addf %366, %369 : vector<16x32xf32>
    %c1_183 = arith.constant 1 : index
    %c0_184 = arith.constant 0 : index
    %c0_185 = arith.constant 0 : index
    %371 = vector.load %arg13[%c1_183, %c0_184, %c0_185] : memref<2x32x64xf32, #tpu.memory_space<vmem>>, vector<1x32x64xf32>
    %372 = vector.shape_cast %371 : vector<1x32x64xf32> to vector<32x64xf32>
    %cst_186 = arith.constant dense<0.000000e+00> : vector<16x64xf32>
    %373 = tpu.matmul %370, %372, %cst_186 {dimension_numbers = #tpu.dot_dimension_numbers<[1], [0], [0], [1], [0, 0, 1, 1], [], []>} : vector<16x32xf32>, vector<32x64xf32>, vector<16x64xf32> -> vector<16x64xf32>
    %c1_187 = arith.constant 1 : index
    %c0_188 = arith.constant 0 : index
    %c0_189 = arith.constant 0 : index
    %374 = vector.load %arg14[%c1_187, %c0_188, %c0_189] : memref<2x1x64xf32, #tpu.memory_space<vmem>>, vector<1x1x64xf32>
    %375 = vector.shape_cast %374 : vector<1x1x64xf32> to vector<1x64xf32>
    %376 = vector.broadcast %375 : vector<1x64xf32> to vector<16x64xf32>
    %377 = arith.addf %373, %376 : vector<16x64xf32>
    %cst_190 = arith.constant 5.000000e-01 : f32
    %378 = vector.broadcast %cst_190 : f32 to vector<16x64xf32>
    %379 = arith.mulf %378, %377 : vector<16x64xf32>
    %cst_191 = arith.constant 0.707106769 : f32
    %380 = vector.broadcast %cst_191 : f32 to vector<16x64xf32>
    %381 = arith.mulf %377, %380 : vector<16x64xf32>
    %cst_192 = arith.constant 0.000000e+00 : f32
    %382 = vector.broadcast %cst_192 : f32 to vector<16x64xf32>
    %383 = arith.cmpf oge, %381, %382 : vector<16x64xf32>
    %cst_193 = arith.constant 1.000000e+00 : f32
    %cst_194 = arith.constant -1.000000e+00 : f32
    %384 = vector.broadcast %cst_193 : f32 to vector<16x64xf32>
    %385 = vector.broadcast %cst_194 : f32 to vector<16x64xf32>
    %386 = arith.select %383, %384, %385 : vector<16x64xi1>, vector<16x64xf32>
    %387 = math.absf %381 : vector<16x64xf32>
    %cst_195 = arith.constant 0.327591091 : f32
    %388 = vector.broadcast %cst_195 : f32 to vector<16x64xf32>
    %389 = arith.mulf %388, %387 : vector<16x64xf32>
    %cst_196 = arith.constant 1.000000e+00 : f32
    %390 = vector.broadcast %cst_196 : f32 to vector<16x64xf32>
    %391 = arith.addf %390, %389 : vector<16x64xf32>
    %cst_197 = arith.constant 1.000000e+00 : f32
    %392 = vector.broadcast %cst_197 : f32 to vector<16x64xf32>
    %393 = arith.divf %392, %391 : vector<16x64xf32>
    %cst_198 = arith.constant 1.06140542 : f32
    %394 = vector.broadcast %cst_198 : f32 to vector<16x64xf32>
    %395 = arith.mulf %394, %393 : vector<16x64xf32>
    %cst_199 = arith.constant -1.45315206 : f32
    %396 = vector.broadcast %cst_199 : f32 to vector<16x64xf32>
    %397 = arith.addf %395, %396 : vector<16x64xf32>
    %398 = arith.mulf %397, %393 : vector<16x64xf32>
    %cst_200 = arith.constant 1.42141378 : f32
    %399 = vector.broadcast %cst_200 : f32 to vector<16x64xf32>
    %400 = arith.addf %398, %399 : vector<16x64xf32>
    %401 = arith.mulf %400, %393 : vector<16x64xf32>
    %cst_201 = arith.constant -0.284496725 : f32
    %402 = vector.broadcast %cst_201 : f32 to vector<16x64xf32>
    %403 = arith.addf %401, %402 : vector<16x64xf32>
    %404 = arith.mulf %403, %393 : vector<16x64xf32>
    %cst_202 = arith.constant 0.254829586 : f32
    %405 = vector.broadcast %cst_202 : f32 to vector<16x64xf32>
    %406 = arith.addf %404, %405 : vector<16x64xf32>
    %407 = arith.mulf %406, %393 : vector<16x64xf32>
    %cst_203 = arith.constant 0.000000e+00 : f32
    %408 = vector.broadcast %cst_203 : f32 to vector<16x64xf32>
    %409 = arith.subf %408, %387 : vector<16x64xf32>
    %410 = arith.mulf %409, %387 : vector<16x64xf32>
    %411 = math.exp %410 : vector<16x64xf32>
    %412 = arith.mulf %407, %411 : vector<16x64xf32>
    %cst_204 = arith.constant 1.000000e+00 : f32
    %413 = vector.broadcast %cst_204 : f32 to vector<16x64xf32>
    %414 = arith.subf %413, %412 : vector<16x64xf32>
    %415 = arith.mulf %386, %414 : vector<16x64xf32>
    %cst_205 = arith.constant 1.000000e+00 : f32
    %416 = vector.broadcast %cst_205 : f32 to vector<16x64xf32>
    %417 = arith.addf %416, %415 : vector<16x64xf32>
    %418 = arith.mulf %379, %417 : vector<16x64xf32>
    %c1_206 = arith.constant 1 : index
    %c0_207 = arith.constant 0 : index
    %c0_208 = arith.constant 0 : index
    %419 = vector.load %arg15[%c1_206, %c0_207, %c0_208] : memref<2x64x32xf32, #tpu.memory_space<vmem>>, vector<1x64x32xf32>
    %420 = vector.shape_cast %419 : vector<1x64x32xf32> to vector<64x32xf32>
    %cst_209 = arith.constant dense<0.000000e+00> : vector<16x32xf32>
    %421 = tpu.matmul %418, %420, %cst_209 {dimension_numbers = #tpu.dot_dimension_numbers<[1], [0], [0], [1], [0, 0, 1, 1], [], []>} : vector<16x64xf32>, vector<64x32xf32>, vector<16x32xf32> -> vector<16x32xf32>
    %c1_210 = arith.constant 1 : index
    %c0_211 = arith.constant 0 : index
    %c0_212 = arith.constant 0 : index
    %422 = vector.load %arg16[%c1_210, %c0_211, %c0_212] : memref<2x1x32xf32, #tpu.memory_space<vmem>>, vector<1x1x32xf32>
    %423 = vector.shape_cast %422 : vector<1x1x32xf32> to vector<1x32xf32>
    %424 = vector.broadcast %423 : vector<1x32xf32> to vector<16x32xf32>
    %425 = arith.addf %421, %424 : vector<16x32xf32>
    %426 = arith.addf %370, %425 : vector<16x32xf32>
    %cst_213 = arith.constant dense<0.000000e+00> : vector<16xf32>
    %427 = vector.multi_reduction <add>, %426, %cst_213 [1] : vector<16x32xf32> to vector<16xf32>
    %428 = vector.shape_cast %427 : vector<16xf32> to vector<16x1xf32>
    %cst_214 = arith.constant 3.200000e+01 : f32
    %429 = vector.broadcast %cst_214 : f32 to vector<16x1xf32>
    %430 = arith.divf %428, %429 : vector<16x1xf32>
    %431 = vector.broadcast %430 : vector<16x1xf32> to vector<16x32xf32>
    %432 = arith.subf %426, %431 : vector<16x32xf32>
    %433 = arith.mulf %432, %432 : vector<16x32xf32>
    %cst_215 = arith.constant dense<0.000000e+00> : vector<16xf32>
    %434 = vector.multi_reduction <add>, %433, %cst_215 [1] : vector<16x32xf32> to vector<16xf32>
    %435 = vector.shape_cast %434 : vector<16xf32> to vector<16x1xf32>
    %cst_216 = arith.constant 3.200000e+01 : f32
    %436 = vector.broadcast %cst_216 : f32 to vector<16x1xf32>
    %437 = arith.divf %435, %436 : vector<16x1xf32>
    %438 = vector.broadcast %430 : vector<16x1xf32> to vector<16x32xf32>
    %439 = arith.subf %426, %438 : vector<16x32xf32>
    %cst_217 = arith.constant 1.000000e-07 : f32
    %440 = vector.broadcast %cst_217 : f32 to vector<16x1xf32>
    %441 = arith.addf %437, %440 : vector<16x1xf32>
    %442 = math.rsqrt %441 : vector<16x1xf32>
    %443 = vector.broadcast %442 : vector<16x1xf32> to vector<16x32xf32>
    %444 = arith.mulf %439, %443 : vector<16x32xf32>
    %c1_218 = arith.constant 1 : index
    %c0_219 = arith.constant 0 : index
    %c0_220 = arith.constant 0 : index
    %445 = vector.load %arg17[%c1_218, %c0_219, %c0_220] : memref<2x1x32xf32, #tpu.memory_space<vmem>>, vector<1x1x32xf32>
    %446 = vector.shape_cast %445 : vector<1x1x32xf32> to vector<1x32xf32>
    %447 = vector.broadcast %446 : vector<1x32xf32> to vector<16x32xf32>
    %448 = arith.mulf %444, %447 : vector<16x32xf32>
    %c1_221 = arith.constant 1 : index
    %c0_222 = arith.constant 0 : index
    %c0_223 = arith.constant 0 : index
    %449 = vector.load %arg18[%c1_221, %c0_222, %c0_223] : memref<2x1x32xf32, #tpu.memory_space<vmem>>, vector<1x1x32xf32>
    %450 = vector.shape_cast %449 : vector<1x1x32xf32> to vector<1x32xf32>
    %451 = vector.broadcast %450 : vector<1x32xf32> to vector<16x32xf32>
    %452 = arith.addf %448, %451 : vector<16x32xf32>
    %453 = vector.extract_strided_slice %452 {offsets = [0, 0], sizes = [1, 32], strides = [1, 1]} : vector<16x32xf32> to vector<1x32xf32>
    %454 = vector.extract_strided_slice %452 {offsets = [8, 0], sizes = [1, 32], strides = [1, 1]} : vector<16x32xf32> to vector<1x32xf32>
    %455 = tpu.concatenate %453, %454 in 0 : vector<1x32xf32>, vector<1x32xf32> -> vector<2x32xf32>
    %c0_224 = arith.constant 0 : index
    %c0_225 = arith.constant 0 : index
    %456 = vector.load %arg19[%c0_224, %c0_225] : memref<32x7xf32, #tpu.memory_space<vmem>>, vector<32x7xf32>
    %cst_226 = arith.constant dense<0.000000e+00> : vector<2x7xf32>
    %457 = tpu.matmul %455, %456, %cst_226 {dimension_numbers = #tpu.dot_dimension_numbers<[1], [0], [0], [1], [0, 0, 1, 1], [], []>} : vector<2x32xf32>, vector<32x7xf32>, vector<2x7xf32> -> vector<2x7xf32>
    %c0_227 = arith.constant 0 : index
    %c0_228 = arith.constant 0 : index
    %458 = vector.load %arg20[%c0_227, %c0_228] : memref<1x7xf32, #tpu.memory_space<vmem>>, vector<1x7xf32>
    %459 = vector.broadcast %458 : vector<1x7xf32> to vector<2x7xf32>
    %460 = arith.addf %457, %459 : vector<2x7xf32>
    %461 = arith.negf %460 : vector<2x7xf32>
    %462 = math.exp %461 : vector<2x7xf32>
    %cst_229 = arith.constant 1.000000e+00 : f32
    %463 = vector.broadcast %cst_229 : f32 to vector<2x7xf32>
    %464 = arith.addf %463, %462 : vector<2x7xf32>
    %465 = arith.divf %463, %464 : vector<2x7xf32>
    %c0_230 = arith.constant 0 : index
    %c0_231 = arith.constant 0 : index
    %466 = vector.load %arg21[%c0_230, %c0_231] : memref<2x7xf32, #tpu.memory_space<vmem>>, vector<2x7xf32>
    tpu.vector_store %arg21[%c0_230, %c0_231], %465 {strides = array<i32>} : memref<2x7xf32, #tpu.memory_space<vmem>>, vector<2x7xf32>,
    return
  }
}

</mosaic_0001>

<llo_original>
// kernel: deberta_n_heads_forward.1
$region0: #{deberta_n_heads_forward.1}
  #allocation0 [shape = 'u32[]', space=smem, size = 0x4, offset = 0x4, fixed_abs, tag = 'smem constant byte address 0x4 - core index']
  #allocation1 [shape = 'u32[144,128]{1,0:T(1,128)}', space=vmem, size = 0x12000, scoped, tag = 'internal scratch']
  #allocation2 [shape = 'f32[16,32]{1,0:T(8,128)}', space=vmem, size = 0x2000, scoped, tag = 'scratch operand']
  %s0 = inlined_call_operand.vmem [shape: s32[16,1], index: 0, kind: input, shape index: {}]
  %s1 = inlined_call_operand.vmem [shape: f32[2,8], index: 1, kind: input, shape index: {}]
  %s2 = inlined_call_operand.vmem [shape: f32[100,32], index: 2, kind: input, shape index: {}]
  %s3 = inlined_call_operand.vmem [shape: f32[2,32,32], index: 3, kind: input, shape index: {}]
  %s4 = inlined_call_operand.vmem [shape: f32[2,1,32], index: 4, kind: input, shape index: {}]
  %s5 = inlined_call_operand.vmem [shape: f32[2,32,32], index: 5, kind: input, shape index: {}]
  %s6 = inlined_call_operand.vmem [shape: f32[2,1,32], index: 6, kind: input, shape index: {}]
  %s7 = inlined_call_operand.vmem [shape: f32[2,32,32], index: 7, kind: input, shape index: {}]
  %s8 = inlined_call_operand.vmem [shape: f32[2,1,32], index: 8, kind: input, shape index: {}]
  %s9 = inlined_call_operand.vmem [shape: f32[2,32,32], index: 9, kind: input, shape index: {}]
  %s10 = inlined_call_operand.vmem [shape: f32[2,1,32], index: 10, kind: input, shape index: {}]
  %s11 = inlined_call_operand.vmem [shape: f32[2,1,32], index: 11, kind: input, shape index: {}]
  %s12 = inlined_call_operand.vmem [shape: f32[2,1,32], index: 12, kind: input, shape index: {}]
  %s13 = inlined_call_operand.vmem [shape: f32[2,32,64], index: 13, kind: input, shape index: {}]
  %s14 = inlined_call_operand.vmem [shape: f32[2,1,64], index: 14, kind: input, shape index: {}]
  %s15 = inlined_call_operand.vmem [shape: f32[2,64,32], index: 15, kind: input, shape index: {}]
  %s16 = inlined_call_operand.vmem [shape: f32[2,1,32], index: 16, kind: input, shape index: {}]
  %s17 = inlined_call_operand.vmem [shape: f32[2,1,32], index: 17, kind: input, shape index: {}]
  %s18 = inlined_call_operand.vmem [shape: f32[2,1,32], index: 18, kind: input, shape index: {}]
  %s19 = inlined_call_operand.vmem [shape: f32[32,7], index: 19, kind: input, shape index: {}]
  %s20 = inlined_call_operand.hbm [shape: f32[1,7], index: 20, kind: input, shape index: {}]
  %s21 = inlined_call_operand.hbm [shape: f32[2,7], index: 21, kind: output, shape index: {}]
  %s22 = sld [smem:[#allocation0]]
  $region98: #{deberta_n_heads_forward.1} parent=0
    _
  %s24 = ssub.s32 1, %s22
  %s25 = scalar_select 0, %s24, %s22
  $region1: #{deberta_n_heads_forward.1} parent=0
    #allocation3 [shape = 'u8[512]{0}', space=vmem, size = 0x400, scoped, tag = 'input window, operand 20, single buffered']
    #allocation4 [shape = 's32[1]{0}', space=sflag, size = 0x4, scoped, tag = 'scoped memory for deberta_n_heads_forward.1']
    #allocation5 [shape = 's32[1]{0}', space=sflag, size = 0x4, scoped, tag = 'scoped memory for deberta_n_heads_forward.1']
    #allocation6 [shape = 'u8[1024]{0}', space=vmem, size = 0x400, scoped, tag = 'output window, operand 0, single buffered']
    %26 = vsyncpa [#allocation4], 0
    %27 = vsyncpa [#allocation5], 0
    // Predicated region
    $region2: #{deberta_n_heads_forward.1} parent=1 // pred_check
      _
    $region3: #{deberta_n_heads_forward.1} parent=1 // pred_check_branch
      %29 = sbr.rel (0) target = $region5
    $region4: #{deberta_n_heads_forward.1} parent=1 // pred_region
      _
    $region5: #{deberta_n_heads_forward.1} parent=1 // pred_fallthru
      _
    // Predicated region
    $region6: #{deberta_n_heads_forward.1} parent=1 // pred_check
      _
    $region7: #{deberta_n_heads_forward.1} parent=1 // pred_check_branch
      %31 = sbr.rel (0) target = $region9
    $region8: #{deberta_n_heads_forward.1} parent=1 // pred_region
      _
    $region9: #{deberta_n_heads_forward.1} parent=1 // pred_fallthru
      _
    // Predicated region
    $region10: #{deberta_n_heads_forward.1} parent=1 // pred_check
      _
    $region11: #{deberta_n_heads_forward.1} parent=1 // pred_check_branch
      %33 = sbr.rel (0) target = $region13
    $region12: #{deberta_n_heads_forward.1} parent=1 // pred_region
      _
    $region13: #{deberta_n_heads_forward.1} parent=1 // pred_fallthru
      _
    // Predicated region
    $region14: #{deberta_n_heads_forward.1} parent=1 // pred_check
      _
    $region15: #{deberta_n_heads_forward.1} parent=1 // pred_check_branch
      %35 = sbr.rel (0) target = $region17
    $region16: #{deberta_n_heads_forward.1} parent=1 // pred_region
      _
    $region17: #{deberta_n_heads_forward.1} parent=1 // pred_fallthru
      _
    // Predicated region
    $region18: #{deberta_n_heads_forward.1} parent=1 // pred_check
      _
    $region19: #{deberta_n_heads_forward.1} parent=1 // pred_check_branch
      %37 = sbr.rel (0) target = $region21
    $region20: #{deberta_n_heads_forward.1} parent=1 // pred_region
      _
    $region21: #{deberta_n_heads_forward.1} parent=1 // pred_fallthru
      _
    // Predicated region
    $region22: #{deberta_n_heads_forward.1} parent=1 // pred_check
      _
    $region23: #{deberta_n_heads_forward.1} parent=1 // pred_check_branch
      %39 = sbr.rel (0) target = $region25
    $region24: #{deberta_n_heads_forward.1} parent=1 // pred_region
      _
    $region25: #{deberta_n_heads_forward.1} parent=1 // pred_fallthru
      _
    // Predicated region
    $region26: #{deberta_n_heads_forward.1} parent=1 // pred_check
      _
    $region27: #{deberta_n_heads_forward.1} parent=1 // pred_check_branch
      %41 = sbr.rel (0) target = $region29
    $region28: #{deberta_n_heads_forward.1} parent=1 // pred_region
      _
    $region29: #{deberta_n_heads_forward.1} parent=1 // pred_fallthru
      _
    // Predicated region
    $region30: #{deberta_n_heads_forward.1} parent=1 // pred_check
      _
    $region31: #{deberta_n_heads_forward.1} parent=1 // pred_check_branch
      %43 = sbr.rel (0) target = $region33
    $region32: #{deberta_n_heads_forward.1} parent=1 // pred_region
      _
    $region33: #{deberta_n_heads_forward.1} parent=1 // pred_fallthru
      _
    // Predicated region
    $region34: #{deberta_n_heads_forward.1} parent=1 // pred_check
      _
    $region35: #{deberta_n_heads_forward.1} parent=1 // pred_check_branch
      %45 = sbr.rel (0) target = $region37
    $region36: #{deberta_n_heads_forward.1} parent=1 // pred_region
      _
    $region37: #{deberta_n_heads_forward.1} parent=1 // pred_fallthru
      _
    // Predicated region
    $region38: #{deberta_n_heads_forward.1} parent=1 // pred_check
      _
    $region39: #{deberta_n_heads_forward.1} parent=1 // pred_check_branch
      %47 = sbr.rel (0) target = $region41
    $region40: #{deberta_n_heads_forward.1} parent=1 // pred_region
      _
    $region41: #{deberta_n_heads_forward.1} parent=1 // pred_fallthru
      _
    // Predicated region
    $region42: #{deberta_n_heads_forward.1} parent=1 // pred_check
      _
    $region43: #{deberta_n_heads_forward.1} parent=1 // pred_check_branch
      %49 = sbr.rel (0) target = $region45
    $region44: #{deberta_n_heads_forward.1} parent=1 // pred_region
      _
    $region45: #{deberta_n_heads_forward.1} parent=1 // pred_fallthru
      _
    // Predicated region
    $region46: #{deberta_n_heads_forward.1} parent=1 // pred_check
      _
    $region47: #{deberta_n_heads_forward.1} parent=1 // pred_check_branch
      %51 = sbr.rel (0) target = $region49
    $region48: #{deberta_n_heads_forward.1} parent=1 // pred_region
      _
    $region49: #{deberta_n_heads_forward.1} parent=1 // pred_fallthru
      _
    // Predicated region
    $region50: #{deberta_n_heads_forward.1} parent=1 // pred_check
      _
    $region51: #{deberta_n_heads_forward.1} parent=1 // pred_check_branch
      %53 = sbr.rel (0) target = $region53
    $region52: #{deberta_n_heads_forward.1} parent=1 // pred_region
      _
    $region53: #{deberta_n_heads_forward.1} parent=1 // pred_fallthru
      _
    // Predicated region
    $region54: #{deberta_n_heads_forward.1} parent=1 // pred_check
      _
    $region55: #{deberta_n_heads_forward.1} parent=1 // pred_check_branch
      %55 = sbr.rel (0) target = $region57
    $region56: #{deberta_n_heads_forward.1} parent=1 // pred_region
      _
    $region57: #{deberta_n_heads_forward.1} parent=1 // pred_fallthru
      _
    // Predicated region
    $region58: #{deberta_n_heads_forward.1} parent=1 // pred_check
      _
    $region59: #{deberta_n_heads_forward.1} parent=1 // pred_check_branch
      %57 = sbr.rel (0) target = $region61
    $region60: #{deberta_n_heads_forward.1} parent=1 // pred_region
      _
    $region61: #{deberta_n_heads_forward.1} parent=1 // pred_fallthru
      _
    // Predicated region
    $region62: #{deberta_n_heads_forward.1} parent=1 // pred_check
      _
    $region63: #{deberta_n_heads_forward.1} parent=1 // pred_check_branch
      %59 = sbr.rel (0) target = $region65
    $region64: #{deberta_n_heads_forward.1} parent=1 // pred_region
      _
    $region65: #{deberta_n_heads_forward.1} parent=1 // pred_fallthru
      _
    // Predicated region
    $region66: #{deberta_n_heads_forward.1} parent=1 // pred_check
      _
    $region67: #{deberta_n_heads_forward.1} parent=1 // pred_check_branch
      %61 = sbr.rel (0) target = $region69
    $region68: #{deberta_n_heads_forward.1} parent=1 // pred_region
      _
    $region69: #{deberta_n_heads_forward.1} parent=1 // pred_fallthru
      _
    // Predicated region
    $region70: #{deberta_n_heads_forward.1} parent=1 // pred_check
      _
    $region71: #{deberta_n_heads_forward.1} parent=1 // pred_check_branch
      %63 = sbr.rel (0) target = $region73
    $region72: #{deberta_n_heads_forward.1} parent=1 // pred_region
      _
    $region73: #{deberta_n_heads_forward.1} parent=1 // pred_fallthru
      _
    // Predicated region
    $region74: #{deberta_n_heads_forward.1} parent=1 // pred_check
      _
    $region75: #{deberta_n_heads_forward.1} parent=1 // pred_check_branch
      %65 = sbr.rel (0) target = $region77
    $region76: #{deberta_n_heads_forward.1} parent=1 // pred_region
      _
    $region77: #{deberta_n_heads_forward.1} parent=1 // pred_fallthru
      _
    // Predicated region
    $region78: #{deberta_n_heads_forward.1} parent=1 // pred_check
      _
    $region79: #{deberta_n_heads_forward.1} parent=1 // pred_check_branch
      %67 = sbr.rel (0) target = $region81
    $region80: #{deberta_n_heads_forward.1} parent=1 // pred_region
      _
    $region81: #{deberta_n_heads_forward.1} parent=1 // pred_fallthru
      _
    // Predicated region
    $region82: #{deberta_n_heads_forward.1} parent=1 // pred_check
      _
    $region83: #{deberta_n_heads_forward.1} parent=1 // pred_check_branch
      %69 = sbr.rel (0) target = $region85
    $region84: #{deberta_n_heads_forward.1} parent=1 // pred_region
      %s71 = ssub.s32 16, 16
      %72 = vsyncadd [#allocation4], %s71
      %s74 = sshll.u32 [#allocation3], 4
      %s75 = int_to_ptr.vmem [resolvable:$true] %s74
      %77 = dma.hbm_to_vmem [thread:$0]  %s20, 16, %s75, [#allocation4]
    $region85: #{deberta_n_heads_forward.1} parent=1 // pred_fallthru
      _
    // Predicated region
    $region86: #{deberta_n_heads_forward.1} parent=1 // pred_check
      _
    $region87: #{deberta_n_heads_forward.1} parent=1 // pred_check_branch
      %79 = sbr.rel (0) target = $region89
    $region88: #{deberta_n_heads_forward.1} parent=1 // pred_region
      %80 = dma.done [#allocation4], 16
    $region89: #{deberta_n_heads_forward.1} parent=1 // pred_fallthru
      _
    %v81 = vld [vmem:[%s0] sm:$0xff]
    %v82 = vld [vmem:[%s0 + $0x8] sm:$0xff]
    %v83 = vlaneseq
    %v84 = vand.u32 %v83, 127
    %85 = vset.pattern.permute.xlu0 0
    %86 = vperm.xlu0 %85, %v81
    %v87 = vpop.permute.xlu0 %86
    %88 = vset.pattern.permute.xlu0 0
    %89 = vperm.xlu0 %88, %v82
    %v90 = vpop.permute.xlu0 %89
    %vm91 = vcmp.eq.s32.totalorder %v84, %v87
    %vm92 = vcmp.eq.s32.totalorder %v84, %v90
    %v93 = vsel %vm91, 1, 0
    %v94 = vsel %vm92, 1, 0
    %v95 = vcvt.s32.f32 %v93
    %v96 = vcvt.s32.f32 %v94
    %v97 = vld [vmem:[%s2] sm:$0xff]
    %v98 = vld [vmem:[%s2 + $0x8] sm:$0xff]
    %v99 = vld [vmem:[%s2 + $0x10] sm:$0xff]
    %v100 = vld [vmem:[%s2 + $0x18] sm:$0xff]
    %v101 = vld [vmem:[%s2 + $0x20] sm:$0xff]
    %v102 = vld [vmem:[%s2 + $0x28] sm:$0xff]
    %v103 = vld [vmem:[%s2 + $0x30] sm:$0xff]
    %v104 = vld [vmem:[%s2 + $0x38] sm:$0xff]
    %v105 = vld [vmem:[%s2 + $0x40] sm:$0xff]
    %v106 = vld [vmem:[%s2 + $0x48] sm:$0xff]
    %v107 = vld [vmem:[%s2 + $0x50] sm:$0xff]
    %v108 = vld [vmem:[%s2 + $0x58] sm:$0xff]
    %v109 = vld [vmem:[%s2 + $0x60] sm:$0xf]
    %vm110 = vcmask 818176
    %v112 = vsel %vm110, %v95, 0
    %v115 = vsel %vm110, %v96, 0
    %vm117 = vcmask 1043456
    %v119 = vsel %vm117, %v109, 0
    %121 = vmatprep.subr.mxu0 0.0
    %122 = vmatpush1.msra.mxu0 0.0
    %123 = vmatprep.subr.mxu0 0.0
    %124 = vmatpush1.msra.mxu0 0.0
    %125 = vmatprep.subr.mxu0 0.0
    %126 = vmatpush1.msra.mxu0 0.0
    %127 = vmatprep.subr.mxu0 0.0
    %128 = vmatpush1.msra.mxu0 %v119
    %129 = vmatprep.subr.mxu0 0.0
    %130 = vmatpush1.msra.mxu0 %v108
    %131 = vmatprep.subr.mxu0 0.0
    %132 = vmatpush1.msra.mxu0 %v107
    %133 = vmatprep.subr.mxu0 0.0
    %134 = vmatpush1.msra.mxu0 %v106
    %135 = vmatprep.subr.mxu0 0.0
    %136 = vmatpush1.msra.mxu0 %v105
    %137 = vmatprep.subr.mxu0 0.0
    %138 = vmatpush1.msra.mxu0 %v104
    %139 = vmatprep.subr.mxu0 0.0
    %140 = vmatpush1.msra.mxu0 %v103
    %141 = vmatprep.subr.mxu0 0.0
    %142 = vmatpush1.msra.mxu0 %v102
    %143 = vmatprep.subr.mxu0 0.0
    %144 = vmatpush1.msra.mxu0 %v101
    %145 = vmatprep.subr.mxu0 0.0
    %146 = vmatpush1.msra.mxu0 %v100
    %147 = vmatprep.subr.mxu0 0.0
    %148 = vmatpush1.msra.mxu0 %v99
    %149 = vmatprep.subr.mxu0 0.0
    %150 = vmatpush1.msra.mxu0 %v98
    %151 = vmatprep.subr.mxu0 0.0
    %152 = vmatpush1.msra.mxu0 %v97
    %153 = vmatprep.subr.mxu0 0.0
    %154 = vmatpush2.msra.mxu0 0.0
    %155 = vmatprep.subr.mxu0 0.0
    %156 = vmatpush2.msra.mxu0 0.0
    %157 = vmatprep.subr.mxu0 0.0
    %158 = vmatpush2.msra.mxu0 0.0
    %159 = vmatprep.subr.mxu0 0.0
    %160 = vmatpush2.msra.mxu0 0.0
    %161 = vmatprep.subr.mxu0 0.0
    %162 = vmatpush2.msra.mxu0 0.0
    %163 = vmatprep.subr.mxu0 0.0
    %164 = vmatpush2.msra.mxu0 0.0
    %165 = vmatprep.subr.mxu0 0.0
    %166 = vmatpush2.msra.mxu0 0.0
    %167 = vmatprep.subr.mxu0 0.0
    %168 = vmatpush2.msra.mxu0 0.0
    %169 = vmatprep.subr.mxu0 0.0
    %170 = vmatpush2.msra.mxu0 0.0
    %171 = vmatprep.subr.mxu0 0.0
    %172 = vmatpush2.msra.mxu0 0.0
    %173 = vmatprep.subr.mxu0 0.0
    %174 = vmatpush2.msra.mxu0 0.0
    %175 = vmatprep.subr.mxu0 0.0
    %176 = vmatpush2.msra.mxu0 0.0
    %177 = vmatprep.subr.mxu0 0.0
    %178 = vmatpush2.msra.mxu0 0.0
    %179 = vmatprep.subr.mxu0 0.0
    %180 = vmatpush2.msra.mxu0 0.0
    %181 = vmatprep.subr.mxu0 0.0
    %182 = vmatpush2.msra.mxu0 0.0
    %183 = vmatprep.subr.mxu0 0.0
    %184 = vmatpush2.msra.mxu0 0.0
    %185 = vmatprep.mubr.f32.mxu0 0.0
    %186 = vmatmul.mubr.f32.gmra.mxu0 %v112
    %v187 = vpop.f32.mrf.mxu0
    %v188 = vadd.f32 0.0, %v187
    %v189 = vpop.f32.mrf.mxu0
    %190 = vmatprep.mubr.f32.mxu0 0.0
    %191 = vmatmul.mubr.f32.gmra.mxu0 %v115
    %v192 = vpop.f32.mrf.mxu0
    %v193 = vadd.f32 0.0, %v192
    %v194 = vpop.f32.mrf.mxu0
    %195 = vdwg.mxu0
    %v196 = vld [vmem:[%s1] sm:$0x3]
    %v197 = vsub.f32 1.0, %v196
    %v198 = vmul.f32 %v197, -1e+09
    %v199 = vld [vmem:[%s3] sm:$0xff]
    %v200 = vld [vmem:[%s3 + $0x8] sm:$0xff]
    %v201 = vld [vmem:[%s3 + $0x10] sm:$0xff]
    %v202 = vld [vmem:[%s3 + $0x18] sm:$0xff]
    %v203 = vld [vmem:[%s4] sm:$0x1]
    %v205 = vlaneseq
    %v206 = vshrl.u32 %v205, 7
    %v207 = vsub.s32 0, %v206
    %v208 = vrot.slane %v203, %v207
    %vm210 = vcmask 261120
    %v212 = vsel %vm210, %v188, 0
    %v215 = vsel %vm210, %v193, 0
    %217 = vmatprep.subr.mxu0 0.0
    %218 = vmatpush1.msra.mxu0 0.0
    %219 = vmatprep.subr.mxu0 0.0
    %220 = vmatpush1.msra.mxu0 0.0
    %221 = vmatprep.subr.mxu0 0.0
    %222 = vmatpush1.msra.mxu0 0.0
    %223 = vmatprep.subr.mxu0 0.0
    %224 = vmatpush1.msra.mxu0 0.0
    %225 = vmatprep.subr.mxu0 0.0
    %226 = vmatpush1.msra.mxu0 0.0
    %227 = vmatprep.subr.mxu0 0.0
    %228 = vmatpush1.msra.mxu0 0.0
    %229 = vmatprep.subr.mxu0 0.0
    %230 = vmatpush1.msra.mxu0 0.0
    %231 = vmatprep.subr.mxu0 0.0
    %232 = vmatpush1.msra.mxu0 0.0
    %233 = vmatprep.subr.mxu0 0.0
    %234 = vmatpush1.msra.mxu0 0.0
    %235 = vmatprep.subr.mxu0 0.0
    %236 = vmatpush1.msra.mxu0 0.0
    %237 = vmatprep.subr.mxu0 0.0
    %238 = vmatpush1.msra.mxu0 0.0
    %239 = vmatprep.subr.mxu0 0.0
    %240 = vmatpush1.msra.mxu0 0.0
    %241 = vmatprep.subr.mxu0 0.0
    %242 = vmatpush1.msra.mxu0 %v202
    %243 = vmatprep.subr.mxu0 0.0
    %244 = vmatpush1.msra.mxu0 %v201
    %245 = vmatprep.subr.mxu0 0.0
    %246 = vmatpush1.msra.mxu0 %v200
    %247 = vmatprep.subr.mxu0 0.0
    %248 = vmatpush1.msra.mxu0 %v199
    %249 = vmatprep.subr.mxu0 0.0
    %250 = vmatpush2.msra.mxu0 0.0
    %251 = vmatprep.subr.mxu0 0.0
    %252 = vmatpush2.msra.mxu0 0.0
    %253 = vmatprep.subr.mxu0 0.0
    %254 = vmatpush2.msra.mxu0 0.0
    %255 = vmatprep.subr.mxu0 0.0
    %256 = vmatpush2.msra.mxu0 0.0
    %257 = vmatprep.subr.mxu0 0.0
    %258 = vmatpush2.msra.mxu0 0.0
    %259 = vmatprep.subr.mxu0 0.0
    %260 = vmatpush2.msra.mxu0 0.0
    %261 = vmatprep.subr.mxu0 0.0
    %262 = vmatpush2.msra.mxu0 0.0
    %263 = vmatprep.subr.mxu0 0.0
    %264 = vmatpush2.msra.mxu0 0.0
    %265 = vmatprep.subr.mxu0 0.0
    %266 = vmatpush2.msra.mxu0 0.0
    %267 = vmatprep.subr.mxu0 0.0
    %268 = vmatpush2.msra.mxu0 0.0
    %269 = vmatprep.subr.mxu0 0.0
    %270 = vmatpush2.msra.mxu0 0.0
    %271 = vmatprep.subr.mxu0 0.0
    %272 = vmatpush2.msra.mxu0 0.0
    %273 = vmatprep.subr.mxu0 0.0
    %274 = vmatpush2.msra.mxu0 0.0
    %275 = vmatprep.subr.mxu0 0.0
    %276 = vmatpush2.msra.mxu0 0.0
    %277 = vmatprep.subr.mxu0 0.0
    %278 = vmatpush2.msra.mxu0 0.0
    %279 = vmatprep.subr.mxu0 0.0
    %280 = vmatpush2.msra.mxu0 0.0
    %281 = vmatprep.mubr.f32.mxu0 0.0
    %282 = vmatmul.mubr.f32.gmra.mxu0 %v212
    %v283 = vpop.f32.mrf.mxu0
    %v284 = vadd.f32 %v208, %v283
    %v285 = vpop.f32.mrf.mxu0
    %286 = vmatprep.mubr.f32.mxu0 0.0
    %287 = vmatmul.mubr.f32.gmra.mxu0 %v215
    %v288 = vpop.f32.mrf.mxu0
    %v289 = vadd.f32 %v208, %v288
    %v290 = vpop.f32.mrf.mxu0
    %291 = vdwg.mxu0
    %v292 = vld [vmem:[%s5] sm:$0xff]
    %v293 = vld [vmem:[%s5 + $0x8] sm:$0xff]
    %v294 = vld [vmem:[%s5 + $0x10] sm:$0xff]
    %v295 = vld [vmem:[%s5 + $0x18] sm:$0xff]
    %v296 = vld [vmem:[%s6] sm:$0x1]
    %v298 = vlaneseq
    %v299 = vshrl.u32 %v298, 7
    %v300 = vsub.s32 0, %v299
    %v301 = vrot.slane %v296, %v300
    %303 = vmatprep.subr.mxu0 0.0
    %304 = vmatpush1.msra.mxu0 0.0
    %305 = vmatprep.subr.mxu0 0.0
    %306 = vmatpush1.msra.mxu0 0.0
    %307 = vmatprep.subr.mxu0 0.0
    %308 = vmatpush1.msra.mxu0 0.0
    %309 = vmatprep.subr.mxu0 0.0
    %310 = vmatpush1.msra.mxu0 0.0
    %311 = vmatprep.subr.mxu0 0.0
    %312 = vmatpush1.msra.mxu0 0.0
    %313 = vmatprep.subr.mxu0 0.0
    %314 = vmatpush1.msra.mxu0 0.0
    %315 = vmatprep.subr.mxu0 0.0
    %316 = vmatpush1.msra.mxu0 0.0
    %317 = vmatprep.subr.mxu0 0.0
    %318 = vmatpush1.msra.mxu0 0.0
    %319 = vmatprep.subr.mxu0 0.0
    %320 = vmatpush1.msra.mxu0 0.0
    %321 = vmatprep.subr.mxu0 0.0
    %322 = vmatpush1.msra.mxu0 0.0
    %323 = vmatprep.subr.mxu0 0.0
    %324 = vmatpush1.msra.mxu0 0.0
    %325 = vmatprep.subr.mxu0 0.0
    %326 = vmatpush1.msra.mxu0 0.0
    %327 = vmatprep.subr.mxu0 0.0
    %328 = vmatpush1.msra.mxu0 %v295
    %329 = vmatprep.subr.mxu0 0.0
    %330 = vmatpush1.msra.mxu0 %v294
    %331 = vmatprep.subr.mxu0 0.0
    %332 = vmatpush1.msra.mxu0 %v293
    %333 = vmatprep.subr.mxu0 0.0
    %334 = vmatpush1.msra.mxu0 %v292
    %335 = vmatprep.subr.mxu0 0.0
    %336 = vmatpush2.msra.mxu0 0.0
    %337 = vmatprep.subr.mxu0 0.0
    %338 = vmatpush2.msra.mxu0 0.0
    %339 = vmatprep.subr.mxu0 0.0
    %340 = vmatpush2.msra.mxu0 0.0
    %341 = vmatprep.subr.mxu0 0.0
    %342 = vmatpush2.msra.mxu0 0.0
    %343 = vmatprep.subr.mxu0 0.0
    %344 = vmatpush2.msra.mxu0 0.0
    %345 = vmatprep.subr.mxu0 0.0
    %346 = vmatpush2.msra.mxu0 0.0
    %347 = vmatprep.subr.mxu0 0.0
    %348 = vmatpush2.msra.mxu0 0.0
    %349 = vmatprep.subr.mxu0 0.0
    %350 = vmatpush2.msra.mxu0 0.0
    %351 = vmatprep.subr.mxu0 0.0
    %352 = vmatpush2.msra.mxu0 0.0
    %353 = vmatprep.subr.mxu0 0.0
    %354 = vmatpush2.msra.mxu0 0.0
    %355 = vmatprep.subr.mxu0 0.0
    %356 = vmatpush2.msra.mxu0 0.0
    %357 = vmatprep.subr.mxu0 0.0
    %358 = vmatpush2.msra.mxu0 0.0
    %359 = vmatprep.subr.mxu0 0.0
    %360 = vmatpush2.msra.mxu0 0.0
    %361 = vmatprep.subr.mxu0 0.0
    %362 = vmatpush2.msra.mxu0 0.0
    %363 = vmatprep.subr.mxu0 0.0
    %364 = vmatpush2.msra.mxu0 0.0
    %365 = vmatprep.subr.mxu0 0.0
    %366 = vmatpush2.msra.mxu0 0.0
    %367 = vmatprep.mubr.f32.mxu0 0.0
    %368 = vmatmul.mubr.f32.gmra.mxu0 %v212
    %v369 = vpop.f32.mrf.mxu0
    %v370 = vadd.f32 %v301, %v369
    %v371 = vpop.f32.mrf.mxu0
    %372 = vmatprep.mubr.f32.mxu0 0.0
    %373 = vmatmul.mubr.f32.gmra.mxu0 %v215
    %v374 = vpop.f32.mrf.mxu0
    %v375 = vadd.f32 %v301, %v374
    %v376 = vpop.f32.mrf.mxu0
    %377 = vdwg.mxu0
    %v378 = vld [vmem:[%s7] sm:$0xff]
    %v379 = vld [vmem:[%s7 + $0x8] sm:$0xff]
    %v380 = vld [vmem:[%s7 + $0x10] sm:$0xff]
    %v381 = vld [vmem:[%s7 + $0x18] sm:$0xff]
    %v382 = vld [vmem:[%s8] sm:$0x1]
    %v384 = vlaneseq
    %v385 = vshrl.u32 %v384, 7
    %v386 = vsub.s32 0, %v385
    %v387 = vrot.slane %v382, %v386
    %389 = vmatprep.subr.mxu0 0.0
    %390 = vmatpush1.msra.mxu0 0.0
    %391 = vmatprep.subr.mxu0 0.0
    %392 = vmatpush1.msra.mxu0 0.0
    %393 = vmatprep.subr.mxu0 0.0
    %394 = vmatpush1.msra.mxu0 0.0
    %395 = vmatprep.subr.mxu0 0.0
    %396 = vmatpush1.msra.mxu0 0.0
    %397 = vmatprep.subr.mxu0 0.0
    %398 = vmatpush1.msra.mxu0 0.0
    %399 = vmatprep.subr.mxu0 0.0
    %400 = vmatpush1.msra.mxu0 0.0
    %401 = vmatprep.subr.mxu0 0.0
    %402 = vmatpush1.msra.mxu0 0.0
    %403 = vmatprep.subr.mxu0 0.0
    %404 = vmatpush1.msra.mxu0 0.0
    %405 = vmatprep.subr.mxu0 0.0
    %406 = vmatpush1.msra.mxu0 0.0
    %407 = vmatprep.subr.mxu0 0.0
    %408 = vmatpush1.msra.mxu0 0.0
    %409 = vmatprep.subr.mxu0 0.0
    %410 = vmatpush1.msra.mxu0 0.0
    %411 = vmatprep.subr.mxu0 0.0
    %412 = vmatpush1.msra.mxu0 0.0
    %413 = vmatprep.subr.mxu0 0.0
    %414 = vmatpush1.msra.mxu0 %v381
    %415 = vmatprep.subr.mxu0 0.0
    %416 = vmatpush1.msra.mxu0 %v380
    %417 = vmatprep.subr.mxu0 0.0
    %418 = vmatpush1.msra.mxu0 %v379
    %419 = vmatprep.subr.mxu0 0.0
    %420 = vmatpush1.msra.mxu0 %v378
    %421 = vmatprep.subr.mxu0 0.0
    %422 = vmatpush2.msra.mxu0 0.0
    %423 = vmatprep.subr.mxu0 0.0
    %424 = vmatpush2.msra.mxu0 0.0
    %425 = vmatprep.subr.mxu0 0.0
    %426 = vmatpush2.msra.mxu0 0.0
    %427 = vmatprep.subr.mxu0 0.0
    %428 = vmatpush2.msra.mxu0 0.0
    %429 = vmatprep.subr.mxu0 0.0
    %430 = vmatpush2.msra.mxu0 0.0
    %431 = vmatprep.subr.mxu0 0.0
    %432 = vmatpush2.msra.mxu0 0.0
    %433 = vmatprep.subr.mxu0 0.0
    %434 = vmatpush2.msra.mxu0 0.0
    %435 = vmatprep.subr.mxu0 0.0
    %436 = vmatpush2.msra.mxu0 0.0
    %437 = vmatprep.subr.mxu0 0.0
    %438 = vmatpush2.msra.mxu0 0.0
    %439 = vmatprep.subr.mxu0 0.0
    %440 = vmatpush2.msra.mxu0 0.0
    %441 = vmatprep.subr.mxu0 0.0
    %442 = vmatpush2.msra.mxu0 0.0
    %443 = vmatprep.subr.mxu0 0.0
    %444 = vmatpush2.msra.mxu0 0.0
    %445 = vmatprep.subr.mxu0 0.0
    %446 = vmatpush2.msra.mxu0 0.0
    %447 = vmatprep.subr.mxu0 0.0
    %448 = vmatpush2.msra.mxu0 0.0
    %449 = vmatprep.subr.mxu0 0.0
    %450 = vmatpush2.msra.mxu0 0.0
    %451 = vmatprep.subr.mxu0 0.0
    %452 = vmatpush2.msra.mxu0 0.0
    %453 = vmatprep.mubr.f32.mxu0 0.0
    %454 = vmatmul.mubr.f32.gmra.mxu0 %v212
    %v455 = vpop.f32.mrf.mxu0
    %v456 = vadd.f32 %v387, %v455
    %v457 = vpop.f32.mrf.mxu0
    %458 = vmatprep.mubr.f32.mxu0 0.0
    %459 = vmatmul.mubr.f32.gmra.mxu0 %v215
    %v460 = vpop.f32.mrf.mxu0
    %v461 = vadd.f32 %v387, %v460
    %v462 = vpop.f32.mrf.mxu0
    %463 = vdwg.mxu0
    %vm464 = vcmask 130048
    %v466 = vsel %vm464, %v284, 0
    %v469 = vsel %vm464, %v370, 0
    %471 = vmatprep.subr.mxu0 0.0
    %472 = vmatpush1.xpose.msra.mxu0 0.0
    %473 = vmatprep.subr.mxu0 0.0
    %474 = vmatpush1.xpose.msra.mxu0 0.0
    %475 = vmatprep.subr.mxu0 0.0
    %476 = vmatpush1.xpose.msra.mxu0 0.0
    %477 = vmatprep.subr.mxu0 0.0
    %478 = vmatpush1.xpose.msra.mxu0 0.0
    %479 = vmatprep.subr.mxu0 0.0
    %480 = vmatpush1.xpose.msra.mxu0 0.0
    %481 = vmatprep.subr.mxu0 0.0
    %482 = vmatpush1.xpose.msra.mxu0 0.0
    %483 = vmatprep.subr.mxu0 0.0
    %484 = vmatpush1.xpose.msra.mxu0 0.0
    %485 = vmatprep.subr.mxu0 0.0
    %486 = vmatpush1.xpose.msra.mxu0 0.0
    %487 = vmatprep.subr.mxu0 0.0
    %488 = vmatpush1.xpose.msra.mxu0 0.0
    %489 = vmatprep.subr.mxu0 0.0
    %490 = vmatpush1.xpose.msra.mxu0 0.0
    %491 = vmatprep.subr.mxu0 0.0
    %492 = vmatpush1.xpose.msra.mxu0 0.0
    %493 = vmatprep.subr.mxu0 0.0
    %494 = vmatpush1.xpose.msra.mxu0 0.0
    %495 = vmatprep.subr.mxu0 0.0
    %496 = vmatpush1.xpose.msra.mxu0 0.0
    %497 = vmatprep.subr.mxu0 0.0
    %498 = vmatpush1.xpose.msra.mxu0 0.0
    %499 = vmatprep.subr.mxu0 0.0
    %500 = vmatpush1.xpose.msra.mxu0 0.0
    %501 = vmatprep.subr.mxu0 0.0
    %502 = vmatpush1.xpose.msra.mxu0 %v469
    %503 = vmatprep.subr.mxu0 0.0
    %504 = vmatpush2.xpose.msra.mxu0 0.0
    %505 = vmatprep.subr.mxu0 0.0
    %506 = vmatpush2.xpose.msra.mxu0 0.0
    %507 = vmatprep.subr.mxu0 0.0
    %508 = vmatpush2.xpose.msra.mxu0 0.0
    %509 = vmatprep.subr.mxu0 0.0
    %510 = vmatpush2.xpose.msra.mxu0 0.0
    %511 = vmatprep.subr.mxu0 0.0
    %512 = vmatpush2.xpose.msra.mxu0 0.0
    %513 = vmatprep.subr.mxu0 0.0
    %514 = vmatpush2.xpose.msra.mxu0 0.0
    %515 = vmatprep.subr.mxu0 0.0
    %516 = vmatpush2.xpose.msra.mxu0 0.0
    %517 = vmatprep.subr.mxu0 0.0
    %518 = vmatpush2.xpose.msra.mxu0 0.0
    %519 = vmatprep.subr.mxu0 0.0
    %520 = vmatpush2.xpose.msra.mxu0 0.0
    %521 = vmatprep.subr.mxu0 0.0
    %522 = vmatpush2.xpose.msra.mxu0 0.0
    %523 = vmatprep.subr.mxu0 0.0
    %524 = vmatpush2.xpose.msra.mxu0 0.0
    %525 = vmatprep.subr.mxu0 0.0
    %526 = vmatpush2.xpose.msra.mxu0 0.0
    %527 = vmatprep.subr.mxu0 0.0
    %528 = vmatpush2.xpose.msra.mxu0 0.0
    %529 = vmatprep.subr.mxu0 0.0
    %530 = vmatpush2.xpose.msra.mxu0 0.0
    %531 = vmatprep.subr.mxu0 0.0
    %532 = vmatpush2.xpose.msra.mxu0 0.0
    %533 = vmatprep.subr.mxu0 0.0
    %534 = vmatpush2.xpose.msra.mxu0 0.0
    %535 = vmatprep.mubr.f32.mxu0 0.0
    %536 = vmatmul.mubr.f32.gmra.mxu0 %v466
    %v537 = vpop.f32.mrf.mxu0
    %v538 = vadd.f32 0.0, %v537
    %v539 = vpop.f32.mrf.mxu0
    %540 = vdwg.mxu0
    %v541 = vmul.f32 %v538, 0.25
    %v542 = vlaneseq
    %v543 = vshrl.u32 %v542, 7
    %v544 = vsub.s32 0, %v543
    %v545 = vrot.slane %v198, %v544
    %v546 = vadd.f32 %v541, %v545
    %vm547 = vcmask 64512
    %v548 = vsel %vm547, %v546, -inf
    %549 = vmax.xlane.f32.xlu0 %v548
    %v550 = vpop.xlane.xlu0 %549
    %v551 = vsub.f32 %v546, %v550
    %v552 = vmul.f32 %v551, 1.442695
    %v553 = vpow.pop %v552
    %v554 = vsel %vm547, %v553, 0.0
    %555 = vadd.xlane.f32.xlu0 %v554
    %v556 = vpop.xlane.xlu0 %555
    %v557 = vrcp.pop %v556
    %v558 = vmul.f32 %v553, %v557
    %v560 = vsel %vm547, %v558, 0
    %562 = vmatprep.subr.mxu0 0.0
    %563 = vmatpush1.msra.mxu0 0.0
    %564 = vmatprep.subr.mxu0 0.0
    %565 = vmatpush1.msra.mxu0 0.0
    %566 = vmatprep.subr.mxu0 0.0
    %567 = vmatpush1.msra.mxu0 0.0
    %568 = vmatprep.subr.mxu0 0.0
    %569 = vmatpush1.msra.mxu0 0.0
    %570 = vmatprep.subr.mxu0 0.0
    %571 = vmatpush1.msra.mxu0 0.0
    %572 = vmatprep.subr.mxu0 0.0
    %573 = vmatpush1.msra.mxu0 0.0
    %574 = vmatprep.subr.mxu0 0.0
    %575 = vmatpush1.msra.mxu0 0.0
    %576 = vmatprep.subr.mxu0 0.0
    %577 = vmatpush1.msra.mxu0 0.0
    %578 = vmatprep.subr.mxu0 0.0
    %579 = vmatpush1.msra.mxu0 0.0
    %580 = vmatprep.subr.mxu0 0.0
    %581 = vmatpush1.msra.mxu0 0.0
    %582 = vmatprep.subr.mxu0 0.0
    %583 = vmatpush1.msra.mxu0 0.0
    %584 = vmatprep.subr.mxu0 0.0
    %585 = vmatpush1.msra.mxu0 0.0
    %586 = vmatprep.subr.mxu0 0.0
    %587 = vmatpush1.msra.mxu0 0.0
    %588 = vmatprep.subr.mxu0 0.0
    %589 = vmatpush1.msra.mxu0 0.0
    %590 = vmatprep.subr.mxu0 0.0
    %591 = vmatpush1.msra.mxu0 0.0
    %592 = vmatprep.subr.mxu0 0.0
    %593 = vmatpush1.msra.mxu0 %v456
    %594 = vmatprep.subr.mxu0 0.0
    %595 = vmatpush2.msra.mxu0 0.0
    %596 = vmatprep.subr.mxu0 0.0
    %597 = vmatpush2.msra.mxu0 0.0
    %598 = vmatprep.subr.mxu0 0.0
    %599 = vmatpush2.msra.mxu0 0.0
    %600 = vmatprep.subr.mxu0 0.0
    %601 = vmatpush2.msra.mxu0 0.0
    %602 = vmatprep.subr.mxu0 0.0
    %603 = vmatpush2.msra.mxu0 0.0
    %604 = vmatprep.subr.mxu0 0.0
    %605 = vmatpush2.msra.mxu0 0.0
    %606 = vmatprep.subr.mxu0 0.0
    %607 = vmatpush2.msra.mxu0 0.0
    %608 = vmatprep.subr.mxu0 0.0
    %609 = vmatpush2.msra.mxu0 0.0
    %610 = vmatprep.subr.mxu0 0.0
    %611 = vmatpush2.msra.mxu0 0.0
    %612 = vmatprep.subr.mxu0 0.0
    %613 = vmatpush2.msra.mxu0 0.0
    %614 = vmatprep.subr.mxu0 0.0
    %615 = vmatpush2.msra.mxu0 0.0
    %616 = vmatprep.subr.mxu0 0.0
    %617 = vmatpush2.msra.mxu0 0.0
    %618 = vmatprep.subr.mxu0 0.0
    %619 = vmatpush2.msra.mxu0 0.0
    %620 = vmatprep.subr.mxu0 0.0
    %621 = vmatpush2.msra.mxu0 0.0
    %622 = vmatprep.subr.mxu0 0.0
    %623 = vmatpush2.msra.mxu0 0.0
    %624 = vmatprep.subr.mxu0 0.0
    %625 = vmatpush2.msra.mxu0 0.0
    %626 = vmatprep.mubr.f32.mxu0 0.0
    %627 = vmatmul.mubr.f32.gmra.mxu0 %v560
    %v628 = vpop.f32.mrf.mxu0
    %v629 = vadd.f32 0.0, %v628
    %v630 = vpop.f32.mrf.mxu0
    %631 = vdwg.mxu0
    %632 = vst.msk [vmem:[#allocation2] sm:$0xff] %vm464, %v629
    %633 = vrot.lane.b32.xlu0 %v284, 112
    %v634 = vpop.permute.xlu0 %633
    %635 = vrot.lane.b32.xlu0 %v370, 112
    %v636 = vpop.permute.xlu0 %635
    %v637 = vsel %vm464, %v634, 0
    %v639 = vsel %vm464, %v636, 0
    %641 = vmatprep.subr.mxu0 0.0
    %642 = vmatpush1.xpose.msra.mxu0 0.0
    %643 = vmatprep.subr.mxu0 0.0
    %644 = vmatpush1.xpose.msra.mxu0 0.0
    %645 = vmatprep.subr.mxu0 0.0
    %646 = vmatpush1.xpose.msra.mxu0 0.0
    %647 = vmatprep.subr.mxu0 0.0
    %648 = vmatpush1.xpose.msra.mxu0 0.0
    %649 = vmatprep.subr.mxu0 0.0
    %650 = vmatpush1.xpose.msra.mxu0 0.0
    %651 = vmatprep.subr.mxu0 0.0
    %652 = vmatpush1.xpose.msra.mxu0 0.0
    %653 = vmatprep.subr.mxu0 0.0
    %654 = vmatpush1.xpose.msra.mxu0 0.0
    %655 = vmatprep.subr.mxu0 0.0
    %656 = vmatpush1.xpose.msra.mxu0 0.0
    %657 = vmatprep.subr.mxu0 0.0
    %658 = vmatpush1.xpose.msra.mxu0 0.0
    %659 = vmatprep.subr.mxu0 0.0
    %660 = vmatpush1.xpose.msra.mxu0 0.0
    %661 = vmatprep.subr.mxu0 0.0
    %662 = vmatpush1.xpose.msra.mxu0 0.0
    %663 = vmatprep.subr.mxu0 0.0
    %664 = vmatpush1.xpose.msra.mxu0 0.0
    %665 = vmatprep.subr.mxu0 0.0
    %666 = vmatpush1.xpose.msra.mxu0 0.0
    %667 = vmatprep.subr.mxu0 0.0
    %668 = vmatpush1.xpose.msra.mxu0 0.0
    %669 = vmatprep.subr.mxu0 0.0
    %670 = vmatpush1.xpose.msra.mxu0 0.0
    %671 = vmatprep.subr.mxu0 0.0
    %672 = vmatpush1.xpose.msra.mxu0 %v639
    %673 = vmatprep.subr.mxu0 0.0
    %674 = vmatpush2.xpose.msra.mxu0 0.0
    %675 = vmatprep.subr.mxu0 0.0
    %676 = vmatpush2.xpose.msra.mxu0 0.0
    %677 = vmatprep.subr.mxu0 0.0
    %678 = vmatpush2.xpose.msra.mxu0 0.0
    %679 = vmatprep.subr.mxu0 0.0
    %680 = vmatpush2.xpose.msra.mxu0 0.0
    %681 = vmatprep.subr.mxu0 0.0
    %682 = vmatpush2.xpose.msra.mxu0 0.0
    %683 = vmatprep.subr.mxu0 0.0
    %684 = vmatpush2.xpose.msra.mxu0 0.0
    %685 = vmatprep.subr.mxu0 0.0
    %686 = vmatpush2.xpose.msra.mxu0 0.0
    %687 = vmatprep.subr.mxu0 0.0
    %688 = vmatpush2.xpose.msra.mxu0 0.0
    %689 = vmatprep.subr.mxu0 0.0
    %690 = vmatpush2.xpose.msra.mxu0 0.0
    %691 = vmatprep.subr.mxu0 0.0
    %692 = vmatpush2.xpose.msra.mxu0 0.0
    %693 = vmatprep.subr.mxu0 0.0
    %694 = vmatpush2.xpose.msra.mxu0 0.0
    %695 = vmatprep.subr.mxu0 0.0
    %696 = vmatpush2.xpose.msra.mxu0 0.0
    %697 = vmatprep.subr.mxu0 0.0
    %698 = vmatpush2.xpose.msra.mxu0 0.0
    %699 = vmatprep.subr.mxu0 0.0
    %700 = vmatpush2.xpose.msra.mxu0 0.0
    %701 = vmatprep.subr.mxu0 0.0
    %702 = vmatpush2.xpose.msra.mxu0 0.0
    %703 = vmatprep.subr.mxu0 0.0
    %704 = vmatpush2.xpose.msra.mxu0 0.0
    %705 = vmatprep.mubr.f32.mxu0 0.0
    %706 = vmatmul.mubr.f32.gmra.mxu0 %v637
    %v707 = vpop.f32.mrf.mxu0
    %v708 = vadd.f32 0.0, %v707
    %v709 = vpop.f32.mrf.mxu0
    %710 = vdwg.mxu0
    %v711 = vmul.f32 %v708, 0.25
    %v712 = vadd.f32 %v711, %v545
    %v713 = vsel %vm547, %v712, -inf
    %714 = vmax.xlane.f32.xlu0 %v713
    %v715 = vpop.xlane.xlu0 %714
    %v716 = vsub.f32 %v712, %v715
    %v717 = vmul.f32 %v716, 1.442695
    %v718 = vpow.pop %v717
    %v719 = vsel %vm547, %v718, 0.0
    %720 = vadd.xlane.f32.xlu0 %v719
    %v721 = vpop.xlane.xlu0 %720
    %v722 = vrcp.pop %v721
    %v723 = vmul.f32 %v718, %v722
    %725 = vrot.lane.b32.xlu0 %v456, 112
    %v726 = vpop.permute.xlu0 %725
    %v729 = vsel %vm547, %v723, 0
    %731 = vmatprep.subr.mxu0 0.0
    %732 = vmatpush1.msra.mxu0 0.0
    %733 = vmatprep.subr.mxu0 0.0
    %734 = vmatpush1.msra.mxu0 0.0
    %735 = vmatprep.subr.mxu0 0.0
    %736 = vmatpush1.msra.mxu0 0.0
    %737 = vmatprep.subr.mxu0 0.0
    %738 = vmatpush1.msra.mxu0 0.0
    %739 = vmatprep.subr.mxu0 0.0
    %740 = vmatpush1.msra.mxu0 0.0
    %741 = vmatprep.subr.mxu0 0.0
    %742 = vmatpush1.msra.mxu0 0.0
    %743 = vmatprep.subr.mxu0 0.0
    %744 = vmatpush1.msra.mxu0 0.0
    %745 = vmatprep.subr.mxu0 0.0
    %746 = vmatpush1.msra.mxu0 0.0
    %747 = vmatprep.subr.mxu0 0.0
    %748 = vmatpush1.msra.mxu0 0.0
    %749 = vmatprep.subr.mxu0 0.0
    %750 = vmatpush1.msra.mxu0 0.0
    %751 = vmatprep.subr.mxu0 0.0
    %752 = vmatpush1.msra.mxu0 0.0
    %753 = vmatprep.subr.mxu0 0.0
    %754 = vmatpush1.msra.mxu0 0.0
    %755 = vmatprep.subr.mxu0 0.0
    %756 = vmatpush1.msra.mxu0 0.0
    %757 = vmatprep.subr.mxu0 0.0
    %758 = vmatpush1.msra.mxu0 0.0
    %759 = vmatprep.subr.mxu0 0.0
    %760 = vmatpush1.msra.mxu0 0.0
    %761 = vmatprep.subr.mxu0 0.0
    %762 = vmatpush1.msra.mxu0 %v726
    %763 = vmatprep.subr.mxu0 0.0
    %764 = vmatpush2.msra.mxu0 0.0
    %765 = vmatprep.subr.mxu0 0.0
    %766 = vmatpush2.msra.mxu0 0.0
    %767 = vmatprep.subr.mxu0 0.0
    %768 = vmatpush2.msra.mxu0 0.0
    %769 = vmatprep.subr.mxu0 0.0
    %770 = vmatpush2.msra.mxu0 0.0
    %771 = vmatprep.subr.mxu0 0.0
    %772 = vmatpush2.msra.mxu0 0.0
    %773 = vmatprep.subr.mxu0 0.0
    %774 = vmatpush2.msra.mxu0 0.0
    %775 = vmatprep.subr.mxu0 0.0
    %776 = vmatpush2.msra.mxu0 0.0
    %777 = vmatprep.subr.mxu0 0.0
    %778 = vmatpush2.msra.mxu0 0.0
    %779 = vmatprep.subr.mxu0 0.0
    %780 = vmatpush2.msra.mxu0 0.0
    %781 = vmatprep.subr.mxu0 0.0
    %782 = vmatpush2.msra.mxu0 0.0
    %783 = vmatprep.subr.mxu0 0.0
    %784 = vmatpush2.msra.mxu0 0.0
    %785 = vmatprep.subr.mxu0 0.0
    %786 = vmatpush2.msra.mxu0 0.0
    %787 = vmatprep.subr.mxu0 0.0
    %788 = vmatpush2.msra.mxu0 0.0
    %789 = vmatprep.subr.mxu0 0.0
    %790 = vmatpush2.msra.mxu0 0.0
    %791 = vmatprep.subr.mxu0 0.0
    %792 = vmatpush2.msra.mxu0 0.0
    %793 = vmatprep.subr.mxu0 0.0
    %794 = vmatpush2.msra.mxu0 0.0
    %795 = vmatprep.mubr.f32.mxu0 0.0
    %796 = vmatmul.mubr.f32.gmra.mxu0 %v729
    %v797 = vpop.f32.mrf.mxu0
    %v798 = vadd.f32 0.0, %v797
    %v799 = vpop.f32.mrf.mxu0
    %800 = vdwg.mxu0
    %802 = vrot.lane.b32.xlu0 %v798, 16
    %v803 = vpop.permute.xlu0 %802
    %vm805 = vcmask 261248
    %806 = vst.msk [vmem:[#allocation2] sm:$0xff] %vm805, %v803
    %v808 = vsel %vm464, %v289, 0
    %v811 = vsel %vm464, %v375, 0
    %813 = vmatprep.subr.mxu0 0.0
    %814 = vmatpush1.xpose.msra.mxu0 0.0
    %815 = vmatprep.subr.mxu0 0.0
    %816 = vmatpush1.xpose.msra.mxu0 0.0
    %817 = vmatprep.subr.mxu0 0.0
    %818 = vmatpush1.xpose.msra.mxu0 0.0
    %819 = vmatprep.subr.mxu0 0.0
    %820 = vmatpush1.xpose.msra.mxu0 0.0
    %821 = vmatprep.subr.mxu0 0.0
    %822 = vmatpush1.xpose.msra.mxu0 0.0
    %823 = vmatprep.subr.mxu0 0.0
    %824 = vmatpush1.xpose.msra.mxu0 0.0
    %825 = vmatprep.subr.mxu0 0.0
    %826 = vmatpush1.xpose.msra.mxu0 0.0
    %827 = vmatprep.subr.mxu0 0.0
    %828 = vmatpush1.xpose.msra.mxu0 0.0
    %829 = vmatprep.subr.mxu0 0.0
    %830 = vmatpush1.xpose.msra.mxu0 0.0
    %831 = vmatprep.subr.mxu0 0.0
    %832 = vmatpush1.xpose.msra.mxu0 0.0
    %833 = vmatprep.subr.mxu0 0.0
    %834 = vmatpush1.xpose.msra.mxu0 0.0
    %835 = vmatprep.subr.mxu0 0.0
    %836 = vmatpush1.xpose.msra.mxu0 0.0
    %837 = vmatprep.subr.mxu0 0.0
    %838 = vmatpush1.xpose.msra.mxu0 0.0
    %839 = vmatprep.subr.mxu0 0.0
    %840 = vmatpush1.xpose.msra.mxu0 0.0
    %841 = vmatprep.subr.mxu0 0.0
    %842 = vmatpush1.xpose.msra.mxu0 0.0
    %843 = vmatprep.subr.mxu0 0.0
    %844 = vmatpush1.xpose.msra.mxu0 %v811
    %845 = vmatprep.subr.mxu0 0.0
    %846 = vmatpush2.xpose.msra.mxu0 0.0
    %847 = vmatprep.subr.mxu0 0.0
    %848 = vmatpush2.xpose.msra.mxu0 0.0
    %849 = vmatprep.subr.mxu0 0.0
    %850 = vmatpush2.xpose.msra.mxu0 0.0
    %851 = vmatprep.subr.mxu0 0.0
    %852 = vmatpush2.xpose.msra.mxu0 0.0
    %853 = vmatprep.subr.mxu0 0.0
    %854 = vmatpush2.xpose.msra.mxu0 0.0
    %855 = vmatprep.subr.mxu0 0.0
    %856 = vmatpush2.xpose.msra.mxu0 0.0
    %857 = vmatprep.subr.mxu0 0.0
    %858 = vmatpush2.xpose.msra.mxu0 0.0
    %859 = vmatprep.subr.mxu0 0.0
    %860 = vmatpush2.xpose.msra.mxu0 0.0
    %861 = vmatprep.subr.mxu0 0.0
    %862 = vmatpush2.xpose.msra.mxu0 0.0
    %863 = vmatprep.subr.mxu0 0.0
    %864 = vmatpush2.xpose.msra.mxu0 0.0
    %865 = vmatprep.subr.mxu0 0.0
    %866 = vmatpush2.xpose.msra.mxu0 0.0
    %867 = vmatprep.subr.mxu0 0.0
    %868 = vmatpush2.xpose.msra.mxu0 0.0
    %869 = vmatprep.subr.mxu0 0.0
    %870 = vmatpush2.xpose.msra.mxu0 0.0
    %871 = vmatprep.subr.mxu0 0.0
    %872 = vmatpush2.xpose.msra.mxu0 0.0
    %873 = vmatprep.subr.mxu0 0.0
    %874 = vmatpush2.xpose.msra.mxu0 0.0
    %875 = vmatprep.subr.mxu0 0.0
    %876 = vmatpush2.xpose.msra.mxu0 0.0
    %877 = vmatprep.mubr.f32.mxu0 0.0
    %878 = vmatmul.mubr.f32.gmra.mxu0 %v808
    %v879 = vpop.f32.mrf.mxu0
    %v880 = vadd.f32 0.0, %v879
    %v881 = vpop.f32.mrf.mxu0
    %882 = vdwg.mxu0
    %v883 = vmul.f32 %v880, 0.25
    %v884 = vlaneseq
    %v885 = vshrl.u32 %v884, 7
    %v886 = vsub.s32 1, %v885
    %v887 = vrot.slane %v198, %v886
    %v888 = vadd.f32 %v883, %v887
    %v889 = vsel %vm547, %v888, -inf
    %890 = vmax.xlane.f32.xlu0 %v889
    %v891 = vpop.xlane.xlu0 %890
    %v892 = vsub.f32 %v888, %v891
    %v893 = vmul.f32 %v892, 1.442695
    %v894 = vpow.pop %v893
    %v895 = vsel %vm547, %v894, 0.0
    %896 = vadd.xlane.f32.xlu0 %v895
    %v897 = vpop.xlane.xlu0 %896
    %v898 = vrcp.pop %v897
    %v899 = vmul.f32 %v894, %v898
    %v901 = vsel %vm547, %v899, 0
    %903 = vmatprep.subr.mxu0 0.0
    %904 = vmatpush1.msra.mxu0 0.0
    %905 = vmatprep.subr.mxu0 0.0
    %906 = vmatpush1.msra.mxu0 0.0
    %907 = vmatprep.subr.mxu0 0.0
    %908 = vmatpush1.msra.mxu0 0.0
    %909 = vmatprep.subr.mxu0 0.0
    %910 = vmatpush1.msra.mxu0 0.0
    %911 = vmatprep.subr.mxu0 0.0
    %912 = vmatpush1.msra.mxu0 0.0
    %913 = vmatprep.subr.mxu0 0.0
    %914 = vmatpush1.msra.mxu0 0.0
    %915 = vmatprep.subr.mxu0 0.0
    %916 = vmatpush1.msra.mxu0 0.0
    %917 = vmatprep.subr.mxu0 0.0
    %918 = vmatpush1.msra.mxu0 0.0
    %919 = vmatprep.subr.mxu0 0.0
    %920 = vmatpush1.msra.mxu0 0.0
    %921 = vmatprep.subr.mxu0 0.0
    %922 = vmatpush1.msra.mxu0 0.0
    %923 = vmatprep.subr.mxu0 0.0
    %924 = vmatpush1.msra.mxu0 0.0
    %925 = vmatprep.subr.mxu0 0.0
    %926 = vmatpush1.msra.mxu0 0.0
    %927 = vmatprep.subr.mxu0 0.0
    %928 = vmatpush1.msra.mxu0 0.0
    %929 = vmatprep.subr.mxu0 0.0
    %930 = vmatpush1.msra.mxu0 0.0
    %931 = vmatprep.subr.mxu0 0.0
    %932 = vmatpush1.msra.mxu0 0.0
    %933 = vmatprep.subr.mxu0 0.0
    %934 = vmatpush1.msra.mxu0 %v461
    %935 = vmatprep.subr.mxu0 0.0
    %936 = vmatpush2.msra.mxu0 0.0
    %937 = vmatprep.subr.mxu0 0.0
    %938 = vmatpush2.msra.mxu0 0.0
    %939 = vmatprep.subr.mxu0 0.0
    %940 = vmatpush2.msra.mxu0 0.0
    %941 = vmatprep.subr.mxu0 0.0
    %942 = vmatpush2.msra.mxu0 0.0
    %943 = vmatprep.subr.mxu0 0.0
    %944 = vmatpush2.msra.mxu0 0.0
    %945 = vmatprep.subr.mxu0 0.0
    %946 = vmatpush2.msra.mxu0 0.0
    %947 = vmatprep.subr.mxu0 0.0
    %948 = vmatpush2.msra.mxu0 0.0
    %949 = vmatprep.subr.mxu0 0.0
    %950 = vmatpush2.msra.mxu0 0.0
    %951 = vmatprep.subr.mxu0 0.0
    %952 = vmatpush2.msra.mxu0 0.0
    %953 = vmatprep.subr.mxu0 0.0
    %954 = vmatpush2.msra.mxu0 0.0
    %955 = vmatprep.subr.mxu0 0.0
    %956 = vmatpush2.msra.mxu0 0.0
    %957 = vmatprep.subr.mxu0 0.0
    %958 = vmatpush2.msra.mxu0 0.0
    %959 = vmatprep.subr.mxu0 0.0
    %960 = vmatpush2.msra.mxu0 0.0
    %961 = vmatprep.subr.mxu0 0.0
    %962 = vmatpush2.msra.mxu0 0.0
    %963 = vmatprep.subr.mxu0 0.0
    %964 = vmatpush2.msra.mxu0 0.0
    %965 = vmatprep.subr.mxu0 0.0
    %966 = vmatpush2.msra.mxu0 0.0
    %967 = vmatprep.mubr.f32.mxu0 0.0
    %968 = vmatmul.mubr.f32.gmra.mxu0 %v901
    %v969 = vpop.f32.mrf.mxu0
    %v970 = vadd.f32 0.0, %v969
    %v971 = vpop.f32.mrf.mxu0
    %972 = vdwg.mxu0
    %973 = vst.msk [vmem:[#allocation2 + $0x8] sm:$0xff] %vm464, %v970
    %974 = vrot.lane.b32.xlu0 %v289, 112
    %v975 = vpop.permute.xlu0 %974
    %976 = vrot.lane.b32.xlu0 %v375, 112
    %v977 = vpop.permute.xlu0 %976
    %v978 = vsel %vm464, %v975, 0
    %v980 = vsel %vm464, %v977, 0
    %982 = vmatprep.subr.mxu0 0.0
    %983 = vmatpush1.xpose.msra.mxu0 0.0
    %984 = vmatprep.subr.mxu0 0.0
    %985 = vmatpush1.xpose.msra.mxu0 0.0
    %986 = vmatprep.subr.mxu0 0.0
    %987 = vmatpush1.xpose.msra.mxu0 0.0
    %988 = vmatprep.subr.mxu0 0.0
    %989 = vmatpush1.xpose.msra.mxu0 0.0
    %990 = vmatprep.subr.mxu0 0.0
    %991 = vmatpush1.xpose.msra.mxu0 0.0
    %992 = vmatprep.subr.mxu0 0.0
    %993 = vmatpush1.xpose.msra.mxu0 0.0
    %994 = vmatprep.subr.mxu0 0.0
    %995 = vmatpush1.xpose.msra.mxu0 0.0
    %996 = vmatprep.subr.mxu0 0.0
    %997 = vmatpush1.xpose.msra.mxu0 0.0
    %998 = vmatprep.subr.mxu0 0.0
    %999 = vmatpush1.xpose.msra.mxu0 0.0
    %1000 = vmatprep.subr.mxu0 0.0
    %1001 = vmatpush1.xpose.msra.mxu0 0.0
    %1002 = vmatprep.subr.mxu0 0.0
    %1003 = vmatpush1.xpose.msra.mxu0 0.0
    %1004 = vmatprep.subr.mxu0 0.0
    %1005 = vmatpush1.xpose.msra.mxu0 0.0
    %1006 = vmatprep.subr.mxu0 0.0
    %1007 = vmatpush1.xpose.msra.mxu0 0.0
    %1008 = vmatprep.subr.mxu0 0.0
    %1009 = vmatpush1.xpose.msra.mxu0 0.0
    %1010 = vmatprep.subr.mxu0 0.0
    %1011 = vmatpush1.xpose.msra.mxu0 0.0
    %1012 = vmatprep.subr.mxu0 0.0
    %1013 = vmatpush1.xpose.msra.mxu0 %v980
    %1014 = vmatprep.subr.mxu0 0.0
    %1015 = vmatpush2.xpose.msra.mxu0 0.0
    %1016 = vmatprep.subr.mxu0 0.0
    %1017 = vmatpush2.xpose.msra.mxu0 0.0
    %1018 = vmatprep.subr.mxu0 0.0
    %1019 = vmatpush2.xpose.msra.mxu0 0.0
    %1020 = vmatprep.subr.mxu0 0.0
    %1021 = vmatpush2.xpose.msra.mxu0 0.0
    %1022 = vmatprep.subr.mxu0 0.0
    %1023 = vmatpush2.xpose.msra.mxu0 0.0
    %1024 = vmatprep.subr.mxu0 0.0
    %1025 = vmatpush2.xpose.msra.mxu0 0.0
    %1026 = vmatprep.subr.mxu0 0.0
    %1027 = vmatpush2.xpose.msra.mxu0 0.0
    %1028 = vmatprep.subr.mxu0 0.0
    %1029 = vmatpush2.xpose.msra.mxu0 0.0
    %1030 = vmatprep.subr.mxu0 0.0
    %1031 = vmatpush2.xpose.msra.mxu0 0.0
    %1032 = vmatprep.subr.mxu0 0.0
    %1033 = vmatpush2.xpose.msra.mxu0 0.0
    %1034 = vmatprep.subr.mxu0 0.0
    %1035 = vmatpush2.xpose.msra.mxu0 0.0
    %1036 = vmatprep.subr.mxu0 0.0
    %1037 = vmatpush2.xpose.msra.mxu0 0.0
    %1038 = vmatprep.subr.mxu0 0.0
    %1039 = vmatpush2.xpose.msra.mxu0 0.0
    %1040 = vmatprep.subr.mxu0 0.0
    %1041 = vmatpush2.xpose.msra.mxu0 0.0
    %1042 = vmatprep.subr.mxu0 0.0
    %1043 = vmatpush2.xpose.msra.mxu0 0.0
    %1044 = vmatprep.subr.mxu0 0.0
    %1045 = vmatpush2.xpose.msra.mxu0 0.0
    %1046 = vmatprep.mubr.f32.mxu0 0.0
    %1047 = vmatmul.mubr.f32.gmra.mxu0 %v978
    %v1048 = vpop.f32.mrf.mxu0
    %v1049 = vadd.f32 0.0, %v1048
    %v1050 = vpop.f32.mrf.mxu0
    %1051 = vdwg.mxu0
    %v1052 = vmul.f32 %v1049, 0.25
    %v1053 = vadd.f32 %v1052, %v887
    %v1054 = vsel %vm547, %v1053, -inf
    %1055 = vmax.xlane.f32.xlu0 %v1054
    %v1056 = vpop.xlane.xlu0 %1055
    %v1057 = vsub.f32 %v1053, %v1056
    %v1058 = vmul.f32 %v1057, 1.442695
    %v1059 = vpow.pop %v1058
    %v1060 = vsel %vm547, %v1059, 0.0
    %1061 = vadd.xlane.f32.xlu0 %v1060
    %v1062 = vpop.xlane.xlu0 %1061
    %v1063 = vrcp.pop %v1062
    %v1064 = vmul.f32 %v1059, %v1063
    %1066 = vrot.lane.b32.xlu0 %v461, 112
    %v1067 = vpop.permute.xlu0 %1066
    %v1070 = vsel %vm547, %v1064, 0
    %1072 = vmatprep.subr.mxu0 0.0
    %1073 = vmatpush1.msra.mxu0 0.0
    %1074 = vmatprep.subr.mxu0 0.0
    %1075 = vmatpush1.msra.mxu0 0.0
    %1076 = vmatprep.subr.mxu0 0.0
    %1077 = vmatpush1.msra.mxu0 0.0
    %1078 = vmatprep.subr.mxu0 0.0
    %1079 = vmatpush1.msra.mxu0 0.0
    %1080 = vmatprep.subr.mxu0 0.0
    %1081 = vmatpush1.msra.mxu0 0.0
    %1082 = vmatprep.subr.mxu0 0.0
    %1083 = vmatpush1.msra.mxu0 0.0
    %1084 = vmatprep.subr.mxu0 0.0
    %1085 = vmatpush1.msra.mxu0 0.0
    %1086 = vmatprep.subr.mxu0 0.0
    %1087 = vmatpush1.msra.mxu0 0.0
    %1088 = vmatprep.subr.mxu0 0.0
    %1089 = vmatpush1.msra.mxu0 0.0
    %1090 = vmatprep.subr.mxu0 0.0
    %1091 = vmatpush1.msra.mxu0 0.0
    %1092 = vmatprep.subr.mxu0 0.0
    %1093 = vmatpush1.msra.mxu0 0.0
    %1094 = vmatprep.subr.mxu0 0.0
    %1095 = vmatpush1.msra.mxu0 0.0
    %1096 = vmatprep.subr.mxu0 0.0
    %1097 = vmatpush1.msra.mxu0 0.0
    %1098 = vmatprep.subr.mxu0 0.0
    %1099 = vmatpush1.msra.mxu0 0.0
    %1100 = vmatprep.subr.mxu0 0.0
    %1101 = vmatpush1.msra.mxu0 0.0
    %1102 = vmatprep.subr.mxu0 0.0
    %1103 = vmatpush1.msra.mxu0 %v1067
    %1104 = vmatprep.subr.mxu0 0.0
    %1105 = vmatpush2.msra.mxu0 0.0
    %1106 = vmatprep.subr.mxu0 0.0
    %1107 = vmatpush2.msra.mxu0 0.0
    %1108 = vmatprep.subr.mxu0 0.0
    %1109 = vmatpush2.msra.mxu0 0.0
    %1110 = vmatprep.subr.mxu0 0.0
    %1111 = vmatpush2.msra.mxu0 0.0
    %1112 = vmatprep.subr.mxu0 0.0
    %1113 = vmatpush2.msra.mxu0 0.0
    %1114 = vmatprep.subr.mxu0 0.0
    %1115 = vmatpush2.msra.mxu0 0.0
    %1116 = vmatprep.subr.mxu0 0.0
    %1117 = vmatpush2.msra.mxu0 0.0
    %1118 = vmatprep.subr.mxu0 0.0
    %1119 = vmatpush2.msra.mxu0 0.0
    %1120 = vmatprep.subr.mxu0 0.0
    %1121 = vmatpush2.msra.mxu0 0.0
    %1122 = vmatprep.subr.mxu0 0.0
    %1123 = vmatpush2.msra.mxu0 0.0
    %1124 = vmatprep.subr.mxu0 0.0
    %1125 = vmatpush2.msra.mxu0 0.0
    %1126 = vmatprep.subr.mxu0 0.0
    %1127 = vmatpush2.msra.mxu0 0.0
    %1128 = vmatprep.subr.mxu0 0.0
    %1129 = vmatpush2.msra.mxu0 0.0
    %1130 = vmatprep.subr.mxu0 0.0
    %1131 = vmatpush2.msra.mxu0 0.0
    %1132 = vmatprep.subr.mxu0 0.0
    %1133 = vmatpush2.msra.mxu0 0.0
    %1134 = vmatprep.subr.mxu0 0.0
    %1135 = vmatpush2.msra.mxu0 0.0
    %1136 = vmatprep.mubr.f32.mxu0 0.0
    %1137 = vmatmul.mubr.f32.gmra.mxu0 %v1070
    %v1138 = vpop.f32.mrf.mxu0
    %v1139 = vadd.f32 0.0, %v1138
    %v1140 = vpop.f32.mrf.mxu0
    %1141 = vdwg.mxu0
    %1143 = vrot.lane.b32.xlu0 %v1139, 16
    %v1144 = vpop.permute.xlu0 %1143
    %1146 = vst.msk [vmem:[#allocation2 + $0x8] sm:$0xff] %vm805, %v1144
    %v1147 = vld [vmem:[#allocation2] sm:$0xff]
    %v1148 = vld [vmem:[#allocation2 + $0x8] sm:$0xff]
    %v1149 = vld [vmem:[%s9] sm:$0xff]
    %v1150 = vld [vmem:[%s9 + $0x8] sm:$0xff]
    %v1151 = vld [vmem:[%s9 + $0x10] sm:$0xff]
    %v1152 = vld [vmem:[%s9 + $0x18] sm:$0xff]
    %v1153 = vld [vmem:[%s10] sm:$0x1]
    %v1155 = vlaneseq
    %v1156 = vshrl.u32 %v1155, 7
    %v1157 = vsub.s32 0, %v1156
    %v1158 = vrot.slane %v1153, %v1157
    %v1161 = vsel %vm210, %v1147, 0
    %v1164 = vsel %vm210, %v1148, 0
    %1166 = vmatprep.subr.mxu0 0.0
    %1167 = vmatpush1.msra.mxu0 0.0
    %1168 = vmatprep.subr.mxu0 0.0
    %1169 = vmatpush1.msra.mxu0 0.0
    %1170 = vmatprep.subr.mxu0 0.0
    %1171 = vmatpush1.msra.mxu0 0.0
    %1172 = vmatprep.subr.mxu0 0.0
    %1173 = vmatpush1.msra.mxu0 0.0
    %1174 = vmatprep.subr.mxu0 0.0
    %1175 = vmatpush1.msra.mxu0 0.0
    %1176 = vmatprep.subr.mxu0 0.0
    %1177 = vmatpush1.msra.mxu0 0.0
    %1178 = vmatprep.subr.mxu0 0.0
    %1179 = vmatpush1.msra.mxu0 0.0
    %1180 = vmatprep.subr.mxu0 0.0
    %1181 = vmatpush1.msra.mxu0 0.0
    %1182 = vmatprep.subr.mxu0 0.0
    %1183 = vmatpush1.msra.mxu0 0.0
    %1184 = vmatprep.subr.mxu0 0.0
    %1185 = vmatpush1.msra.mxu0 0.0
    %1186 = vmatprep.subr.mxu0 0.0
    %1187 = vmatpush1.msra.mxu0 0.0
    %1188 = vmatprep.subr.mxu0 0.0
    %1189 = vmatpush1.msra.mxu0 0.0
    %1190 = vmatprep.subr.mxu0 0.0
    %1191 = vmatpush1.msra.mxu0 %v1152
    %1192 = vmatprep.subr.mxu0 0.0
    %1193 = vmatpush1.msra.mxu0 %v1151
    %1194 = vmatprep.subr.mxu0 0.0
    %1195 = vmatpush1.msra.mxu0 %v1150
    %1196 = vmatprep.subr.mxu0 0.0
    %1197 = vmatpush1.msra.mxu0 %v1149
    %1198 = vmatprep.subr.mxu0 0.0
    %1199 = vmatpush2.msra.mxu0 0.0
    %1200 = vmatprep.subr.mxu0 0.0
    %1201 = vmatpush2.msra.mxu0 0.0
    %1202 = vmatprep.subr.mxu0 0.0
    %1203 = vmatpush2.msra.mxu0 0.0
    %1204 = vmatprep.subr.mxu0 0.0
    %1205 = vmatpush2.msra.mxu0 0.0
    %1206 = vmatprep.subr.mxu0 0.0
    %1207 = vmatpush2.msra.mxu0 0.0
    %1208 = vmatprep.subr.mxu0 0.0
    %1209 = vmatpush2.msra.mxu0 0.0
    %1210 = vmatprep.subr.mxu0 0.0
    %1211 = vmatpush2.msra.mxu0 0.0
    %1212 = vmatprep.subr.mxu0 0.0
    %1213 = vmatpush2.msra.mxu0 0.0
    %1214 = vmatprep.subr.mxu0 0.0
    %1215 = vmatpush2.msra.mxu0 0.0
    %1216 = vmatprep.subr.mxu0 0.0
    %1217 = vmatpush2.msra.mxu0 0.0
    %1218 = vmatprep.subr.mxu0 0.0
    %1219 = vmatpush2.msra.mxu0 0.0
    %1220 = vmatprep.subr.mxu0 0.0
    %1221 = vmatpush2.msra.mxu0 0.0
    %1222 = vmatprep.subr.mxu0 0.0
    %1223 = vmatpush2.msra.mxu0 0.0
    %1224 = vmatprep.subr.mxu0 0.0
    %1225 = vmatpush2.msra.mxu0 0.0
    %1226 = vmatprep.subr.mxu0 0.0
    %1227 = vmatpush2.msra.mxu0 0.0
    %1228 = vmatprep.subr.mxu0 0.0
    %1229 = vmatpush2.msra.mxu0 0.0
    %1230 = vmatprep.mubr.f32.mxu0 0.0
    %1231 = vmatmul.mubr.f32.gmra.mxu0 %v1161
    %v1232 = vpop.f32.mrf.mxu0
    %v1233 = vadd.f32 %v1158, %v1232
    %v1234 = vpop.f32.mrf.mxu0
    %1235 = vmatprep.mubr.f32.mxu0 0.0
    %1236 = vmatmul.mubr.f32.gmra.mxu0 %v1164
    %v1237 = vpop.f32.mrf.mxu0
    %v1238 = vadd.f32 %v1158, %v1237
    %v1239 = vpop.f32.mrf.mxu0
    %1240 = vdwg.mxu0
    %v1241 = vadd.f32 %v188, %v1233
    %v1242 = vadd.f32 %v193, %v1238
    %v1243 = vsel %vm210, %v1241, 0.0
    %1244 = vadd.xlane.f32.xlu0 %v1243
    %v1245 = vpop.xlane.xlu0 %1244
    %v1246 = vsel %vm210, %v1242, 0.0
    %1247 = vadd.xlane.f32.xlu0 %v1246
    %v1248 = vpop.xlane.xlu0 %1247
    %v1249 = vrcp.pop 32.0
    %v1250 = vmul.f32 %v1245, %v1249
    %v1251 = vmul.f32 %v1248, %v1249
    %v1252 = vsub.f32 %v1241, %v1250
    %v1253 = vsub.f32 %v1242, %v1251
    %v1254 = vmul.f32 %v1252, %v1252
    %v1255 = vmul.f32 %v1253, %v1253
    %v1256 = vsel %vm210, %v1254, 0.0
    %1257 = vadd.xlane.f32.xlu0 %v1256
    %v1258 = vpop.xlane.xlu0 %1257
    %v1259 = vsel %vm210, %v1255, 0.0
    %1260 = vadd.xlane.f32.xlu0 %v1259
    %v1261 = vpop.xlane.xlu0 %1260
    %v1262 = vmul.f32 %v1258, %v1249
    %v1263 = vmul.f32 %v1261, %v1249
    %v1264 = vadd.f32 %v1262, 1e-07
    %v1265 = vadd.f32 %v1263, 1e-07
    %v1266 = vrsqrt.pop %v1264
    %v1267 = vrsqrt.pop %v1265
    %v1268 = vmul.f32 %v1252, %v1266
    %v1269 = vmul.f32 %v1253, %v1267
    %v1270 = vld [vmem:[%s11] sm:$0x1]
    %v1272 = vlaneseq
    %v1273 = vshrl.u32 %v1272, 7
    %v1274 = vsub.s32 0, %v1273
    %v1275 = vrot.slane %v1270, %v1274
    %v1277 = vmul.f32 %v1268, %v1275
    %v1278 = vmul.f32 %v1269, %v1275
    %v1279 = vld [vmem:[%s12] sm:$0x1]
    %v1281 = vlaneseq
    %v1282 = vshrl.u32 %v1281, 7
    %v1283 = vsub.s32 0, %v1282
    %v1284 = vrot.slane %v1279, %v1283
    %v1286 = vadd.f32 %v1277, %v1284
    %v1287 = vadd.f32 %v1278, %v1284
    %v1288 = vld [vmem:[%s13] sm:$0xff]
    %v1289 = vld [vmem:[%s13 + $0x8] sm:$0xff]
    %v1290 = vld [vmem:[%s13 + $0x10] sm:$0xff]
    %v1291 = vld [vmem:[%s13 + $0x18] sm:$0xff]
    %v1292 = vld [vmem:[%s14] sm:$0x1]
    %v1294 = vlaneseq
    %v1295 = vshrl.u32 %v1294, 7
    %v1296 = vsub.s32 0, %v1295
    %v1297 = vrot.slane %v1292, %v1296
    %v1300 = vsel %vm210, %v1286, 0
    %v1303 = vsel %vm210, %v1287, 0
    %1305 = vmatprep.subr.mxu0 0.0
    %1306 = vmatpush1.msra.mxu0 0.0
    %1307 = vmatprep.subr.mxu0 0.0
    %1308 = vmatpush1.msra.mxu0 0.0
    %1309 = vmatprep.subr.mxu0 0.0
    %1310 = vmatpush1.msra.mxu0 0.0
    %1311 = vmatprep.subr.mxu0 0.0
    %1312 = vmatpush1.msra.mxu0 0.0
    %1313 = vmatprep.subr.mxu0 0.0
    %1314 = vmatpush1.msra.mxu0 0.0
    %1315 = vmatprep.subr.mxu0 0.0
    %1316 = vmatpush1.msra.mxu0 0.0
    %1317 = vmatprep.subr.mxu0 0.0
    %1318 = vmatpush1.msra.mxu0 0.0
    %1319 = vmatprep.subr.mxu0 0.0
    %1320 = vmatpush1.msra.mxu0 0.0
    %1321 = vmatprep.subr.mxu0 0.0
    %1322 = vmatpush1.msra.mxu0 0.0
    %1323 = vmatprep.subr.mxu0 0.0
    %1324 = vmatpush1.msra.mxu0 0.0
    %1325 = vmatprep.subr.mxu0 0.0
    %1326 = vmatpush1.msra.mxu0 0.0
    %1327 = vmatprep.subr.mxu0 0.0
    %1328 = vmatpush1.msra.mxu0 0.0
    %1329 = vmatprep.subr.mxu0 0.0
    %1330 = vmatpush1.msra.mxu0 %v1291
    %1331 = vmatprep.subr.mxu0 0.0
    %1332 = vmatpush1.msra.mxu0 %v1290
    %1333 = vmatprep.subr.mxu0 0.0
    %1334 = vmatpush1.msra.mxu0 %v1289
    %1335 = vmatprep.subr.mxu0 0.0
    %1336 = vmatpush1.msra.mxu0 %v1288
    %1337 = vmatprep.subr.mxu0 0.0
    %1338 = vmatpush2.msra.mxu0 0.0
    %1339 = vmatprep.subr.mxu0 0.0
    %1340 = vmatpush2.msra.mxu0 0.0
    %1341 = vmatprep.subr.mxu0 0.0
    %1342 = vmatpush2.msra.mxu0 0.0
    %1343 = vmatprep.subr.mxu0 0.0
    %1344 = vmatpush2.msra.mxu0 0.0
    %1345 = vmatprep.subr.mxu0 0.0
    %1346 = vmatpush2.msra.mxu0 0.0
    %1347 = vmatprep.subr.mxu0 0.0
    %1348 = vmatpush2.msra.mxu0 0.0
    %1349 = vmatprep.subr.mxu0 0.0
    %1350 = vmatpush2.msra.mxu0 0.0
    %1351 = vmatprep.subr.mxu0 0.0
    %1352 = vmatpush2.msra.mxu0 0.0
    %1353 = vmatprep.subr.mxu0 0.0
    %1354 = vmatpush2.msra.mxu0 0.0
    %1355 = vmatprep.subr.mxu0 0.0
    %1356 = vmatpush2.msra.mxu0 0.0
    %1357 = vmatprep.subr.mxu0 0.0
    %1358 = vmatpush2.msra.mxu0 0.0
    %1359 = vmatprep.subr.mxu0 0.0
    %1360 = vmatpush2.msra.mxu0 0.0
    %1361 = vmatprep.subr.mxu0 0.0
    %1362 = vmatpush2.msra.mxu0 0.0
    %1363 = vmatprep.subr.mxu0 0.0
    %1364 = vmatpush2.msra.mxu0 0.0
    %1365 = vmatprep.subr.mxu0 0.0
    %1366 = vmatpush2.msra.mxu0 0.0
    %1367 = vmatprep.subr.mxu0 0.0
    %1368 = vmatpush2.msra.mxu0 0.0
    %1369 = vmatprep.mubr.f32.mxu0 0.0
    %1370 = vmatmul.mubr.f32.gmra.mxu0 %v1300
    %v1371 = vpop.f32.mrf.mxu0
    %v1372 = vadd.f32 %v1297, %v1371
    %v1373 = vpop.f32.mrf.mxu0
    %1374 = vmatprep.mubr.f32.mxu0 0.0
    %1375 = vmatmul.mubr.f32.gmra.mxu0 %v1303
    %v1376 = vpop.f32.mrf.mxu0
    %v1377 = vadd.f32 %v1297, %v1376
    %v1378 = vpop.f32.mrf.mxu0
    %1379 = vdwg.mxu0
    %v1380 = vmul.f32 %v1372, 0.5
    %v1381 = vmul.f32 %v1377, 0.5
    %v1382 = vmul.f32 %v1372, 0.70710677
    %v1383 = vmul.f32 %v1377, 0.70710677
    %vm1384 = vcmp.ge.f32.partialorder %v1382, 0.0
    %vm1385 = vcmp.ge.f32.partialorder %v1383, 0.0
    %v1386 = vsel %vm1384, 1.0, -1.0
    %v1387 = vsel %vm1385, 1.0, -1.0
    %v1388 = vand.u32 2147483647, %v1382
    %v1389 = vand.u32 2147483647, %v1383
    %v1390 = vmul.f32 %v1388, 0.3275911
    %v1391 = vmul.f32 %v1389, 0.3275911
    %v1392 = vadd.f32 %v1390, 1.0
    %v1393 = vadd.f32 %v1391, 1.0
    %v1394 = vrcp.pop %v1392
    %v1395 = vmul.f32 1.0, %v1394
    %v1396 = vrcp.pop %v1393
    %v1397 = vmul.f32 1.0, %v1396
    %v1398 = vmul.f32 %v1395, 1.0614054
    %v1399 = vmul.f32 %v1397, 1.0614054
    %v1400 = vadd.f32 %v1398, -1.4531521
    %v1401 = vadd.f32 %v1399, -1.4531521
    %v1402 = vmul.f32 %v1400, %v1395
    %v1403 = vmul.f32 %v1401, %v1397
    %v1404 = vadd.f32 %v1402, 1.4214138
    %v1405 = vadd.f32 %v1403, 1.4214138
    %v1406 = vmul.f32 %v1404, %v1395
    %v1407 = vmul.f32 %v1405, %v1397
    %v1408 = vadd.f32 %v1406, -0.28449672
    %v1409 = vadd.f32 %v1407, -0.28449672
    %v1410 = vmul.f32 %v1408, %v1395
    %v1411 = vmul.f32 %v1409, %v1397
    %v1412 = vadd.f32 %v1410, 0.2548296
    %v1413 = vadd.f32 %v1411, 0.2548296
    %v1414 = vmul.f32 %v1412, %v1395
    %v1415 = vmul.f32 %v1413, %v1397
    %v1416 = vsub.f32 0.0, %v1388
    %v1417 = vsub.f32 0.0, %v1389
    %v1418 = vmul.f32 %v1416, %v1388
    %v1419 = vmul.f32 %v1417, %v1389
    %v1420 = vmul.f32 %v1418, 1.442695
    %v1421 = vpow.pop %v1420
    %v1422 = vmul.f32 %v1419, 1.442695
    %v1423 = vpow.pop %v1422
    %v1424 = vmul.f32 %v1414, %v1421
    %v1425 = vmul.f32 %v1415, %v1423
    %v1426 = vsub.f32 1.0, %v1424
    %v1427 = vsub.f32 1.0, %v1425
    %v1428 = vmul.f32 %v1386, %v1426
    %v1429 = vmul.f32 %v1387, %v1427
    %v1430 = vadd.f32 %v1428, 1.0
    %v1431 = vadd.f32 %v1429, 1.0
    %v1432 = vmul.f32 %v1380, %v1430
    %v1433 = vmul.f32 %v1381, %v1431
    %v1434 = vld [vmem:[%s15] sm:$0xff]
    %v1435 = vld [vmem:[%s15 + $0x8] sm:$0xff]
    %v1436 = vld [vmem:[%s15 + $0x10] sm:$0xff]
    %v1437 = vld [vmem:[%s15 + $0x18] sm:$0xff]
    %v1438 = vld [vmem:[%s15 + $0x20] sm:$0xff]
    %v1439 = vld [vmem:[%s15 + $0x28] sm:$0xff]
    %v1440 = vld [vmem:[%s15 + $0x30] sm:$0xff]
    %v1441 = vld [vmem:[%s15 + $0x38] sm:$0xff]
    %v1442 = vld [vmem:[%s16] sm:$0x1]
    %v1444 = vlaneseq
    %v1445 = vshrl.u32 %v1444, 7
    %v1446 = vsub.s32 0, %v1445
    %v1447 = vrot.slane %v1442, %v1446
    %vm1449 = vcmask 523264
    %v1451 = vsel %vm1449, %v1432, 0
    %v1454 = vsel %vm1449, %v1433, 0
    %1456 = vmatprep.subr.mxu0 0.0
    %1457 = vmatpush1.msra.mxu0 0.0
    %1458 = vmatprep.subr.mxu0 0.0
    %1459 = vmatpush1.msra.mxu0 0.0
    %1460 = vmatprep.subr.mxu0 0.0
    %1461 = vmatpush1.msra.mxu0 0.0
    %1462 = vmatprep.subr.mxu0 0.0
    %1463 = vmatpush1.msra.mxu0 0.0
    %1464 = vmatprep.subr.mxu0 0.0
    %1465 = vmatpush1.msra.mxu0 0.0
    %1466 = vmatprep.subr.mxu0 0.0
    %1467 = vmatpush1.msra.mxu0 0.0
    %1468 = vmatprep.subr.mxu0 0.0
    %1469 = vmatpush1.msra.mxu0 0.0
    %1470 = vmatprep.subr.mxu0 0.0
    %1471 = vmatpush1.msra.mxu0 0.0
    %1472 = vmatprep.subr.mxu0 0.0
    %1473 = vmatpush1.msra.mxu0 %v1441
    %1474 = vmatprep.subr.mxu0 0.0
    %1475 = vmatpush1.msra.mxu0 %v1440
    %1476 = vmatprep.subr.mxu0 0.0
    %1477 = vmatpush1.msra.mxu0 %v1439
    %1478 = vmatprep.subr.mxu0 0.0
    %1479 = vmatpush1.msra.mxu0 %v1438
    %1480 = vmatprep.subr.mxu0 0.0
    %1481 = vmatpush1.msra.mxu0 %v1437
    %1482 = vmatprep.subr.mxu0 0.0
    %1483 = vmatpush1.msra.mxu0 %v1436
    %1484 = vmatprep.subr.mxu0 0.0
    %1485 = vmatpush1.msra.mxu0 %v1435
    %1486 = vmatprep.subr.mxu0 0.0
    %1487 = vmatpush1.msra.mxu0 %v1434
    %1488 = vmatprep.subr.mxu0 0.0
    %1489 = vmatpush2.msra.mxu0 0.0
    %1490 = vmatprep.subr.mxu0 0.0
    %1491 = vmatpush2.msra.mxu0 0.0
    %1492 = vmatprep.subr.mxu0 0.0
    %1493 = vmatpush2.msra.mxu0 0.0
    %1494 = vmatprep.subr.mxu0 0.0
    %1495 = vmatpush2.msra.mxu0 0.0
    %1496 = vmatprep.subr.mxu0 0.0
    %1497 = vmatpush2.msra.mxu0 0.0
    %1498 = vmatprep.subr.mxu0 0.0
    %1499 = vmatpush2.msra.mxu0 0.0
    %1500 = vmatprep.subr.mxu0 0.0
    %1501 = vmatpush2.msra.mxu0 0.0
    %1502 = vmatprep.subr.mxu0 0.0
    %1503 = vmatpush2.msra.mxu0 0.0
    %1504 = vmatprep.subr.mxu0 0.0
    %1505 = vmatpush2.msra.mxu0 0.0
    %1506 = vmatprep.subr.mxu0 0.0
    %1507 = vmatpush2.msra.mxu0 0.0
    %1508 = vmatprep.subr.mxu0 0.0
    %1509 = vmatpush2.msra.mxu0 0.0
    %1510 = vmatprep.subr.mxu0 0.0
    %1511 = vmatpush2.msra.mxu0 0.0
    %1512 = vmatprep.subr.mxu0 0.0
    %1513 = vmatpush2.msra.mxu0 0.0
    %1514 = vmatprep.subr.mxu0 0.0
    %1515 = vmatpush2.msra.mxu0 0.0
    %1516 = vmatprep.subr.mxu0 0.0
    %1517 = vmatpush2.msra.mxu0 0.0
    %1518 = vmatprep.subr.mxu0 0.0
    %1519 = vmatpush2.msra.mxu0 0.0
    %1520 = vmatprep.mubr.f32.mxu0 0.0
    %1521 = vmatmul.mubr.f32.gmra.mxu0 %v1451
    %v1522 = vpop.f32.mrf.mxu0
    %v1523 = vadd.f32 %v1447, %v1522
    %v1524 = vpop.f32.mrf.mxu0
    %1525 = vmatprep.mubr.f32.mxu0 0.0
    %1526 = vmatmul.mubr.f32.gmra.mxu0 %v1454
    %v1527 = vpop.f32.mrf.mxu0
    %v1528 = vadd.f32 %v1447, %v1527
    %v1529 = vpop.f32.mrf.mxu0
    %1530 = vdwg.mxu0
    %v1531 = vadd.f32 %v1286, %v1523
    %v1532 = vadd.f32 %v1287, %v1528
    %v1533 = vsel %vm210, %v1531, 0.0
    %1534 = vadd.xlane.f32.xlu0 %v1533
    %v1535 = vpop.xlane.xlu0 %1534
    %v1536 = vsel %vm210, %v1532, 0.0
    %1537 = vadd.xlane.f32.xlu0 %v1536
    %v1538 = vpop.xlane.xlu0 %1537
    %v1539 = vmul.f32 %v1535, %v1249
    %v1540 = vmul.f32 %v1538, %v1249
    %v1541 = vsub.f32 %v1531, %v1539
    %v1542 = vsub.f32 %v1532, %v1540
    %v1543 = vmul.f32 %v1541, %v1541
    %v1544 = vmul.f32 %v1542, %v1542
    %v1545 = vsel %vm210, %v1543, 0.0
    %1546 = vadd.xlane.f32.xlu0 %v1545
    %v1547 = vpop.xlane.xlu0 %1546
    %v1548 = vsel %vm210, %v1544, 0.0
    %1549 = vadd.xlane.f32.xlu0 %v1548
    %v1550 = vpop.xlane.xlu0 %1549
    %v1551 = vmul.f32 %v1547, %v1249
    %v1552 = vmul.f32 %v1550, %v1249
    %v1553 = vadd.f32 %v1551, 1e-07
    %v1554 = vadd.f32 %v1552, 1e-07
    %v1555 = vrsqrt.pop %v1553
    %v1556 = vrsqrt.pop %v1554
    %v1557 = vmul.f32 %v1541, %v1555
    %v1558 = vmul.f32 %v1542, %v1556
    %v1559 = vld [vmem:[%s17] sm:$0x1]
    %v1561 = vlaneseq
    %v1562 = vshrl.u32 %v1561, 7
    %v1563 = vsub.s32 0, %v1562
    %v1564 = vrot.slane %v1559, %v1563
    %v1566 = vmul.f32 %v1557, %v1564
    %v1567 = vmul.f32 %v1558, %v1564
    %v1568 = vld [vmem:[%s18] sm:$0x1]
    %v1570 = vlaneseq
    %v1571 = vshrl.u32 %v1570, 7
    %v1572 = vsub.s32 0, %v1571
    %v1573 = vrot.slane %v1568, %v1572
    %v1575 = vadd.f32 %v1566, %v1573
    %v1576 = vadd.f32 %v1567, %v1573
    %s1577 = scalar_lea.vmem %s3, 32
    %v1578 = vld [vmem:[%s1577] sm:$0xff]
    %v1579 = vld [vmem:[%s1577 + $0x8] sm:$0xff]
    %v1580 = vld [vmem:[%s1577 + $0x10] sm:$0xff]
    %v1581 = vld [vmem:[%s1577 + $0x18] sm:$0xff]
    %s1582 = scalar_lea.vmem %s4, 1
    %v1583 = vld [vmem:[%s1582] sm:$0x1]
    %v1585 = vlaneseq
    %v1586 = vshrl.u32 %v1585, 7
    %v1587 = vsub.s32 0, %v1586
    %v1588 = vrot.slane %v1583, %v1587
    %v1591 = vsel %vm210, %v1575, 0
    %v1594 = vsel %vm210, %v1576, 0
    %1596 = vmatprep.subr.mxu0 0.0
    %1597 = vmatpush1.msra.mxu0 0.0
    %1598 = vmatprep.subr.mxu0 0.0
    %1599 = vmatpush1.msra.mxu0 0.0
    %1600 = vmatprep.subr.mxu0 0.0
    %1601 = vmatpush1.msra.mxu0 0.0
    %1602 = vmatprep.subr.mxu0 0.0
    %1603 = vmatpush1.msra.mxu0 0.0
    %1604 = vmatprep.subr.mxu0 0.0
    %1605 = vmatpush1.msra.mxu0 0.0
    %1606 = vmatprep.subr.mxu0 0.0
    %1607 = vmatpush1.msra.mxu0 0.0
    %1608 = vmatprep.subr.mxu0 0.0
    %1609 = vmatpush1.msra.mxu0 0.0
    %1610 = vmatprep.subr.mxu0 0.0
    %1611 = vmatpush1.msra.mxu0 0.0
    %1612 = vmatprep.subr.mxu0 0.0
    %1613 = vmatpush1.msra.mxu0 0.0
    %1614 = vmatprep.subr.mxu0 0.0
    %1615 = vmatpush1.msra.mxu0 0.0
    %1616 = vmatprep.subr.mxu0 0.0
    %1617 = vmatpush1.msra.mxu0 0.0
    %1618 = vmatprep.subr.mxu0 0.0
    %1619 = vmatpush1.msra.mxu0 0.0
    %1620 = vmatprep.subr.mxu0 0.0
    %1621 = vmatpush1.msra.mxu0 %v1581
    %1622 = vmatprep.subr.mxu0 0.0
    %1623 = vmatpush1.msra.mxu0 %v1580
    %1624 = vmatprep.subr.mxu0 0.0
    %1625 = vmatpush1.msra.mxu0 %v1579
    %1626 = vmatprep.subr.mxu0 0.0
    %1627 = vmatpush1.msra.mxu0 %v1578
    %1628 = vmatprep.subr.mxu0 0.0
    %1629 = vmatpush2.msra.mxu0 0.0
    %1630 = vmatprep.subr.mxu0 0.0
    %1631 = vmatpush2.msra.mxu0 0.0
    %1632 = vmatprep.subr.mxu0 0.0
    %1633 = vmatpush2.msra.mxu0 0.0
    %1634 = vmatprep.subr.mxu0 0.0
    %1635 = vmatpush2.msra.mxu0 0.0
    %1636 = vmatprep.subr.mxu0 0.0
    %1637 = vmatpush2.msra.mxu0 0.0
    %1638 = vmatprep.subr.mxu0 0.0
    %1639 = vmatpush2.msra.mxu0 0.0
    %1640 = vmatprep.subr.mxu0 0.0
    %1641 = vmatpush2.msra.mxu0 0.0
    %1642 = vmatprep.subr.mxu0 0.0
    %1643 = vmatpush2.msra.mxu0 0.0
    %1644 = vmatprep.subr.mxu0 0.0
    %1645 = vmatpush2.msra.mxu0 0.0
    %1646 = vmatprep.subr.mxu0 0.0
    %1647 = vmatpush2.msra.mxu0 0.0
    %1648 = vmatprep.subr.mxu0 0.0
    %1649 = vmatpush2.msra.mxu0 0.0
    %1650 = vmatprep.subr.mxu0 0.0
    %1651 = vmatpush2.msra.mxu0 0.0
    %1652 = vmatprep.subr.mxu0 0.0
    %1653 = vmatpush2.msra.mxu0 0.0
    %1654 = vmatprep.subr.mxu0 0.0
    %1655 = vmatpush2.msra.mxu0 0.0
    %1656 = vmatprep.subr.mxu0 0.0
    %1657 = vmatpush2.msra.mxu0 0.0
    %1658 = vmatprep.subr.mxu0 0.0
    %1659 = vmatpush2.msra.mxu0 0.0
    %1660 = vmatprep.mubr.f32.mxu0 0.0
    %1661 = vmatmul.mubr.f32.gmra.mxu0 %v1591
    %v1662 = vpop.f32.mrf.mxu0
    %v1663 = vadd.f32 %v1588, %v1662
    %v1664 = vpop.f32.mrf.mxu0
    %1665 = vmatprep.mubr.f32.mxu0 0.0
    %1666 = vmatmul.mubr.f32.gmra.mxu0 %v1594
    %v1667 = vpop.f32.mrf.mxu0
    %v1668 = vadd.f32 %v1588, %v1667
    %v1669 = vpop.f32.mrf.mxu0
    %1670 = vdwg.mxu0
    %s1671 = scalar_lea.vmem %s5, 32
    %v1672 = vld [vmem:[%s1671] sm:$0xff]
    %v1673 = vld [vmem:[%s1671 + $0x8] sm:$0xff]
    %v1674 = vld [vmem:[%s1671 + $0x10] sm:$0xff]
    %v1675 = vld [vmem:[%s1671 + $0x18] sm:$0xff]
    %s1676 = scalar_lea.vmem %s6, 1
    %v1677 = vld [vmem:[%s1676] sm:$0x1]
    %v1679 = vlaneseq
    %v1680 = vshrl.u32 %v1679, 7
    %v1681 = vsub.s32 0, %v1680
    %v1682 = vrot.slane %v1677, %v1681
    %1684 = vmatprep.subr.mxu0 0.0
    %1685 = vmatpush1.msra.mxu0 0.0
    %1686 = vmatprep.subr.mxu0 0.0
    %1687 = vmatpush1.msra.mxu0 0.0
    %1688 = vmatprep.subr.mxu0 0.0
    %1689 = vmatpush1.msra.mxu0 0.0
    %1690 = vmatprep.subr.mxu0 0.0
    %1691 = vmatpush1.msra.mxu0 0.0
    %1692 = vmatprep.subr.mxu0 0.0
    %1693 = vmatpush1.msra.mxu0 0.0
    %1694 = vmatprep.subr.mxu0 0.0
    %1695 = vmatpush1.msra.mxu0 0.0
    %1696 = vmatprep.subr.mxu0 0.0
    %1697 = vmatpush1.msra.mxu0 0.0
    %1698 = vmatprep.subr.mxu0 0.0
    %1699 = vmatpush1.msra.mxu0 0.0
    %1700 = vmatprep.subr.mxu0 0.0
    %1701 = vmatpush1.msra.mxu0 0.0
    %1702 = vmatprep.subr.mxu0 0.0
    %1703 = vmatpush1.msra.mxu0 0.0
    %1704 = vmatprep.subr.mxu0 0.0
    %1705 = vmatpush1.msra.mxu0 0.0
    %1706 = vmatprep.subr.mxu0 0.0
    %1707 = vmatpush1.msra.mxu0 0.0
    %1708 = vmatprep.subr.mxu0 0.0
    %1709 = vmatpush1.msra.mxu0 %v1675
    %1710 = vmatprep.subr.mxu0 0.0
    %1711 = vmatpush1.msra.mxu0 %v1674
    %1712 = vmatprep.subr.mxu0 0.0
    %1713 = vmatpush1.msra.mxu0 %v1673
    %1714 = vmatprep.subr.mxu0 0.0
    %1715 = vmatpush1.msra.mxu0 %v1672
    %1716 = vmatprep.subr.mxu0 0.0
    %1717 = vmatpush2.msra.mxu0 0.0
    %1718 = vmatprep.subr.mxu0 0.0
    %1719 = vmatpush2.msra.mxu0 0.0
    %1720 = vmatprep.subr.mxu0 0.0
    %1721 = vmatpush2.msra.mxu0 0.0
    %1722 = vmatprep.subr.mxu0 0.0
    %1723 = vmatpush2.msra.mxu0 0.0
    %1724 = vmatprep.subr.mxu0 0.0
    %1725 = vmatpush2.msra.mxu0 0.0
    %1726 = vmatprep.subr.mxu0 0.0
    %1727 = vmatpush2.msra.mxu0 0.0
    %1728 = vmatprep.subr.mxu0 0.0
    %1729 = vmatpush2.msra.mxu0 0.0
    %1730 = vmatprep.subr.mxu0 0.0
    %1731 = vmatpush2.msra.mxu0 0.0
    %1732 = vmatprep.subr.mxu0 0.0
    %1733 = vmatpush2.msra.mxu0 0.0
    %1734 = vmatprep.subr.mxu0 0.0
    %1735 = vmatpush2.msra.mxu0 0.0
    %1736 = vmatprep.subr.mxu0 0.0
    %1737 = vmatpush2.msra.mxu0 0.0
    %1738 = vmatprep.subr.mxu0 0.0
    %1739 = vmatpush2.msra.mxu0 0.0
    %1740 = vmatprep.subr.mxu0 0.0
    %1741 = vmatpush2.msra.mxu0 0.0
    %1742 = vmatprep.subr.mxu0 0.0
    %1743 = vmatpush2.msra.mxu0 0.0
    %1744 = vmatprep.subr.mxu0 0.0
    %1745 = vmatpush2.msra.mxu0 0.0
    %1746 = vmatprep.subr.mxu0 0.0
    %1747 = vmatpush2.msra.mxu0 0.0
    %1748 = vmatprep.mubr.f32.mxu0 0.0
    %1749 = vmatmul.mubr.f32.gmra.mxu0 %v1591
    %v1750 = vpop.f32.mrf.mxu0
    %v1751 = vadd.f32 %v1682, %v1750
    %v1752 = vpop.f32.mrf.mxu0
    %1753 = vmatprep.mubr.f32.mxu0 0.0
    %1754 = vmatmul.mubr.f32.gmra.mxu0 %v1594
    %v1755 = vpop.f32.mrf.mxu0
    %v1756 = vadd.f32 %v1682, %v1755
    %v1757 = vpop.f32.mrf.mxu0
    %1758 = vdwg.mxu0
    %s1759 = scalar_lea.vmem %s7, 32
    %v1760 = vld [vmem:[%s1759] sm:$0xff]
    %v1761 = vld [vmem:[%s1759 + $0x8] sm:$0xff]
    %v1762 = vld [vmem:[%s1759 + $0x10] sm:$0xff]
    %v1763 = vld [vmem:[%s1759 + $0x18] sm:$0xff]
    %s1764 = scalar_lea.vmem %s8, 1
    %v1765 = vld [vmem:[%s1764] sm:$0x1]
    %v1767 = vlaneseq
    %v1768 = vshrl.u32 %v1767, 7
    %v1769 = vsub.s32 0, %v1768
    %v1770 = vrot.slane %v1765, %v1769
    %1772 = vmatprep.subr.mxu0 0.0
    %1773 = vmatpush1.msra.mxu0 0.0
    %1774 = vmatprep.subr.mxu0 0.0
    %1775 = vmatpush1.msra.mxu0 0.0
    %1776 = vmatprep.subr.mxu0 0.0
    %1777 = vmatpush1.msra.mxu0 0.0
    %1778 = vmatprep.subr.mxu0 0.0
    %1779 = vmatpush1.msra.mxu0 0.0
    %1780 = vmatprep.subr.mxu0 0.0
    %1781 = vmatpush1.msra.mxu0 0.0
    %1782 = vmatprep.subr.mxu0 0.0
    %1783 = vmatpush1.msra.mxu0 0.0
    %1784 = vmatprep.subr.mxu0 0.0
    %1785 = vmatpush1.msra.mxu0 0.0
    %1786 = vmatprep.subr.mxu0 0.0
    %1787 = vmatpush1.msra.mxu0 0.0
    %1788 = vmatprep.subr.mxu0 0.0
    %1789 = vmatpush1.msra.mxu0 0.0
    %1790 = vmatprep.subr.mxu0 0.0
    %1791 = vmatpush1.msra.mxu0 0.0
    %1792 = vmatprep.subr.mxu0 0.0
    %1793 = vmatpush1.msra.mxu0 0.0
    %1794 = vmatprep.subr.mxu0 0.0
    %1795 = vmatpush1.msra.mxu0 0.0
    %1796 = vmatprep.subr.mxu0 0.0
    %1797 = vmatpush1.msra.mxu0 %v1763
    %1798 = vmatprep.subr.mxu0 0.0
    %1799 = vmatpush1.msra.mxu0 %v1762
    %1800 = vmatprep.subr.mxu0 0.0
    %1801 = vmatpush1.msra.mxu0 %v1761
    %1802 = vmatprep.subr.mxu0 0.0
    %1803 = vmatpush1.msra.mxu0 %v1760
    %1804 = vmatprep.subr.mxu0 0.0
    %1805 = vmatpush2.msra.mxu0 0.0
    %1806 = vmatprep.subr.mxu0 0.0
    %1807 = vmatpush2.msra.mxu0 0.0
    %1808 = vmatprep.subr.mxu0 0.0
    %1809 = vmatpush2.msra.mxu0 0.0
    %1810 = vmatprep.subr.mxu0 0.0
    %1811 = vmatpush2.msra.mxu0 0.0
    %1812 = vmatprep.subr.mxu0 0.0
    %1813 = vmatpush2.msra.mxu0 0.0
    %1814 = vmatprep.subr.mxu0 0.0
    %1815 = vmatpush2.msra.mxu0 0.0
    %1816 = vmatprep.subr.mxu0 0.0
    %1817 = vmatpush2.msra.mxu0 0.0
    %1818 = vmatprep.subr.mxu0 0.0
    %1819 = vmatpush2.msra.mxu0 0.0
    %1820 = vmatprep.subr.mxu0 0.0
    %1821 = vmatpush2.msra.mxu0 0.0
    %1822 = vmatprep.subr.mxu0 0.0
    %1823 = vmatpush2.msra.mxu0 0.0
    %1824 = vmatprep.subr.mxu0 0.0
    %1825 = vmatpush2.msra.mxu0 0.0
    %1826 = vmatprep.subr.mxu0 0.0
    %1827 = vmatpush2.msra.mxu0 0.0
    %1828 = vmatprep.subr.mxu0 0.0
    %1829 = vmatpush2.msra.mxu0 0.0
    %1830 = vmatprep.subr.mxu0 0.0
    %1831 = vmatpush2.msra.mxu0 0.0
    %1832 = vmatprep.subr.mxu0 0.0
    %1833 = vmatpush2.msra.mxu0 0.0
    %1834 = vmatprep.subr.mxu0 0.0
    %1835 = vmatpush2.msra.mxu0 0.0
    %1836 = vmatprep.mubr.f32.mxu0 0.0
    %1837 = vmatmul.mubr.f32.gmra.mxu0 %v1591
    %v1838 = vpop.f32.mrf.mxu0
    %v1839 = vadd.f32 %v1770, %v1838
    %v1840 = vpop.f32.mrf.mxu0
    %1841 = vmatprep.mubr.f32.mxu0 0.0
    %1842 = vmatmul.mubr.f32.gmra.mxu0 %v1594
    %v1843 = vpop.f32.mrf.mxu0
    %v1844 = vadd.f32 %v1770, %v1843
    %v1845 = vpop.f32.mrf.mxu0
    %1846 = vdwg.mxu0
    %v1848 = vsel %vm464, %v1663, 0
    %v1851 = vsel %vm464, %v1751, 0
    %1853 = vmatprep.subr.mxu0 0.0
    %1854 = vmatpush1.xpose.msra.mxu0 0.0
    %1855 = vmatprep.subr.mxu0 0.0
    %1856 = vmatpush1.xpose.msra.mxu0 0.0
    %1857 = vmatprep.subr.mxu0 0.0
    %1858 = vmatpush1.xpose.msra.mxu0 0.0
    %1859 = vmatprep.subr.mxu0 0.0
    %1860 = vmatpush1.xpose.msra.mxu0 0.0
    %1861 = vmatprep.subr.mxu0 0.0
    %1862 = vmatpush1.xpose.msra.mxu0 0.0
    %1863 = vmatprep.subr.mxu0 0.0
    %1864 = vmatpush1.xpose.msra.mxu0 0.0
    %1865 = vmatprep.subr.mxu0 0.0
    %1866 = vmatpush1.xpose.msra.mxu0 0.0
    %1867 = vmatprep.subr.mxu0 0.0
    %1868 = vmatpush1.xpose.msra.mxu0 0.0
    %1869 = vmatprep.subr.mxu0 0.0
    %1870 = vmatpush1.xpose.msra.mxu0 0.0
    %1871 = vmatprep.subr.mxu0 0.0
    %1872 = vmatpush1.xpose.msra.mxu0 0.0
    %1873 = vmatprep.subr.mxu0 0.0
    %1874 = vmatpush1.xpose.msra.mxu0 0.0
    %1875 = vmatprep.subr.mxu0 0.0
    %1876 = vmatpush1.xpose.msra.mxu0 0.0
    %1877 = vmatprep.subr.mxu0 0.0
    %1878 = vmatpush1.xpose.msra.mxu0 0.0
    %1879 = vmatprep.subr.mxu0 0.0
    %1880 = vmatpush1.xpose.msra.mxu0 0.0
    %1881 = vmatprep.subr.mxu0 0.0
    %1882 = vmatpush1.xpose.msra.mxu0 0.0
    %1883 = vmatprep.subr.mxu0 0.0
    %1884 = vmatpush1.xpose.msra.mxu0 %v1851
    %1885 = vmatprep.subr.mxu0 0.0
    %1886 = vmatpush2.xpose.msra.mxu0 0.0
    %1887 = vmatprep.subr.mxu0 0.0
    %1888 = vmatpush2.xpose.msra.mxu0 0.0
    %1889 = vmatprep.subr.mxu0 0.0
    %1890 = vmatpush2.xpose.msra.mxu0 0.0
    %1891 = vmatprep.subr.mxu0 0.0
    %1892 = vmatpush2.xpose.msra.mxu0 0.0
    %1893 = vmatprep.subr.mxu0 0.0
    %1894 = vmatpush2.xpose.msra.mxu0 0.0
    %1895 = vmatprep.subr.mxu0 0.0
    %1896 = vmatpush2.xpose.msra.mxu0 0.0
    %1897 = vmatprep.subr.mxu0 0.0
    %1898 = vmatpush2.xpose.msra.mxu0 0.0
    %1899 = vmatprep.subr.mxu0 0.0
    %1900 = vmatpush2.xpose.msra.mxu0 0.0
    %1901 = vmatprep.subr.mxu0 0.0
    %1902 = vmatpush2.xpose.msra.mxu0 0.0
    %1903 = vmatprep.subr.mxu0 0.0
    %1904 = vmatpush2.xpose.msra.mxu0 0.0
    %1905 = vmatprep.subr.mxu0 0.0
    %1906 = vmatpush2.xpose.msra.mxu0 0.0
    %1907 = vmatprep.subr.mxu0 0.0
    %1908 = vmatpush2.xpose.msra.mxu0 0.0
    %1909 = vmatprep.subr.mxu0 0.0
    %1910 = vmatpush2.xpose.msra.mxu0 0.0
    %1911 = vmatprep.subr.mxu0 0.0
    %1912 = vmatpush2.xpose.msra.mxu0 0.0
    %1913 = vmatprep.subr.mxu0 0.0
    %1914 = vmatpush2.xpose.msra.mxu0 0.0
    %1915 = vmatprep.subr.mxu0 0.0
    %1916 = vmatpush2.xpose.msra.mxu0 0.0
    %1917 = vmatprep.mubr.f32.mxu0 0.0
    %1918 = vmatmul.mubr.f32.gmra.mxu0 %v1848
    %v1919 = vpop.f32.mrf.mxu0
    %v1920 = vadd.f32 0.0, %v1919
    %v1921 = vpop.f32.mrf.mxu0
    %1922 = vdwg.mxu0
    %v1923 = vmul.f32 %v1920, 0.25
    %v1924 = vadd.f32 %v1923, %v545
    %v1925 = vsel %vm547, %v1924, -inf
    %1926 = vmax.xlane.f32.xlu0 %v1925
    %v1927 = vpop.xlane.xlu0 %1926
    %v1928 = vsub.f32 %v1924, %v1927
    %v1929 = vmul.f32 %v1928, 1.442695
    %v1930 = vpow.pop %v1929
    %v1931 = vsel %vm547, %v1930, 0.0
    %1932 = vadd.xlane.f32.xlu0 %v1931
    %v1933 = vpop.xlane.xlu0 %1932
    %v1934 = vrcp.pop %v1933
    %v1935 = vmul.f32 %v1930, %v1934
    %v1937 = vsel %vm547, %v1935, 0
    %1939 = vmatprep.subr.mxu0 0.0
    %1940 = vmatpush1.msra.mxu0 0.0
    %1941 = vmatprep.subr.mxu0 0.0
    %1942 = vmatpush1.msra.mxu0 0.0
    %1943 = vmatprep.subr.mxu0 0.0
    %1944 = vmatpush1.msra.mxu0 0.0
    %1945 = vmatprep.subr.mxu0 0.0
    %1946 = vmatpush1.msra.mxu0 0.0
    %1947 = vmatprep.subr.mxu0 0.0
    %1948 = vmatpush1.msra.mxu0 0.0
    %1949 = vmatprep.subr.mxu0 0.0
    %1950 = vmatpush1.msra.mxu0 0.0
    %1951 = vmatprep.subr.mxu0 0.0
    %1952 = vmatpush1.msra.mxu0 0.0
    %1953 = vmatprep.subr.mxu0 0.0
    %1954 = vmatpush1.msra.mxu0 0.0
    %1955 = vmatprep.subr.mxu0 0.0
    %1956 = vmatpush1.msra.mxu0 0.0
    %1957 = vmatprep.subr.mxu0 0.0
    %1958 = vmatpush1.msra.mxu0 0.0
    %1959 = vmatprep.subr.mxu0 0.0
    %1960 = vmatpush1.msra.mxu0 0.0
    %1961 = vmatprep.subr.mxu0 0.0
    %1962 = vmatpush1.msra.mxu0 0.0
    %1963 = vmatprep.subr.mxu0 0.0
    %1964 = vmatpush1.msra.mxu0 0.0
    %1965 = vmatprep.subr.mxu0 0.0
    %1966 = vmatpush1.msra.mxu0 0.0
    %1967 = vmatprep.subr.mxu0 0.0
    %1968 = vmatpush1.msra.mxu0 0.0
    %1969 = vmatprep.subr.mxu0 0.0
    %1970 = vmatpush1.msra.mxu0 %v1839
    %1971 = vmatprep.subr.mxu0 0.0
    %1972 = vmatpush2.msra.mxu0 0.0
    %1973 = vmatprep.subr.mxu0 0.0
    %1974 = vmatpush2.msra.mxu0 0.0
    %1975 = vmatprep.subr.mxu0 0.0
    %1976 = vmatpush2.msra.mxu0 0.0
    %1977 = vmatprep.subr.mxu0 0.0
    %1978 = vmatpush2.msra.mxu0 0.0
    %1979 = vmatprep.subr.mxu0 0.0
    %1980 = vmatpush2.msra.mxu0 0.0
    %1981 = vmatprep.subr.mxu0 0.0
    %1982 = vmatpush2.msra.mxu0 0.0
    %1983 = vmatprep.subr.mxu0 0.0
    %1984 = vmatpush2.msra.mxu0 0.0
    %1985 = vmatprep.subr.mxu0 0.0
    %1986 = vmatpush2.msra.mxu0 0.0
    %1987 = vmatprep.subr.mxu0 0.0
    %1988 = vmatpush2.msra.mxu0 0.0
    %1989 = vmatprep.subr.mxu0 0.0
    %1990 = vmatpush2.msra.mxu0 0.0
    %1991 = vmatprep.subr.mxu0 0.0
    %1992 = vmatpush2.msra.mxu0 0.0
    %1993 = vmatprep.subr.mxu0 0.0
    %1994 = vmatpush2.msra.mxu0 0.0
    %1995 = vmatprep.subr.mxu0 0.0
    %1996 = vmatpush2.msra.mxu0 0.0
    %1997 = vmatprep.subr.mxu0 0.0
    %1998 = vmatpush2.msra.mxu0 0.0
    %1999 = vmatprep.subr.mxu0 0.0
    %2000 = vmatpush2.msra.mxu0 0.0
    %2001 = vmatprep.subr.mxu0 0.0
    %2002 = vmatpush2.msra.mxu0 0.0
    %2003 = vmatprep.mubr.f32.mxu0 0.0
    %2004 = vmatmul.mubr.f32.gmra.mxu0 %v1937
    %v2005 = vpop.f32.mrf.mxu0
    %v2006 = vadd.f32 0.0, %v2005
    %v2007 = vpop.f32.mrf.mxu0
    %2008 = vdwg.mxu0
    %2009 = vst.msk [vmem:[#allocation2] sm:$0xff] %vm464, %v2006
    %2010 = vrot.lane.b32.xlu0 %v1663, 112
    %v2011 = vpop.permute.xlu0 %2010
    %2012 = vrot.lane.b32.xlu0 %v1751, 112
    %v2013 = vpop.permute.xlu0 %2012
    %v2014 = vsel %vm464, %v2011, 0
    %v2016 = vsel %vm464, %v2013, 0
    %2018 = vmatprep.subr.mxu0 0.0
    %2019 = vmatpush1.xpose.msra.mxu0 0.0
    %2020 = vmatprep.subr.mxu0 0.0
    %2021 = vmatpush1.xpose.msra.mxu0 0.0
    %2022 = vmatprep.subr.mxu0 0.0
    %2023 = vmatpush1.xpose.msra.mxu0 0.0
    %2024 = vmatprep.subr.mxu0 0.0
    %2025 = vmatpush1.xpose.msra.mxu0 0.0
    %2026 = vmatprep.subr.mxu0 0.0
    %2027 = vmatpush1.xpose.msra.mxu0 0.0
    %2028 = vmatprep.subr.mxu0 0.0
    %2029 = vmatpush1.xpose.msra.mxu0 0.0
    %2030 = vmatprep.subr.mxu0 0.0
    %2031 = vmatpush1.xpose.msra.mxu0 0.0
    %2032 = vmatprep.subr.mxu0 0.0
    %2033 = vmatpush1.xpose.msra.mxu0 0.0
    %2034 = vmatprep.subr.mxu0 0.0
    %2035 = vmatpush1.xpose.msra.mxu0 0.0
    %2036 = vmatprep.subr.mxu0 0.0
    %2037 = vmatpush1.xpose.msra.mxu0 0.0
    %2038 = vmatprep.subr.mxu0 0.0
    %2039 = vmatpush1.xpose.msra.mxu0 0.0
    %2040 = vmatprep.subr.mxu0 0.0
    %2041 = vmatpush1.xpose.msra.mxu0 0.0
    %2042 = vmatprep.subr.mxu0 0.0
    %2043 = vmatpush1.xpose.msra.mxu0 0.0
    %2044 = vmatprep.subr.mxu0 0.0
    %2045 = vmatpush1.xpose.msra.mxu0 0.0
    %2046 = vmatprep.subr.mxu0 0.0
    %2047 = vmatpush1.xpose.msra.mxu0 0.0
    %2048 = vmatprep.subr.mxu0 0.0
    %2049 = vmatpush1.xpose.msra.mxu0 %v2016
    %2050 = vmatprep.subr.mxu0 0.0
    %2051 = vmatpush2.xpose.msra.mxu0 0.0
    %2052 = vmatprep.subr.mxu0 0.0
    %2053 = vmatpush2.xpose.msra.mxu0 0.0
    %2054 = vmatprep.subr.mxu0 0.0
    %2055 = vmatpush2.xpose.msra.mxu0 0.0
    %2056 = vmatprep.subr.mxu0 0.0
    %2057 = vmatpush2.xpose.msra.mxu0 0.0
    %2058 = vmatprep.subr.mxu0 0.0
    %2059 = vmatpush2.xpose.msra.mxu0 0.0
    %2060 = vmatprep.subr.mxu0 0.0
    %2061 = vmatpush2.xpose.msra.mxu0 0.0
    %2062 = vmatprep.subr.mxu0 0.0
    %2063 = vmatpush2.xpose.msra.mxu0 0.0
    %2064 = vmatprep.subr.mxu0 0.0
    %2065 = vmatpush2.xpose.msra.mxu0 0.0
    %2066 = vmatprep.subr.mxu0 0.0
    %2067 = vmatpush2.xpose.msra.mxu0 0.0
    %2068 = vmatprep.subr.mxu0 0.0
    %2069 = vmatpush2.xpose.msra.mxu0 0.0
    %2070 = vmatprep.subr.mxu0 0.0
    %2071 = vmatpush2.xpose.msra.mxu0 0.0
    %2072 = vmatprep.subr.mxu0 0.0
    %2073 = vmatpush2.xpose.msra.mxu0 0.0
    %2074 = vmatprep.subr.mxu0 0.0
    %2075 = vmatpush2.xpose.msra.mxu0 0.0
    %2076 = vmatprep.subr.mxu0 0.0
    %2077 = vmatpush2.xpose.msra.mxu0 0.0
    %2078 = vmatprep.subr.mxu0 0.0
    %2079 = vmatpush2.xpose.msra.mxu0 0.0
    %2080 = vmatprep.subr.mxu0 0.0
    %2081 = vmatpush2.xpose.msra.mxu0 0.0
    %2082 = vmatprep.mubr.f32.mxu0 0.0
    %2083 = vmatmul.mubr.f32.gmra.mxu0 %v2014
    %v2084 = vpop.f32.mrf.mxu0
    %v2085 = vadd.f32 0.0, %v2084
    %v2086 = vpop.f32.mrf.mxu0
    %2087 = vdwg.mxu0
    %v2088 = vmul.f32 %v2085, 0.25
    %v2089 = vadd.f32 %v2088, %v545
    %v2090 = vsel %vm547, %v2089, -inf
    %2091 = vmax.xlane.f32.xlu0 %v2090
    %v2092 = vpop.xlane.xlu0 %2091
    %v2093 = vsub.f32 %v2089, %v2092
    %v2094 = vmul.f32 %v2093, 1.442695
    %v2095 = vpow.pop %v2094
    %v2096 = vsel %vm547, %v2095, 0.0
    %2097 = vadd.xlane.f32.xlu0 %v2096
    %v2098 = vpop.xlane.xlu0 %2097
    %v2099 = vrcp.pop %v2098
    %v2100 = vmul.f32 %v2095, %v2099
    %2102 = vrot.lane.b32.xlu0 %v1839, 112
    %v2103 = vpop.permute.xlu0 %2102
    %v2106 = vsel %vm547, %v2100, 0
    %2108 = vmatprep.subr.mxu0 0.0
    %2109 = vmatpush1.msra.mxu0 0.0
    %2110 = vmatprep.subr.mxu0 0.0
    %2111 = vmatpush1.msra.mxu0 0.0
    %2112 = vmatprep.subr.mxu0 0.0
    %2113 = vmatpush1.msra.mxu0 0.0
    %2114 = vmatprep.subr.mxu0 0.0
    %2115 = vmatpush1.msra.mxu0 0.0
    %2116 = vmatprep.subr.mxu0 0.0
    %2117 = vmatpush1.msra.mxu0 0.0
    %2118 = vmatprep.subr.mxu0 0.0
    %2119 = vmatpush1.msra.mxu0 0.0
    %2120 = vmatprep.subr.mxu0 0.0
    %2121 = vmatpush1.msra.mxu0 0.0
    %2122 = vmatprep.subr.mxu0 0.0
    %2123 = vmatpush1.msra.mxu0 0.0
    %2124 = vmatprep.subr.mxu0 0.0
    %2125 = vmatpush1.msra.mxu0 0.0
    %2126 = vmatprep.subr.mxu0 0.0
    %2127 = vmatpush1.msra.mxu0 0.0
    %2128 = vmatprep.subr.mxu0 0.0
    %2129 = vmatpush1.msra.mxu0 0.0
    %2130 = vmatprep.subr.mxu0 0.0
    %2131 = vmatpush1.msra.mxu0 0.0
    %2132 = vmatprep.subr.mxu0 0.0
    %2133 = vmatpush1.msra.mxu0 0.0
    %2134 = vmatprep.subr.mxu0 0.0
    %2135 = vmatpush1.msra.mxu0 0.0
    %2136 = vmatprep.subr.mxu0 0.0
    %2137 = vmatpush1.msra.mxu0 0.0
    %2138 = vmatprep.subr.mxu0 0.0
    %2139 = vmatpush1.msra.mxu0 %v2103
    %2140 = vmatprep.subr.mxu0 0.0
    %2141 = vmatpush2.msra.mxu0 0.0
    %2142 = vmatprep.subr.mxu0 0.0
    %2143 = vmatpush2.msra.mxu0 0.0
    %2144 = vmatprep.subr.mxu0 0.0
    %2145 = vmatpush2.msra.mxu0 0.0
    %2146 = vmatprep.subr.mxu0 0.0
    %2147 = vmatpush2.msra.mxu0 0.0
    %2148 = vmatprep.subr.mxu0 0.0
    %2149 = vmatpush2.msra.mxu0 0.0
    %2150 = vmatprep.subr.mxu0 0.0
    %2151 = vmatpush2.msra.mxu0 0.0
    %2152 = vmatprep.subr.mxu0 0.0
    %2153 = vmatpush2.msra.mxu0 0.0
    %2154 = vmatprep.subr.mxu0 0.0
    %2155 = vmatpush2.msra.mxu0 0.0
    %2156 = vmatprep.subr.mxu0 0.0
    %2157 = vmatpush2.msra.mxu0 0.0
    %2158 = vmatprep.subr.mxu0 0.0
    %2159 = vmatpush2.msra.mxu0 0.0
    %2160 = vmatprep.subr.mxu0 0.0
    %2161 = vmatpush2.msra.mxu0 0.0
    %2162 = vmatprep.subr.mxu0 0.0
    %2163 = vmatpush2.msra.mxu0 0.0
    %2164 = vmatprep.subr.mxu0 0.0
    %2165 = vmatpush2.msra.mxu0 0.0
    %2166 = vmatprep.subr.mxu0 0.0
    %2167 = vmatpush2.msra.mxu0 0.0
    %2168 = vmatprep.subr.mxu0 0.0
    %2169 = vmatpush2.msra.mxu0 0.0
    %2170 = vmatprep.subr.mxu0 0.0
    %2171 = vmatpush2.msra.mxu0 0.0
    %2172 = vmatprep.mubr.f32.mxu0 0.0
    %2173 = vmatmul.mubr.f32.gmra.mxu0 %v2106
    %v2174 = vpop.f32.mrf.mxu0
    %v2175 = vadd.f32 0.0, %v2174
    %v2176 = vpop.f32.mrf.mxu0
    %2177 = vdwg.mxu0
    %2179 = vrot.lane.b32.xlu0 %v2175, 16
    %v2180 = vpop.permute.xlu0 %2179
    %2182 = vst.msk [vmem:[#allocation2] sm:$0xff] %vm805, %v2180
    %v2184 = vsel %vm464, %v1668, 0
    %v2187 = vsel %vm464, %v1756, 0
    %2189 = vmatprep.subr.mxu0 0.0
    %2190 = vmatpush1.xpose.msra.mxu0 0.0
    %2191 = vmatprep.subr.mxu0 0.0
    %2192 = vmatpush1.xpose.msra.mxu0 0.0
    %2193 = vmatprep.subr.mxu0 0.0
    %2194 = vmatpush1.xpose.msra.mxu0 0.0
    %2195 = vmatprep.subr.mxu0 0.0
    %2196 = vmatpush1.xpose.msra.mxu0 0.0
    %2197 = vmatprep.subr.mxu0 0.0
    %2198 = vmatpush1.xpose.msra.mxu0 0.0
    %2199 = vmatprep.subr.mxu0 0.0
    %2200 = vmatpush1.xpose.msra.mxu0 0.0
    %2201 = vmatprep.subr.mxu0 0.0
    %2202 = vmatpush1.xpose.msra.mxu0 0.0
    %2203 = vmatprep.subr.mxu0 0.0
    %2204 = vmatpush1.xpose.msra.mxu0 0.0
    %2205 = vmatprep.subr.mxu0 0.0
    %2206 = vmatpush1.xpose.msra.mxu0 0.0
    %2207 = vmatprep.subr.mxu0 0.0
    %2208 = vmatpush1.xpose.msra.mxu0 0.0
    %2209 = vmatprep.subr.mxu0 0.0
    %2210 = vmatpush1.xpose.msra.mxu0 0.0
    %2211 = vmatprep.subr.mxu0 0.0
    %2212 = vmatpush1.xpose.msra.mxu0 0.0
    %2213 = vmatprep.subr.mxu0 0.0
    %2214 = vmatpush1.xpose.msra.mxu0 0.0
    %2215 = vmatprep.subr.mxu0 0.0
    %2216 = vmatpush1.xpose.msra.mxu0 0.0
    %2217 = vmatprep.subr.mxu0 0.0
    %2218 = vmatpush1.xpose.msra.mxu0 0.0
    %2219 = vmatprep.subr.mxu0 0.0
    %2220 = vmatpush1.xpose.msra.mxu0 %v2187
    %2221 = vmatprep.subr.mxu0 0.0
    %2222 = vmatpush2.xpose.msra.mxu0 0.0
    %2223 = vmatprep.subr.mxu0 0.0
    %2224 = vmatpush2.xpose.msra.mxu0 0.0
    %2225 = vmatprep.subr.mxu0 0.0
    %2226 = vmatpush2.xpose.msra.mxu0 0.0
    %2227 = vmatprep.subr.mxu0 0.0
    %2228 = vmatpush2.xpose.msra.mxu0 0.0
    %2229 = vmatprep.subr.mxu0 0.0
    %2230 = vmatpush2.xpose.msra.mxu0 0.0
    %2231 = vmatprep.subr.mxu0 0.0
    %2232 = vmatpush2.xpose.msra.mxu0 0.0
    %2233 = vmatprep.subr.mxu0 0.0
    %2234 = vmatpush2.xpose.msra.mxu0 0.0
    %2235 = vmatprep.subr.mxu0 0.0
    %2236 = vmatpush2.xpose.msra.mxu0 0.0
    %2237 = vmatprep.subr.mxu0 0.0
    %2238 = vmatpush2.xpose.msra.mxu0 0.0
    %2239 = vmatprep.subr.mxu0 0.0
    %2240 = vmatpush2.xpose.msra.mxu0 0.0
    %2241 = vmatprep.subr.mxu0 0.0
    %2242 = vmatpush2.xpose.msra.mxu0 0.0
    %2243 = vmatprep.subr.mxu0 0.0
    %2244 = vmatpush2.xpose.msra.mxu0 0.0
    %2245 = vmatprep.subr.mxu0 0.0
    %2246 = vmatpush2.xpose.msra.mxu0 0.0
    %2247 = vmatprep.subr.mxu0 0.0
    %2248 = vmatpush2.xpose.msra.mxu0 0.0
    %2249 = vmatprep.subr.mxu0 0.0
    %2250 = vmatpush2.xpose.msra.mxu0 0.0
    %2251 = vmatprep.subr.mxu0 0.0
    %2252 = vmatpush2.xpose.msra.mxu0 0.0
    %2253 = vmatprep.mubr.f32.mxu0 0.0
    %2254 = vmatmul.mubr.f32.gmra.mxu0 %v2184
    %v2255 = vpop.f32.mrf.mxu0
    %v2256 = vadd.f32 0.0, %v2255
    %v2257 = vpop.f32.mrf.mxu0
    %2258 = vdwg.mxu0
    %v2259 = vmul.f32 %v2256, 0.25
    %v2260 = vadd.f32 %v2259, %v887
    %v2261 = vsel %vm547, %v2260, -inf
    %2262 = vmax.xlane.f32.xlu0 %v2261
    %v2263 = vpop.xlane.xlu0 %2262
    %v2264 = vsub.f32 %v2260, %v2263
    %v2265 = vmul.f32 %v2264, 1.442695
    %v2266 = vpow.pop %v2265
    %v2267 = vsel %vm547, %v2266, 0.0
    %2268 = vadd.xlane.f32.xlu0 %v2267
    %v2269 = vpop.xlane.xlu0 %2268
    %v2270 = vrcp.pop %v2269
    %v2271 = vmul.f32 %v2266, %v2270
    %v2273 = vsel %vm547, %v2271, 0
    %2275 = vmatprep.subr.mxu0 0.0
    %2276 = vmatpush1.msra.mxu0 0.0
    %2277 = vmatprep.subr.mxu0 0.0
    %2278 = vmatpush1.msra.mxu0 0.0
    %2279 = vmatprep.subr.mxu0 0.0
    %2280 = vmatpush1.msra.mxu0 0.0
    %2281 = vmatprep.subr.mxu0 0.0
    %2282 = vmatpush1.msra.mxu0 0.0
    %2283 = vmatprep.subr.mxu0 0.0
    %2284 = vmatpush1.msra.mxu0 0.0
    %2285 = vmatprep.subr.mxu0 0.0
    %2286 = vmatpush1.msra.mxu0 0.0
    %2287 = vmatprep.subr.mxu0 0.0
    %2288 = vmatpush1.msra.mxu0 0.0
    %2289 = vmatprep.subr.mxu0 0.0
    %2290 = vmatpush1.msra.mxu0 0.0
    %2291 = vmatprep.subr.mxu0 0.0
    %2292 = vmatpush1.msra.mxu0 0.0
    %2293 = vmatprep.subr.mxu0 0.0
    %2294 = vmatpush1.msra.mxu0 0.0
    %2295 = vmatprep.subr.mxu0 0.0
    %2296 = vmatpush1.msra.mxu0 0.0
    %2297 = vmatprep.subr.mxu0 0.0
    %2298 = vmatpush1.msra.mxu0 0.0
    %2299 = vmatprep.subr.mxu0 0.0
    %2300 = vmatpush1.msra.mxu0 0.0
    %2301 = vmatprep.subr.mxu0 0.0
    %2302 = vmatpush1.msra.mxu0 0.0
    %2303 = vmatprep.subr.mxu0 0.0
    %2304 = vmatpush1.msra.mxu0 0.0
    %2305 = vmatprep.subr.mxu0 0.0
    %2306 = vmatpush1.msra.mxu0 %v1844
    %2307 = vmatprep.subr.mxu0 0.0
    %2308 = vmatpush2.msra.mxu0 0.0
    %2309 = vmatprep.subr.mxu0 0.0
    %2310 = vmatpush2.msra.mxu0 0.0
    %2311 = vmatprep.subr.mxu0 0.0
    %2312 = vmatpush2.msra.mxu0 0.0
    %2313 = vmatprep.subr.mxu0 0.0
    %2314 = vmatpush2.msra.mxu0 0.0
    %2315 = vmatprep.subr.mxu0 0.0
    %2316 = vmatpush2.msra.mxu0 0.0
    %2317 = vmatprep.subr.mxu0 0.0
    %2318 = vmatpush2.msra.mxu0 0.0
    %2319 = vmatprep.subr.mxu0 0.0
    %2320 = vmatpush2.msra.mxu0 0.0
    %2321 = vmatprep.subr.mxu0 0.0
    %2322 = vmatpush2.msra.mxu0 0.0
    %2323 = vmatprep.subr.mxu0 0.0
    %2324 = vmatpush2.msra.mxu0 0.0
    %2325 = vmatprep.subr.mxu0 0.0
    %2326 = vmatpush2.msra.mxu0 0.0
    %2327 = vmatprep.subr.mxu0 0.0
    %2328 = vmatpush2.msra.mxu0 0.0
    %2329 = vmatprep.subr.mxu0 0.0
    %2330 = vmatpush2.msra.mxu0 0.0
    %2331 = vmatprep.subr.mxu0 0.0
    %2332 = vmatpush2.msra.mxu0 0.0
    %2333 = vmatprep.subr.mxu0 0.0
    %2334 = vmatpush2.msra.mxu0 0.0
    %2335 = vmatprep.subr.mxu0 0.0
    %2336 = vmatpush2.msra.mxu0 0.0
    %2337 = vmatprep.subr.mxu0 0.0
    %2338 = vmatpush2.msra.mxu0 0.0
    %2339 = vmatprep.mubr.f32.mxu0 0.0
    %2340 = vmatmul.mubr.f32.gmra.mxu0 %v2273
    %v2341 = vpop.f32.mrf.mxu0
    %v2342 = vadd.f32 0.0, %v2341
    %v2343 = vpop.f32.mrf.mxu0
    %2344 = vdwg.mxu0
    %2345 = vst.msk [vmem:[#allocation2 + $0x8] sm:$0xff] %vm464, %v2342
    %2346 = vrot.lane.b32.xlu0 %v1668, 112
    %v2347 = vpop.permute.xlu0 %2346
    %2348 = vrot.lane.b32.xlu0 %v1756, 112
    %v2349 = vpop.permute.xlu0 %2348
    %v2350 = vsel %vm464, %v2347, 0
    %v2352 = vsel %vm464, %v2349, 0
    %2354 = vmatprep.subr.mxu0 0.0
    %2355 = vmatpush1.xpose.msra.mxu0 0.0
    %2356 = vmatprep.subr.mxu0 0.0
    %2357 = vmatpush1.xpose.msra.mxu0 0.0
    %2358 = vmatprep.subr.mxu0 0.0
    %2359 = vmatpush1.xpose.msra.mxu0 0.0
    %2360 = vmatprep.subr.mxu0 0.0
    %2361 = vmatpush1.xpose.msra.mxu0 0.0
    %2362 = vmatprep.subr.mxu0 0.0
    %2363 = vmatpush1.xpose.msra.mxu0 0.0
    %2364 = vmatprep.subr.mxu0 0.0
    %2365 = vmatpush1.xpose.msra.mxu0 0.0
    %2366 = vmatprep.subr.mxu0 0.0
    %2367 = vmatpush1.xpose.msra.mxu0 0.0
    %2368 = vmatprep.subr.mxu0 0.0
    %2369 = vmatpush1.xpose.msra.mxu0 0.0
    %2370 = vmatprep.subr.mxu0 0.0
    %2371 = vmatpush1.xpose.msra.mxu0 0.0
    %2372 = vmatprep.subr.mxu0 0.0
    %2373 = vmatpush1.xpose.msra.mxu0 0.0
    %2374 = vmatprep.subr.mxu0 0.0
    %2375 = vmatpush1.xpose.msra.mxu0 0.0
    %2376 = vmatprep.subr.mxu0 0.0
    %2377 = vmatpush1.xpose.msra.mxu0 0.0
    %2378 = vmatprep.subr.mxu0 0.0
    %2379 = vmatpush1.xpose.msra.mxu0 0.0
    %2380 = vmatprep.subr.mxu0 0.0
    %2381 = vmatpush1.xpose.msra.mxu0 0.0
    %2382 = vmatprep.subr.mxu0 0.0
    %2383 = vmatpush1.xpose.msra.mxu0 0.0
    %2384 = vmatprep.subr.mxu0 0.0
    %2385 = vmatpush1.xpose.msra.mxu0 %v2352
    %2386 = vmatprep.subr.mxu0 0.0
    %2387 = vmatpush2.xpose.msra.mxu0 0.0
    %2388 = vmatprep.subr.mxu0 0.0
    %2389 = vmatpush2.xpose.msra.mxu0 0.0
    %2390 = vmatprep.subr.mxu0 0.0
    %2391 = vmatpush2.xpose.msra.mxu0 0.0
    %2392 = vmatprep.subr.mxu0 0.0
    %2393 = vmatpush2.xpose.msra.mxu0 0.0
    %2394 = vmatprep.subr.mxu0 0.0
    %2395 = vmatpush2.xpose.msra.mxu0 0.0
    %2396 = vmatprep.subr.mxu0 0.0
    %2397 = vmatpush2.xpose.msra.mxu0 0.0
    %2398 = vmatprep.subr.mxu0 0.0
    %2399 = vmatpush2.xpose.msra.mxu0 0.0
    %2400 = vmatprep.subr.mxu0 0.0
    %2401 = vmatpush2.xpose.msra.mxu0 0.0
    %2402 = vmatprep.subr.mxu0 0.0
    %2403 = vmatpush2.xpose.msra.mxu0 0.0
    %2404 = vmatprep.subr.mxu0 0.0
    %2405 = vmatpush2.xpose.msra.mxu0 0.0
    %2406 = vmatprep.subr.mxu0 0.0
    %2407 = vmatpush2.xpose.msra.mxu0 0.0
    %2408 = vmatprep.subr.mxu0 0.0
    %2409 = vmatpush2.xpose.msra.mxu0 0.0
    %2410 = vmatprep.subr.mxu0 0.0
    %2411 = vmatpush2.xpose.msra.mxu0 0.0
    %2412 = vmatprep.subr.mxu0 0.0
    %2413 = vmatpush2.xpose.msra.mxu0 0.0
    %2414 = vmatprep.subr.mxu0 0.0
    %2415 = vmatpush2.xpose.msra.mxu0 0.0
    %2416 = vmatprep.subr.mxu0 0.0
    %2417 = vmatpush2.xpose.msra.mxu0 0.0
    %2418 = vmatprep.mubr.f32.mxu0 0.0
    %2419 = vmatmul.mubr.f32.gmra.mxu0 %v2350
    %v2420 = vpop.f32.mrf.mxu0
    %v2421 = vadd.f32 0.0, %v2420
    %v2422 = vpop.f32.mrf.mxu0
    %2423 = vdwg.mxu0
    %v2424 = vmul.f32 %v2421, 0.25
    %v2425 = vadd.f32 %v2424, %v887
    %v2426 = vsel %vm547, %v2425, -inf
    %2427 = vmax.xlane.f32.xlu0 %v2426
    %v2428 = vpop.xlane.xlu0 %2427
    %v2429 = vsub.f32 %v2425, %v2428
    %v2430 = vmul.f32 %v2429, 1.442695
    %v2431 = vpow.pop %v2430
    %v2432 = vsel %vm547, %v2431, 0.0
    %2433 = vadd.xlane.f32.xlu0 %v2432
    %v2434 = vpop.xlane.xlu0 %2433
    %v2435 = vrcp.pop %v2434
    %v2436 = vmul.f32 %v2431, %v2435
    %2438 = vrot.lane.b32.xlu0 %v1844, 112
    %v2439 = vpop.permute.xlu0 %2438
    %v2442 = vsel %vm547, %v2436, 0
    %2444 = vmatprep.subr.mxu0 0.0
    %2445 = vmatpush1.msra.mxu0 0.0
    %2446 = vmatprep.subr.mxu0 0.0
    %2447 = vmatpush1.msra.mxu0 0.0
    %2448 = vmatprep.subr.mxu0 0.0
    %2449 = vmatpush1.msra.mxu0 0.0
    %2450 = vmatprep.subr.mxu0 0.0
    %2451 = vmatpush1.msra.mxu0 0.0
    %2452 = vmatprep.subr.mxu0 0.0
    %2453 = vmatpush1.msra.mxu0 0.0
    %2454 = vmatprep.subr.mxu0 0.0
    %2455 = vmatpush1.msra.mxu0 0.0
    %2456 = vmatprep.subr.mxu0 0.0
    %2457 = vmatpush1.msra.mxu0 0.0
    %2458 = vmatprep.subr.mxu0 0.0
    %2459 = vmatpush1.msra.mxu0 0.0
    %2460 = vmatprep.subr.mxu0 0.0
    %2461 = vmatpush1.msra.mxu0 0.0
    %2462 = vmatprep.subr.mxu0 0.0
    %2463 = vmatpush1.msra.mxu0 0.0
    %2464 = vmatprep.subr.mxu0 0.0
    %2465 = vmatpush1.msra.mxu0 0.0
    %2466 = vmatprep.subr.mxu0 0.0
    %2467 = vmatpush1.msra.mxu0 0.0
    %2468 = vmatprep.subr.mxu0 0.0
    %2469 = vmatpush1.msra.mxu0 0.0
    %2470 = vmatprep.subr.mxu0 0.0
    %2471 = vmatpush1.msra.mxu0 0.0
    %2472 = vmatprep.subr.mxu0 0.0
    %2473 = vmatpush1.msra.mxu0 0.0
    %2474 = vmatprep.subr.mxu0 0.0
    %2475 = vmatpush1.msra.mxu0 %v2439
    %2476 = vmatprep.subr.mxu0 0.0
    %2477 = vmatpush2.msra.mxu0 0.0
    %2478 = vmatprep.subr.mxu0 0.0
    %2479 = vmatpush2.msra.mxu0 0.0
    %2480 = vmatprep.subr.mxu0 0.0
    %2481 = vmatpush2.msra.mxu0 0.0
    %2482 = vmatprep.subr.mxu0 0.0
    %2483 = vmatpush2.msra.mxu0 0.0
    %2484 = vmatprep.subr.mxu0 0.0
    %2485 = vmatpush2.msra.mxu0 0.0
    %2486 = vmatprep.subr.mxu0 0.0
    %2487 = vmatpush2.msra.mxu0 0.0
    %2488 = vmatprep.subr.mxu0 0.0
    %2489 = vmatpush2.msra.mxu0 0.0
    %2490 = vmatprep.subr.mxu0 0.0
    %2491 = vmatpush2.msra.mxu0 0.0
    %2492 = vmatprep.subr.mxu0 0.0
    %2493 = vmatpush2.msra.mxu0 0.0
    %2494 = vmatprep.subr.mxu0 0.0
    %2495 = vmatpush2.msra.mxu0 0.0
    %2496 = vmatprep.subr.mxu0 0.0
    %2497 = vmatpush2.msra.mxu0 0.0
    %2498 = vmatprep.subr.mxu0 0.0
    %2499 = vmatpush2.msra.mxu0 0.0
    %2500 = vmatprep.subr.mxu0 0.0
    %2501 = vmatpush2.msra.mxu0 0.0
    %2502 = vmatprep.subr.mxu0 0.0
    %2503 = vmatpush2.msra.mxu0 0.0
    %2504 = vmatprep.subr.mxu0 0.0
    %2505 = vmatpush2.msra.mxu0 0.0
    %2506 = vmatprep.subr.mxu0 0.0
    %2507 = vmatpush2.msra.mxu0 0.0
    %2508 = vmatprep.mubr.f32.mxu0 0.0
    %2509 = vmatmul.mubr.f32.gmra.mxu0 %v2442
    %v2510 = vpop.f32.mrf.mxu0
    %v2511 = vadd.f32 0.0, %v2510
    %v2512 = vpop.f32.mrf.mxu0
    %2513 = vdwg.mxu0
    %2515 = vrot.lane.b32.xlu0 %v2511, 16
    %v2516 = vpop.permute.xlu0 %2515
    %2518 = vst.msk [vmem:[#allocation2 + $0x8] sm:$0xff] %vm805, %v2516
    %v2519 = vld [vmem:[#allocation2] sm:$0xff]
    %v2520 = vld [vmem:[#allocation2 + $0x8] sm:$0xff]
    %s2521 = scalar_lea.vmem %s9, 32
    %v2522 = vld [vmem:[%s2521] sm:$0xff]
    %v2523 = vld [vmem:[%s2521 + $0x8] sm:$0xff]
    %v2524 = vld [vmem:[%s2521 + $0x10] sm:$0xff]
    %v2525 = vld [vmem:[%s2521 + $0x18] sm:$0xff]
    %s2526 = scalar_lea.vmem %s10, 1
    %v2527 = vld [vmem:[%s2526] sm:$0x1]
    %v2529 = vlaneseq
    %v2530 = vshrl.u32 %v2529, 7
    %v2531 = vsub.s32 0, %v2530
    %v2532 = vrot.slane %v2527, %v2531
    %v2535 = vsel %vm210, %v2519, 0
    %v2538 = vsel %vm210, %v2520, 0
    %2540 = vmatprep.subr.mxu0 0.0
    %2541 = vmatpush1.msra.mxu0 0.0
    %2542 = vmatprep.subr.mxu0 0.0
    %2543 = vmatpush1.msra.mxu0 0.0
    %2544 = vmatprep.subr.mxu0 0.0
    %2545 = vmatpush1.msra.mxu0 0.0
    %2546 = vmatprep.subr.mxu0 0.0
    %2547 = vmatpush1.msra.mxu0 0.0
    %2548 = vmatprep.subr.mxu0 0.0
    %2549 = vmatpush1.msra.mxu0 0.0
    %2550 = vmatprep.subr.mxu0 0.0
    %2551 = vmatpush1.msra.mxu0 0.0
    %2552 = vmatprep.subr.mxu0 0.0
    %2553 = vmatpush1.msra.mxu0 0.0
    %2554 = vmatprep.subr.mxu0 0.0
    %2555 = vmatpush1.msra.mxu0 0.0
    %2556 = vmatprep.subr.mxu0 0.0
    %2557 = vmatpush1.msra.mxu0 0.0
    %2558 = vmatprep.subr.mxu0 0.0
    %2559 = vmatpush1.msra.mxu0 0.0
    %2560 = vmatprep.subr.mxu0 0.0
    %2561 = vmatpush1.msra.mxu0 0.0
    %2562 = vmatprep.subr.mxu0 0.0
    %2563 = vmatpush1.msra.mxu0 0.0
    %2564 = vmatprep.subr.mxu0 0.0
    %2565 = vmatpush1.msra.mxu0 %v2525
    %2566 = vmatprep.subr.mxu0 0.0
    %2567 = vmatpush1.msra.mxu0 %v2524
    %2568 = vmatprep.subr.mxu0 0.0
    %2569 = vmatpush1.msra.mxu0 %v2523
    %2570 = vmatprep.subr.mxu0 0.0
    %2571 = vmatpush1.msra.mxu0 %v2522
    %2572 = vmatprep.subr.mxu0 0.0
    %2573 = vmatpush2.msra.mxu0 0.0
    %2574 = vmatprep.subr.mxu0 0.0
    %2575 = vmatpush2.msra.mxu0 0.0
    %2576 = vmatprep.subr.mxu0 0.0
    %2577 = vmatpush2.msra.mxu0 0.0
    %2578 = vmatprep.subr.mxu0 0.0
    %2579 = vmatpush2.msra.mxu0 0.0
    %2580 = vmatprep.subr.mxu0 0.0
    %2581 = vmatpush2.msra.mxu0 0.0
    %2582 = vmatprep.subr.mxu0 0.0
    %2583 = vmatpush2.msra.mxu0 0.0
    %2584 = vmatprep.subr.mxu0 0.0
    %2585 = vmatpush2.msra.mxu0 0.0
    %2586 = vmatprep.subr.mxu0 0.0
    %2587 = vmatpush2.msra.mxu0 0.0
    %2588 = vmatprep.subr.mxu0 0.0
    %2589 = vmatpush2.msra.mxu0 0.0
    %2590 = vmatprep.subr.mxu0 0.0
    %2591 = vmatpush2.msra.mxu0 0.0
    %2592 = vmatprep.subr.mxu0 0.0
    %2593 = vmatpush2.msra.mxu0 0.0
    %2594 = vmatprep.subr.mxu0 0.0
    %2595 = vmatpush2.msra.mxu0 0.0
    %2596 = vmatprep.subr.mxu0 0.0
    %2597 = vmatpush2.msra.mxu0 0.0
    %2598 = vmatprep.subr.mxu0 0.0
    %2599 = vmatpush2.msra.mxu0 0.0
    %2600 = vmatprep.subr.mxu0 0.0
    %2601 = vmatpush2.msra.mxu0 0.0
    %2602 = vmatprep.subr.mxu0 0.0
    %2603 = vmatpush2.msra.mxu0 0.0
    %2604 = vmatprep.mubr.f32.mxu0 0.0
    %2605 = vmatmul.mubr.f32.gmra.mxu0 %v2535
    %v2606 = vpop.f32.mrf.mxu0
    %v2607 = vadd.f32 %v2532, %v2606
    %v2608 = vpop.f32.mrf.mxu0
    %2609 = vmatprep.mubr.f32.mxu0 0.0
    %2610 = vmatmul.mubr.f32.gmra.mxu0 %v2538
    %v2611 = vpop.f32.mrf.mxu0
    %v2612 = vadd.f32 %v2532, %v2611
    %v2613 = vpop.f32.mrf.mxu0
    %2614 = vdwg.mxu0
    %v2615 = vadd.f32 %v1575, %v2607
    %v2616 = vadd.f32 %v1576, %v2612
    %v2617 = vsel %vm210, %v2615, 0.0
    %2618 = vadd.xlane.f32.xlu0 %v2617
    %v2619 = vpop.xlane.xlu0 %2618
    %v2620 = vsel %vm210, %v2616, 0.0
    %2621 = vadd.xlane.f32.xlu0 %v2620
    %v2622 = vpop.xlane.xlu0 %2621
    %v2623 = vmul.f32 %v2619, %v1249
    %v2624 = vmul.f32 %v2622, %v1249
    %v2625 = vsub.f32 %v2615, %v2623
    %v2626 = vsub.f32 %v2616, %v2624
    %v2627 = vmul.f32 %v2625, %v2625
    %v2628 = vmul.f32 %v2626, %v2626
    %v2629 = vsel %vm210, %v2627, 0.0
    %2630 = vadd.xlane.f32.xlu0 %v2629
    %v2631 = vpop.xlane.xlu0 %2630
    %v2632 = vsel %vm210, %v2628, 0.0
    %2633 = vadd.xlane.f32.xlu0 %v2632
    %v2634 = vpop.xlane.xlu0 %2633
    %v2635 = vmul.f32 %v2631, %v1249
    %v2636 = vmul.f32 %v2634, %v1249
    %v2637 = vadd.f32 %v2635, 1e-07
    %v2638 = vadd.f32 %v2636, 1e-07
    %v2639 = vrsqrt.pop %v2637
    %v2640 = vrsqrt.pop %v2638
    %v2641 = vmul.f32 %v2625, %v2639
    %v2642 = vmul.f32 %v2626, %v2640
    %s2643 = scalar_lea.vmem %s11, 1
    %v2644 = vld [vmem:[%s2643] sm:$0x1]
    %v2646 = vlaneseq
    %v2647 = vshrl.u32 %v2646, 7
    %v2648 = vsub.s32 0, %v2647
    %v2649 = vrot.slane %v2644, %v2648
    %v2651 = vmul.f32 %v2641, %v2649
    %v2652 = vmul.f32 %v2642, %v2649
    %s2653 = scalar_lea.vmem %s12, 1
    %v2654 = vld [vmem:[%s2653] sm:$0x1]
    %v2656 = vlaneseq
    %v2657 = vshrl.u32 %v2656, 7
    %v2658 = vsub.s32 0, %v2657
    %v2659 = vrot.slane %v2654, %v2658
    %v2661 = vadd.f32 %v2651, %v2659
    %v2662 = vadd.f32 %v2652, %v2659
    %s2663 = scalar_lea.vmem %s13, 32
    %v2664 = vld [vmem:[%s2663] sm:$0xff]
    %v2665 = vld [vmem:[%s2663 + $0x8] sm:$0xff]
    %v2666 = vld [vmem:[%s2663 + $0x10] sm:$0xff]
    %v2667 = vld [vmem:[%s2663 + $0x18] sm:$0xff]
    %s2668 = scalar_lea.vmem %s14, 1
    %v2669 = vld [vmem:[%s2668] sm:$0x1]
    %v2671 = vlaneseq
    %v2672 = vshrl.u32 %v2671, 7
    %v2673 = vsub.s32 0, %v2672
    %v2674 = vrot.slane %v2669, %v2673
    %v2677 = vsel %vm210, %v2661, 0
    %v2680 = vsel %vm210, %v2662, 0
    %2682 = vmatprep.subr.mxu0 0.0
    %2683 = vmatpush1.msra.mxu0 0.0
    %2684 = vmatprep.subr.mxu0 0.0
    %2685 = vmatpush1.msra.mxu0 0.0
    %2686 = vmatprep.subr.mxu0 0.0
    %2687 = vmatpush1.msra.mxu0 0.0
    %2688 = vmatprep.subr.mxu0 0.0
    %2689 = vmatpush1.msra.mxu0 0.0
    %2690 = vmatprep.subr.mxu0 0.0
    %2691 = vmatpush1.msra.mxu0 0.0
    %2692 = vmatprep.subr.mxu0 0.0
    %2693 = vmatpush1.msra.mxu0 0.0
    %2694 = vmatprep.subr.mxu0 0.0
    %2695 = vmatpush1.msra.mxu0 0.0
    %2696 = vmatprep.subr.mxu0 0.0
    %2697 = vmatpush1.msra.mxu0 0.0
    %2698 = vmatprep.subr.mxu0 0.0
    %2699 = vmatpush1.msra.mxu0 0.0
    %2700 = vmatprep.subr.mxu0 0.0
    %2701 = vmatpush1.msra.mxu0 0.0
    %2702 = vmatprep.subr.mxu0 0.0
    %2703 = vmatpush1.msra.mxu0 0.0
    %2704 = vmatprep.subr.mxu0 0.0
    %2705 = vmatpush1.msra.mxu0 0.0
    %2706 = vmatprep.subr.mxu0 0.0
    %2707 = vmatpush1.msra.mxu0 %v2667
    %2708 = vmatprep.subr.mxu0 0.0
    %2709 = vmatpush1.msra.mxu0 %v2666
    %2710 = vmatprep.subr.mxu0 0.0
    %2711 = vmatpush1.msra.mxu0 %v2665
    %2712 = vmatprep.subr.mxu0 0.0
    %2713 = vmatpush1.msra.mxu0 %v2664
    %2714 = vmatprep.subr.mxu0 0.0
    %2715 = vmatpush2.msra.mxu0 0.0
    %2716 = vmatprep.subr.mxu0 0.0
    %2717 = vmatpush2.msra.mxu0 0.0
    %2718 = vmatprep.subr.mxu0 0.0
    %2719 = vmatpush2.msra.mxu0 0.0
    %2720 = vmatprep.subr.mxu0 0.0
    %2721 = vmatpush2.msra.mxu0 0.0
    %2722 = vmatprep.subr.mxu0 0.0
    %2723 = vmatpush2.msra.mxu0 0.0
    %2724 = vmatprep.subr.mxu0 0.0
    %2725 = vmatpush2.msra.mxu0 0.0
    %2726 = vmatprep.subr.mxu0 0.0
    %2727 = vmatpush2.msra.mxu0 0.0
    %2728 = vmatprep.subr.mxu0 0.0
    %2729 = vmatpush2.msra.mxu0 0.0
    %2730 = vmatprep.subr.mxu0 0.0
    %2731 = vmatpush2.msra.mxu0 0.0
    %2732 = vmatprep.subr.mxu0 0.0
    %2733 = vmatpush2.msra.mxu0 0.0
    %2734 = vmatprep.subr.mxu0 0.0
    %2735 = vmatpush2.msra.mxu0 0.0
    %2736 = vmatprep.subr.mxu0 0.0
    %2737 = vmatpush2.msra.mxu0 0.0
    %2738 = vmatprep.subr.mxu0 0.0
    %2739 = vmatpush2.msra.mxu0 0.0
    %2740 = vmatprep.subr.mxu0 0.0
    %2741 = vmatpush2.msra.mxu0 0.0
    %2742 = vmatprep.subr.mxu0 0.0
    %2743 = vmatpush2.msra.mxu0 0.0
    %2744 = vmatprep.subr.mxu0 0.0
    %2745 = vmatpush2.msra.mxu0 0.0
    %2746 = vmatprep.mubr.f32.mxu0 0.0
    %2747 = vmatmul.mubr.f32.gmra.mxu0 %v2677
    %v2748 = vpop.f32.mrf.mxu0
    %v2749 = vadd.f32 %v2674, %v2748
    %v2750 = vpop.f32.mrf.mxu0
    %2751 = vmatprep.mubr.f32.mxu0 0.0
    %2752 = vmatmul.mubr.f32.gmra.mxu0 %v2680
    %v2753 = vpop.f32.mrf.mxu0
    %v2754 = vadd.f32 %v2674, %v2753
    %v2755 = vpop.f32.mrf.mxu0
    %2756 = vdwg.mxu0
    %v2757 = vmul.f32 %v2749, 0.5
    %v2758 = vmul.f32 %v2754, 0.5
    %v2759 = vmul.f32 %v2749, 0.70710677
    %v2760 = vmul.f32 %v2754, 0.70710677
    %vm2761 = vcmp.ge.f32.partialorder %v2759, 0.0
    %vm2762 = vcmp.ge.f32.partialorder %v2760, 0.0
    %v2763 = vsel %vm2761, 1.0, -1.0
    %v2764 = vsel %vm2762, 1.0, -1.0
    %v2765 = vand.u32 2147483647, %v2759
    %v2766 = vand.u32 2147483647, %v2760
    %v2767 = vmul.f32 %v2765, 0.3275911
    %v2768 = vmul.f32 %v2766, 0.3275911
    %v2769 = vadd.f32 %v2767, 1.0
    %v2770 = vadd.f32 %v2768, 1.0
    %v2771 = vrcp.pop %v2769
    %v2772 = vmul.f32 1.0, %v2771
    %v2773 = vrcp.pop %v2770
    %v2774 = vmul.f32 1.0, %v2773
    %v2775 = vmul.f32 %v2772, 1.0614054
    %v2776 = vmul.f32 %v2774, 1.0614054
    %v2777 = vadd.f32 %v2775, -1.4531521
    %v2778 = vadd.f32 %v2776, -1.4531521
    %v2779 = vmul.f32 %v2777, %v2772
    %v2780 = vmul.f32 %v2778, %v2774
    %v2781 = vadd.f32 %v2779, 1.4214138
    %v2782 = vadd.f32 %v2780, 1.4214138
    %v2783 = vmul.f32 %v2781, %v2772
    %v2784 = vmul.f32 %v2782, %v2774
    %v2785 = vadd.f32 %v2783, -0.28449672
    %v2786 = vadd.f32 %v2784, -0.28449672
    %v2787 = vmul.f32 %v2785, %v2772
    %v2788 = vmul.f32 %v2786, %v2774
    %v2789 = vadd.f32 %v2787, 0.2548296
    %v2790 = vadd.f32 %v2788, 0.2548296
    %v2791 = vmul.f32 %v2789, %v2772
    %v2792 = vmul.f32 %v2790, %v2774
    %v2793 = vsub.f32 0.0, %v2765
    %v2794 = vsub.f32 0.0, %v2766
    %v2795 = vmul.f32 %v2793, %v2765
    %v2796 = vmul.f32 %v2794, %v2766
    %v2797 = vmul.f32 %v2795, 1.442695
    %v2798 = vpow.pop %v2797
    %v2799 = vmul.f32 %v2796, 1.442695
    %v2800 = vpow.pop %v2799
    %v2801 = vmul.f32 %v2791, %v2798
    %v2802 = vmul.f32 %v2792, %v2800
    %v2803 = vsub.f32 1.0, %v2801
    %v2804 = vsub.f32 1.0, %v2802
    %v2805 = vmul.f32 %v2763, %v2803
    %v2806 = vmul.f32 %v2764, %v2804
    %v2807 = vadd.f32 %v2805, 1.0
    %v2808 = vadd.f32 %v2806, 1.0
    %v2809 = vmul.f32 %v2757, %v2807
    %v2810 = vmul.f32 %v2758, %v2808
    %s2811 = scalar_lea.vmem %s15, 64
    %v2812 = vld [vmem:[%s2811] sm:$0xff]
    %v2813 = vld [vmem:[%s2811 + $0x8] sm:$0xff]
    %v2814 = vld [vmem:[%s2811 + $0x10] sm:$0xff]
    %v2815 = vld [vmem:[%s2811 + $0x18] sm:$0xff]
    %v2816 = vld [vmem:[%s2811 + $0x20] sm:$0xff]
    %v2817 = vld [vmem:[%s2811 + $0x28] sm:$0xff]
    %v2818 = vld [vmem:[%s2811 + $0x30] sm:$0xff]
    %v2819 = vld [vmem:[%s2811 + $0x38] sm:$0xff]
    %s2820 = scalar_lea.vmem %s16, 1
    %v2821 = vld [vmem:[%s2820] sm:$0x1]
    %v2823 = vlaneseq
    %v2824 = vshrl.u32 %v2823, 7
    %v2825 = vsub.s32 0, %v2824
    %v2826 = vrot.slane %v2821, %v2825
    %v2829 = vsel %vm1449, %v2809, 0
    %v2832 = vsel %vm1449, %v2810, 0
    %2834 = vmatprep.subr.mxu0 0.0
    %2835 = vmatpush1.msra.mxu0 0.0
    %2836 = vmatprep.subr.mxu0 0.0
    %2837 = vmatpush1.msra.mxu0 0.0
    %2838 = vmatprep.subr.mxu0 0.0
    %2839 = vmatpush1.msra.mxu0 0.0
    %2840 = vmatprep.subr.mxu0 0.0
    %2841 = vmatpush1.msra.mxu0 0.0
    %2842 = vmatprep.subr.mxu0 0.0
    %2843 = vmatpush1.msra.mxu0 0.0
    %2844 = vmatprep.subr.mxu0 0.0
    %2845 = vmatpush1.msra.mxu0 0.0
    %2846 = vmatprep.subr.mxu0 0.0
    %2847 = vmatpush1.msra.mxu0 0.0
    %2848 = vmatprep.subr.mxu0 0.0
    %2849 = vmatpush1.msra.mxu0 0.0
    %2850 = vmatprep.subr.mxu0 0.0
    %2851 = vmatpush1.msra.mxu0 %v2819
    %2852 = vmatprep.subr.mxu0 0.0
    %2853 = vmatpush1.msra.mxu0 %v2818
    %2854 = vmatprep.subr.mxu0 0.0
    %2855 = vmatpush1.msra.mxu0 %v2817
    %2856 = vmatprep.subr.mxu0 0.0
    %2857 = vmatpush1.msra.mxu0 %v2816
    %2858 = vmatprep.subr.mxu0 0.0
    %2859 = vmatpush1.msra.mxu0 %v2815
    %2860 = vmatprep.subr.mxu0 0.0
    %2861 = vmatpush1.msra.mxu0 %v2814
    %2862 = vmatprep.subr.mxu0 0.0
    %2863 = vmatpush1.msra.mxu0 %v2813
    %2864 = vmatprep.subr.mxu0 0.0
    %2865 = vmatpush1.msra.mxu0 %v2812
    %2866 = vmatprep.subr.mxu0 0.0
    %2867 = vmatpush2.msra.mxu0 0.0
    %2868 = vmatprep.subr.mxu0 0.0
    %2869 = vmatpush2.msra.mxu0 0.0
    %2870 = vmatprep.subr.mxu0 0.0
    %2871 = vmatpush2.msra.mxu0 0.0
    %2872 = vmatprep.subr.mxu0 0.0
    %2873 = vmatpush2.msra.mxu0 0.0
    %2874 = vmatprep.subr.mxu0 0.0
    %2875 = vmatpush2.msra.mxu0 0.0
    %2876 = vmatprep.subr.mxu0 0.0
    %2877 = vmatpush2.msra.mxu0 0.0
    %2878 = vmatprep.subr.mxu0 0.0
    %2879 = vmatpush2.msra.mxu0 0.0
    %2880 = vmatprep.subr.mxu0 0.0
    %2881 = vmatpush2.msra.mxu0 0.0
    %2882 = vmatprep.subr.mxu0 0.0
    %2883 = vmatpush2.msra.mxu0 0.0
    %2884 = vmatprep.subr.mxu0 0.0
    %2885 = vmatpush2.msra.mxu0 0.0
    %2886 = vmatprep.subr.mxu0 0.0
    %2887 = vmatpush2.msra.mxu0 0.0
    %2888 = vmatprep.subr.mxu0 0.0
    %2889 = vmatpush2.msra.mxu0 0.0
    %2890 = vmatprep.subr.mxu0 0.0
    %2891 = vmatpush2.msra.mxu0 0.0
    %2892 = vmatprep.subr.mxu0 0.0
    %2893 = vmatpush2.msra.mxu0 0.0
    %2894 = vmatprep.subr.mxu0 0.0
    %2895 = vmatpush2.msra.mxu0 0.0
    %2896 = vmatprep.subr.mxu0 0.0
    %2897 = vmatpush2.msra.mxu0 0.0
    %2898 = vmatprep.mubr.f32.mxu0 0.0
    %2899 = vmatmul.mubr.f32.gmra.mxu0 %v2829
    %v2900 = vpop.f32.mrf.mxu0
    %v2901 = vadd.f32 %v2826, %v2900
    %v2902 = vpop.f32.mrf.mxu0
    %2903 = vmatprep.mubr.f32.mxu0 0.0
    %2904 = vmatmul.mubr.f32.gmra.mxu0 %v2832
    %v2905 = vpop.f32.mrf.mxu0
    %v2906 = vadd.f32 %v2826, %v2905
    %v2907 = vpop.f32.mrf.mxu0
    %2908 = vdwg.mxu0
    %v2909 = vadd.f32 %v2661, %v2901
    %v2910 = vadd.f32 %v2662, %v2906
    %v2911 = vsel %vm210, %v2909, 0.0
    %2912 = vadd.xlane.f32.xlu0 %v2911
    %v2913 = vpop.xlane.xlu0 %2912
    %v2914 = vsel %vm210, %v2910, 0.0
    %2915 = vadd.xlane.f32.xlu0 %v2914
    %v2916 = vpop.xlane.xlu0 %2915
    %v2917 = vmul.f32 %v2913, %v1249
    %v2918 = vmul.f32 %v2916, %v1249
    %v2919 = vsub.f32 %v2909, %v2917
    %v2920 = vsub.f32 %v2910, %v2918
    %v2921 = vmul.f32 %v2919, %v2919
    %v2922 = vmul.f32 %v2920, %v2920
    %v2923 = vsel %vm210, %v2921, 0.0
    %2924 = vadd.xlane.f32.xlu0 %v2923
    %v2925 = vpop.xlane.xlu0 %2924
    %v2926 = vsel %vm210, %v2922, 0.0
    %2927 = vadd.xlane.f32.xlu0 %v2926
    %v2928 = vpop.xlane.xlu0 %2927
    %v2929 = vmul.f32 %v2925, %v1249
    %v2930 = vmul.f32 %v2928, %v1249
    %v2931 = vadd.f32 %v2929, 1e-07
    %v2932 = vadd.f32 %v2930, 1e-07
    %v2933 = vrsqrt.pop %v2931
    %v2934 = vrsqrt.pop %v2932
    %v2935 = vmul.f32 %v2919, %v2933
    %v2936 = vmul.f32 %v2920, %v2934
    %s2937 = scalar_lea.vmem %s17, 1
    %v2938 = vld [vmem:[%s2937] sm:$0x1]
    %v2940 = vlaneseq
    %v2941 = vshrl.u32 %v2940, 7
    %v2942 = vsub.s32 0, %v2941
    %v2943 = vrot.slane %v2938, %v2942
    %v2945 = vmul.f32 %v2935, %v2943
    %v2946 = vmul.f32 %v2936, %v2943
    %s2947 = scalar_lea.vmem %s18, 1
    %v2948 = vld [vmem:[%s2947] sm:$0x1]
    %v2950 = vlaneseq
    %v2951 = vshrl.u32 %v2950, 7
    %v2952 = vsub.s32 0, %v2951
    %v2953 = vrot.slane %v2948, %v2952
    %v2955 = vadd.f32 %v2945, %v2953
    %v2956 = vadd.f32 %v2946, %v2953
    %v2958 = vrot.slane %v2956, 7
    %vm2960 = vcmask 1040384
    %v2961 = vsel %vm2960, %v2955, %v2958
    %v2962 = vld [vmem:[%s19] sm:$0xff]
    %v2963 = vld [vmem:[%s19 + $0x8] sm:$0xff]
    %v2964 = vld [vmem:[%s19 + $0x10] sm:$0xff]
    %v2965 = vld [vmem:[%s19 + $0x18] sm:$0xff]
    %v2966 = vld [vmem:[#allocation3] sm:$0x1]
    %v2968 = vlaneseq
    %v2969 = vshrl.u32 %v2968, 7
    %v2970 = vsub.s32 0, %v2969
    %v2971 = vrot.slane %v2966, %v2970
    %v2974 = vsel %vm210, %v2961, 0
    %2976 = vmatprep.subr.mxu0 0.0
    %2977 = vmatpush1.msra.mxu0 0.0
    %2978 = vmatprep.subr.mxu0 0.0
    %2979 = vmatpush1.msra.mxu0 0.0
    %2980 = vmatprep.subr.mxu0 0.0
    %2981 = vmatpush1.msra.mxu0 0.0
    %2982 = vmatprep.subr.mxu0 0.0
    %2983 = vmatpush1.msra.mxu0 0.0
    %2984 = vmatprep.subr.mxu0 0.0
    %2985 = vmatpush1.msra.mxu0 0.0
    %2986 = vmatprep.subr.mxu0 0.0
    %2987 = vmatpush1.msra.mxu0 0.0
    %2988 = vmatprep.subr.mxu0 0.0
    %2989 = vmatpush1.msra.mxu0 0.0
    %2990 = vmatprep.subr.mxu0 0.0
    %2991 = vmatpush1.msra.mxu0 0.0
    %2992 = vmatprep.subr.mxu0 0.0
    %2993 = vmatpush1.msra.mxu0 0.0
    %2994 = vmatprep.subr.mxu0 0.0
    %2995 = vmatpush1.msra.mxu0 0.0
    %2996 = vmatprep.subr.mxu0 0.0
    %2997 = vmatpush1.msra.mxu0 0.0
    %2998 = vmatprep.subr.mxu0 0.0
    %2999 = vmatpush1.msra.mxu0 0.0
    %3000 = vmatprep.subr.mxu0 0.0
    %3001 = vmatpush1.msra.mxu0 %v2965
    %3002 = vmatprep.subr.mxu0 0.0
    %3003 = vmatpush1.msra.mxu0 %v2964
    %3004 = vmatprep.subr.mxu0 0.0
    %3005 = vmatpush1.msra.mxu0 %v2963
    %3006 = vmatprep.subr.mxu0 0.0
    %3007 = vmatpush1.msra.mxu0 %v2962
    %3008 = vmatprep.subr.mxu0 0.0
    %3009 = vmatpush2.msra.mxu0 0.0
    %3010 = vmatprep.subr.mxu0 0.0
    %3011 = vmatpush2.msra.mxu0 0.0
    %3012 = vmatprep.subr.mxu0 0.0
    %3013 = vmatpush2.msra.mxu0 0.0
    %3014 = vmatprep.subr.mxu0 0.0
    %3015 = vmatpush2.msra.mxu0 0.0
    %3016 = vmatprep.subr.mxu0 0.0
    %3017 = vmatpush2.msra.mxu0 0.0
    %3018 = vmatprep.subr.mxu0 0.0
    %3019 = vmatpush2.msra.mxu0 0.0
    %3020 = vmatprep.subr.mxu0 0.0
    %3021 = vmatpush2.msra.mxu0 0.0
    %3022 = vmatprep.subr.mxu0 0.0
    %3023 = vmatpush2.msra.mxu0 0.0
    %3024 = vmatprep.subr.mxu0 0.0
    %3025 = vmatpush2.msra.mxu0 0.0
    %3026 = vmatprep.subr.mxu0 0.0
    %3027 = vmatpush2.msra.mxu0 0.0
    %3028 = vmatprep.subr.mxu0 0.0
    %3029 = vmatpush2.msra.mxu0 0.0
    %3030 = vmatprep.subr.mxu0 0.0
    %3031 = vmatpush2.msra.mxu0 0.0
    %3032 = vmatprep.subr.mxu0 0.0
    %3033 = vmatpush2.msra.mxu0 0.0
    %3034 = vmatprep.subr.mxu0 0.0
    %3035 = vmatpush2.msra.mxu0 0.0
    %3036 = vmatprep.subr.mxu0 0.0
    %3037 = vmatpush2.msra.mxu0 0.0
    %3038 = vmatprep.subr.mxu0 0.0
    %3039 = vmatpush2.msra.mxu0 0.0
    %3040 = vmatprep.mubr.f32.mxu0 0.0
    %3041 = vmatmul.mubr.f32.gmra.mxu0 %v2974
    %v3042 = vpop.f32.mrf.mxu0
    %v3043 = vadd.f32 %v2971, %v3042
    %v3044 = vpop.f32.mrf.mxu0
    %3045 = vdwg.mxu0
    %v3046 = vxor.u32 %v3043, 2147483648
    %v3047 = vmul.f32 %v3046, 1.442695
    %v3048 = vpow.pop %v3047
    %v3049 = vadd.f32 %v3048, 1.0
    %v3050 = vrcp.pop %v3049
    %v3051 = vmul.f32 1.0, %v3050
    %vm3052 = vcmask 50176
    %3053 = vst.msk [vmem:[#allocation6] sm:$0x3] %vm3052, %v3051
    // Predicated region
    $region90: #{deberta_n_heads_forward.1} parent=1 // pred_check
      _
    $region91: #{deberta_n_heads_forward.1} parent=1 // pred_check_branch
      %3055 = sbr.rel (0) target = $region93
    $region92: #{deberta_n_heads_forward.1} parent=1 // pred_region
      %s3057 = ssub.s32 32, 32
      %3058 = vsyncadd [#allocation5], %s3057
      %s3060 = sshll.u32 [#allocation6], 4
      %s3061 = int_to_ptr.vmem [resolvable:$true] %s3060
      %3063 = dma.vmem_to_hbm [thread:$0]  %s3061, 32, %s21, [#allocation5]
    $region93: #{deberta_n_heads_forward.1} parent=1 // pred_fallthru
      _
    // Predicated region
    $region94: #{deberta_n_heads_forward.1} parent=1 // pred_check
      _
    $region95: #{deberta_n_heads_forward.1} parent=1 // pred_check_branch
      %3065 = sbr.rel (0) target = $region97
    $region96: #{deberta_n_heads_forward.1} parent=1 // pred_region
      %3066 = dma.done [#allocation5], 32
    $region97: #{deberta_n_heads_forward.1} parent=1 // pred_fallthru
      _
    %3067 = vsyncpa [#allocation4], 1
    %3068 = vsyncpa [#allocation5], 1

</llo_original>
